<compile_context>
chip_gen: v7x
topology: tpu7x:2x2x1
jax: 0.10.0
libtpu: 0.0.40
codegen_flags: <defaults>
</compile_context>

<pallas_src>
import functools

import jax
import jax.numpy as jnp
from jax.experimental import pallas as pl
from jax.experimental.pallas import tpu as pltpu


def _sig(x):
    return jax.nn.sigmoid(x)


def _round_up(x, m):
    return ((x + m - 1) // m) * m


_ZERO_MAP = {
    1: lambda b: (0,),
    2: lambda b: (0, 0),
    3: lambda b: (0, 0, 0),
}


def main_model_kernel(
    # batch-blocked activations (bf16)
    title_ref, content_ref, indicator_ref,
    # LSTM weights (gate order [i, f, o, g]; bf16) + combined bias (f32)
    w_ih_ref, w_hh_ref, b_lstm_ref,
    # conv (3 taps concatenated along output channels -> (W, 3C))
    w_convcat_ref, b_conv_ref,
    # channel-attention MLPs
    we_max_ref, be_max_ref, wd_max_ref, bd_max_ref,
    we_avg_ref, be_avg_ref, wd_avg_ref, bd_avg_ref,
    # spatial-attention scalars (SMEM)
    w_sp_ref, b_sp_ref,
    # FC head (fc1 split + row-permuted host-side)
    w_fc1a_ref, w_fc1b_ref, w_fc1c_ref, b_fc1_ref,
    w_fc2_ref, b_fc2_ref, w_cls_ref, b_cls_ref,
    # output
    out_ref,
    # scratch
    x_scratch, lstm_scratch,
):
    f32 = jnp.float32
    bf16 = jnp.bfloat16

    T, Bb, I = title_ref.shape
    H4 = w_hh_ref.shape[1]
    H = H4 // 4

    # ------------------- LSTM over title + final-hidden attention -------------------
    # Hoisted input projection: one big matmul with the bias folded in, written to
    # a VMEM scratch.  The serial recurrence only carries the (Bb,H)x(H,4H) matmul.
    w_hh = w_hh_ref[...]                                        # (H, 4H) bf16
    x_scratch[...] = (
        jnp.dot(title_ref[...].reshape(T * Bb, I), w_ih_ref[...],
                preferred_element_type=f32)
        + b_lstm_ref[...]                                       # (1, 4H) broadcast
    ).reshape(T, Bb, H4)

    h0 = jnp.zeros((Bb, H), f32)
    c0 = jnp.zeros((Bb, H), f32)

    def lstm_step(t, h, c):
        gates = x_scratch[t] + jnp.dot(h.astype(bf16), w_hh,
                                       preferred_element_type=f32)
        # gate layout is [i, f, o, g]: one sigmoid over 3H lanes, one tanh over H.
        s = _sig(gates[:, :3 * H])
        g_g = jnp.tanh(gates[:, 3 * H:])
        i_g = s[:, 0 * H:1 * H]
        f_g = s[:, 1 * H:2 * H]
        o_g = s[:, 2 * H:3 * H]
        c = f_g * c + i_g * g_g
        h = o_g * jnp.tanh(c)
        lstm_scratch[t] = h                                     # contiguous (Bb,H) store
        return h, c

    if T <= 8:                                                  # short seq: full unroll
        h, c = h0, c0
        for t in range(T):
            h, c = lstm_step(t, h, c)
    else:                                                       # long seq: bounded unroll
        def _body(t, carry):
            return lstm_step(t, *carry)
        h, c = jax.lax.fori_loop(0, T, _body, (h0, c0), unroll=4)

    lstm_out = lstm_scratch[...]                                # (T, Bb, H) f32
    # attention_value = sigmoid(lstm_out @ h_n)  -> (T, Bb); weight & mean over time.
    scores = jnp.sum(lstm_out * h[None, :, :], axis=-1)
    att = _sig(scores)
    title_out = jnp.mean(att[:, :, None] * lstm_out, axis=0)    # (Bb, H)

    # ---------- Conv over content (kernel (3, W), rows pre-padded in wrapper) -------
    content_p = content_ref[...]                                # (Bb, L+2, W) bf16
    Lp2 = content_p.shape[1]
    W = content_p.shape[2]
    L = Lp2 - 2
    C = b_conv_ref.shape[1]
    # One fused matmul against the (W, 3C) tap-concatenated weight, then 3
    # shifted adds over the L axis.
    y = jnp.dot(content_p.reshape(Bb * Lp2, W), w_convcat_ref[...],
                preferred_element_type=f32).reshape(Bb, Lp2, 3 * C)
    conv_feat = (y[:, 0:L, 0:C]
                 + y[:, 1:L + 1, C:2 * C]
                 + y[:, 2:L + 2, 2 * C:3 * C]) + b_conv_ref[...]        # (Bb, L, C)

    # ------------------- channel attention (max & avg MLPs) -------------------------
    ch_max = jnp.max(conv_feat, axis=1)                         # (Bb, C)
    ch_avg = jnp.mean(conv_feat, axis=1)                        # (Bb, C)

    def att_mlp(x, we, be, wd, bd):
        h1 = _sig(jnp.dot(x.astype(bf16), we, preferred_element_type=f32) + be)
        return _sig(jnp.dot(h1.astype(bf16), wd, preferred_element_type=f32) + bd)

    max_att = att_mlp(ch_max, we_max_ref[...], be_max_ref[...],
                      wd_max_ref[...], bd_max_ref[...])         # (Bb, A==C)
    avg_att = att_mlp(ch_avg, we_avg_ref[...], be_avg_ref[...],
                      wd_avg_ref[...], bd_avg_ref[...])         # (Bb, A==C)
    # The reference applies the two sigmoid gates sequentially -> same as one
    # multiply by their product.
    conv_feat = (max_att * avg_att)[:, None, :] * conv_feat

    # ------------------- spatial attention (Conv2d in=2, out=1, kernel (3,1)) -------
    sp_max = jnp.max(conv_feat, axis=2)                         # (Bb, L)
    sp_avg = jnp.mean(conv_feat, axis=2)                        # (Bb, L)
    zcol = jnp.zeros((Bb, 1), f32)
    m_pad = jnp.concatenate([zcol, sp_max, zcol], axis=1)       # (Bb, L+2)
    a_pad = jnp.concatenate([zcol, sp_avg, zcol], axis=1)
    sp = jnp.zeros((Bb, L), f32)
    for kh in range(3):
        sp = (sp
              + m_pad[:, kh:kh + L] * w_sp_ref[2 * kh + 0]      # SMEM scalar
              + a_pad[:, kh:kh + L] * w_sp_ref[2 * kh + 1])     # SMEM scalar
    sp_att = _sig(sp + b_sp_ref[0])
    conv_feat = sp_att[:, :, None] * conv_feat                  # (Bb, L, C)

    # ------------------- FC head (no transpose / lane concat) -----------------------
    conv_flat = conv_feat.reshape(Bb, L * C)                    # natural (l*C + c) layout
    h1 = (jnp.dot(title_out.astype(bf16), w_fc1a_ref[...],
                  preferred_element_type=f32)
          + jnp.dot(conv_flat.astype(bf16), w_fc1b_ref[...],
                    preferred_element_type=f32)
          + jnp.dot(indicator_ref[...], w_fc1c_ref[...],
                    preferred_element_type=f32)
          + b_fc1_ref[...])
    h1 = jnp.maximum(h1, 0.0)
    h2 = jnp.maximum(
        jnp.dot(h1.astype(bf16), w_fc2_ref[...], preferred_element_type=f32)
        + b_fc2_ref[...], 0.0)
    # N=1 classifier as a VPU reduction (avoids a 1-column MXU push).
    logits = jnp.sum(h2 * w_cls_ref[...], axis=-1, keepdims=True) + b_cls_ref[0]
    out_ref[...] = _sig(logits)


def prepare_params(params, *, content_len, indicator_len):
    """One-time host-side weight re-layout for the kernel.

    * LSTM gate columns reordered [i, f, g, o] -> [i, f, o, g].
    * The three conv taps concatenated along the output-channel axis -> (W, 3C)
      so the conv is a single MXU matmul in-kernel.
    * fc1 split into (title | conv | indicator) row blocks; the conv rows are
      permuted from channel-major (c*L + l) to the natural kernel layout (l*C + c).
    * Tiny spatial-attention / classifier-bias weights flattened for SMEM.
    * Matmul weights cast to bf16 (f32 accumulation in-kernel); biases stay f32.
    """
    f32, bf16 = jnp.float32, jnp.bfloat16
    H = params["w_hh"].shape[0]
    _, W, C = params["w_conv"].shape
    L = content_len

    def reorder(w):   # last-axis gate blocks [i, f, g, o] -> [i, f, o, g]
        return jnp.concatenate(
            [w[..., 0:2 * H], w[..., 3 * H:4 * H], w[..., 2 * H:3 * H]], axis=-1)

    # (3, W, C) -> (W, 3C) with column index kh*C + c
    w_convcat = params["w_conv"].transpose(1, 0, 2).reshape(W, 3 * C)

    w_fc1 = params["w_fc1"]
    F0 = w_fc1.shape[1]
    w_fc1a = w_fc1[:H]
    conv_rows = w_fc1[H:H + C * L]                    # row index = c*L + l
    w_fc1b = conv_rows.reshape(C, L, F0).transpose(1, 0, 2).reshape(L * C, F0)
    w_fc1c = w_fc1[H + C * L:]                        # indicator rows

    return dict(
        w_ih=reorder(params["w_ih"]).astype(bf16),
        w_hh=reorder(params["w_hh"]).astype(bf16),
        b_lstm=reorder(params["b_lstm"]).astype(f32),
        w_convcat=w_convcat.astype(bf16),
        b_conv=params["b_conv"].astype(f32),
        we_max=params["we_max"].astype(bf16), be_max=params["be_max"].astype(f32),
        wd_max=params["wd_max"].astype(bf16), bd_max=params["bd_max"].astype(f32),
        we_avg=params["we_avg"].astype(bf16), be_avg=params["be_avg"].astype(f32),
        wd_avg=params["wd_avg"].astype(bf16), bd_avg=params["bd_avg"].astype(f32),
        w_sp=params["w_sp"].reshape(6).astype(f32),
        b_sp=params["b_sp"].reshape(1).astype(f32),
        w_fc1a=w_fc1a.astype(bf16),
        w_fc1b=w_fc1b.astype(bf16),
        w_fc1c=w_fc1c.astype(bf16),
        b_fc1=params["b_fc1"].astype(f32),
        w_fc2=params["w_fc2"].astype(bf16),
        b_fc2=params["b_fc2"].astype(f32),
        w_cls=params["w_cls"].reshape(1, -1).astype(f32),
        b_cls=params["b_cls"].reshape(1).astype(f32),
    )


def main_model_forward(p, title, content, indicator, *, batch_block=128):
    """batch_block: 128 is the v5e-natural M; use 256 on v6e to fill the 256-wide MXU."""
    bf16 = jnp.bfloat16
    B, T, I = title.shape
    _, L, W = content.shape
    ind = indicator.shape[1]
    H = p["w_hh"].shape[0]
    C = p["b_conv"].shape[1]
    A = p["we_max"].shape[1]
    F0, F1 = p["w_fc2"].shape

    # Batch tile: pad only to the sublane multiple (8), never blow a tiny batch
    # up to the tile size; prefer >= 2 grid steps so the batch axis can shard
    # across TensorCores (v7x).
    B8 = _round_up(B, 8)
    Bb = min(batch_block, B8)
    if B8 // Bb < 2 and B8 > 8:
        Bb = _round_up(B8 // 2, 8)
    B_pad = _round_up(B8, Bb)
    pad = B_pad - B
    if pad:
        title = jnp.pad(title, ((0, pad), (0, 0), (0, 0)))
        content = jnp.pad(content, ((0, pad), (0, 0), (0, 0)))
        indicator = jnp.pad(indicator, ((0, pad), (0, 0)))

    # Time-major title so the in-kernel (T*Bb, I) reshape is a layout-free
    # leading-dim merge.
    title_tm = jnp.transpose(title, (1, 0, 2)).astype(bf16)
    # Pre-pad the conv rows on the host (HBM side) instead of in-kernel.
    content_p = jnp.pad(content, ((0, 0), (1, 1), (0, 0))).astype(bf16)
    indicator = indicator.astype(bf16)

    grid = (B_pad // Bb,)

    def _resident(x):                         # weight: fetched once, stays in VMEM
        return pl.BlockSpec(x.shape, _ZERO_MAP[x.ndim])

    def _smem(_x):                            # tiny scalar weights -> SMEM
        return pl.BlockSpec(memory_space=pltpu.MemorySpace.SMEM)

    weight_order = ("w_ih", "w_hh", "b_lstm", "w_convcat", "b_conv",
                    "we_max", "be_max", "wd_max", "bd_max",
                    "we_avg", "be_avg", "wd_avg", "bd_avg")
    smem_order = ("w_sp", "b_sp")
    fc_order = ("w_fc1a", "w_fc1b", "w_fc1c", "b_fc1", "w_fc2", "b_fc2", "w_cls")

    args = ([title_tm, content_p, indicator]
            + [p[k] for k in weight_order]
            + [p[k] for k in smem_order]
            + [p[k] for k in fc_order]
            + [p["b_cls"]])

    in_specs = ([pl.BlockSpec((T, Bb, I), lambda b: (0, b, 0)),
                 pl.BlockSpec((Bb, L + 2, W), lambda b: (b, 0, 0)),
                 pl.BlockSpec((Bb, ind), lambda b: (b, 0))]
                + [_resident(p[k]) for k in weight_order]
                + [_smem(p[k]) for k in smem_order]
                + [_resident(p[k]) for k in fc_order]
                + [_smem(p["b_cls"])])

    out_spec = pl.BlockSpec((Bb, 1), lambda b: (b, 0))

    # Advisory cost estimate for the whole call.
    flops = B_pad * (
        2 * T * I * 4 * H                       # hoisted LSTM input projection
        + T * 2 * H * 4 * H                     # recurrent matmuls
        + 2 * (L + 2) * W * 3 * C               # fused conv matmul
        + 2 * (2 * C * A + 2 * A * A)           # channel-attention MLPs
        + 2 * (H + L * C + ind) * F0            # fc1 (three pieces)
        + 2 * F0 * F1 + 2 * F1)                 # fc2 + classifier
    transcendentals = B_pad * (T * 5 * H + T + 4 * A + L + 1)
    bytes_accessed = (title_tm.nbytes + content_p.nbytes + indicator.nbytes
                      + B_pad * 4
                      + sum(int(p[k].nbytes)
                            for k in weight_order + smem_order + fc_order + ("b_cls",)))

    out = pl.pallas_call(
        main_model_kernel,
        out_shape=jax.ShapeDtypeStruct((B_pad, 1), jnp.float32),
        grid_spec=pltpu.PrefetchScalarGridSpec(
            num_scalar_prefetch=0,
            grid=grid,
            in_specs=in_specs,
            out_specs=out_spec,
            scratch_shapes=[pltpu.VMEM((T, Bb, 4 * H), jnp.float32),   # hoisted X
                            pltpu.VMEM((T, Bb, H), jnp.float32)],      # lstm hidden
        ),
        compiler_params=pltpu.CompilerParams(
            # TODO(synk): on v7x consider pltpu.CORE_PARALLEL here for guaranteed
            # cross-TensorCore sharding of the batch grid.
            dimension_semantics=("parallel",),
            vmem_limit_bytes=48 * 1024 * 1024,          # safe on 64 MiB (v7x) VMEM
        ),
        cost_estimate=pl.CostEstimate(
            flops=int(flops),
            transcendentals=int(transcendentals),
            bytes_accessed=int(bytes_accessed)),
    )(*args)
    return out[:B]


def init_params(key, *, lstm_input, lstm_hidden, conv_out, w2v_size, att_code,
                indicator_len, content_len, fc_hidden):
    ks = jax.random.split(key, 21)
    scale = 0.1

    def n(k, shape):
        return jax.random.normal(k, shape, jnp.float32) * scale

    H = lstm_hidden
    return dict(
        w_ih=n(ks[0], (lstm_input, 4 * H)),
        w_hh=n(ks[1], (H, 4 * H)),
        b_lstm=n(ks[2], (1, 4 * H)),
        w_conv=n(ks[3], (3, w2v_size, conv_out)),
        b_conv=n(ks[4], (1, conv_out)),
        we_max=n(ks[5], (conv_out, att_code)),
        be_max=n(ks[6], (1, att_code)),
        wd_max=n(ks[7], (att_code, att_code)),
        bd_max=n(ks[8], (1, att_code)),
        we_avg=n(ks[9], (conv_out, att_code)),
        be_avg=n(ks[10], (1, att_code)),
        wd_avg=n(ks[11], (att_code, att_code)),
        bd_avg=n(ks[12], (1, att_code)),
        w_sp=n(ks[13], (3, 2)),
        b_sp=n(ks[14], (1, 1)),
        w_fc1=n(ks[15], (H + indicator_len + conv_out * content_len, fc_hidden[0])),
        b_fc1=n(ks[16], (1, fc_hidden[0])),
        w_fc2=n(ks[17], (fc_hidden[0], fc_hidden[1])),
        b_fc2=n(ks[18], (1, fc_hidden[1])),
        w_cls=n(ks[19], (fc_hidden[1], 1)),
        b_cls=n(ks[20], (1, 1)),
    )


if __name__ == "__main__":
    # Small, self-consistent shapes; the batch-tile clamp yields Bb=8 -> 2 grid steps.
    B, T = 16, 8
    lstm_input, lstm_hidden = 16, 32
    conv_out, w2v_size = 8, 16
    att_code = conv_out                 # required by the channel-attention broadcast
    indicator_len, content_len = 8, 16
    fc_hidden = (32, 16)

    key = jax.random.PRNGKey(0)
    k_p, k_t, k_c, k_i = jax.random.split(key, 4)

    params = init_params(
        k_p,
        lstm_input=lstm_input, lstm_hidden=lstm_hidden, conv_out=conv_out,
        w2v_size=w2v_size, att_code=att_code, indicator_len=indicator_len,
        content_len=content_len, fc_hidden=fc_hidden,
    )
    prepared = prepare_params(params, content_len=content_len,
                              indicator_len=indicator_len)

    title = jax.random.normal(k_t, (B, T, lstm_input), jnp.float32)
    content = jax.random.normal(k_c, (B, content_len, w2v_size), jnp.float32)
    indicator = jax.random.normal(k_i, (B, indicator_len), jnp.float32)

    fwd = jax.jit(functools.partial(main_model_forward, prepared))
    out = jax.block_until_ready(fwd(title, content, indicator))

    assert out.shape == (B, 1), out.shape
    assert bool(jnp.all(jnp.isfinite(out)))
    print("KERNEL_OK")
</pallas_src>

<mosaic_0001>
module attributes {stable_mosaic.version = 11 : i64} {
  func.func @main_model_kernel(%arg0: i32, %arg1: memref<8x8x16xbf16, #tpu.memory_space<vmem>>, %arg2: memref<8x18x16xbf16, #tpu.memory_space<vmem>>, %arg3: memref<8x8xbf16, #tpu.memory_space<vmem>>, %arg4: memref<16x128xbf16, #tpu.memory_space<vmem>>, %arg5: memref<32x128xbf16, #tpu.memory_space<vmem>>, %arg6: memref<1x128xf32, #tpu.memory_space<vmem>>, %arg7: memref<16x24xbf16, #tpu.memory_space<vmem>>, %arg8: memref<1x8xf32, #tpu.memory_space<vmem>>, %arg9: memref<8x8xbf16, #tpu.memory_space<vmem>>, %arg10: memref<1x8xf32, #tpu.memory_space<vmem>>, %arg11: memref<8x8xbf16, #tpu.memory_space<vmem>>, %arg12: memref<1x8xf32, #tpu.memory_space<vmem>>, %arg13: memref<8x8xbf16, #tpu.memory_space<vmem>>, %arg14: memref<1x8xf32, #tpu.memory_space<vmem>>, %arg15: memref<8x8xbf16, #tpu.memory_space<vmem>>, %arg16: memref<1x8xf32, #tpu.memory_space<vmem>>, %arg17: memref<6xf32, #tpu.memory_space<smem>>, %arg18: memref<1xf32, #tpu.memory_space<smem>>, %arg19: memref<32x32xbf16, #tpu.memory_space<vmem>>, %arg20: memref<128x32xbf16, #tpu.memory_space<vmem>>, %arg21: memref<8x32xbf16, #tpu.memory_space<vmem>>, %arg22: memref<1x32xf32, #tpu.memory_space<vmem>>, %arg23: memref<32x16xbf16, #tpu.memory_space<vmem>>, %arg24: memref<1x16xf32, #tpu.memory_space<vmem>>, %arg25: memref<1x16xf32, #tpu.memory_space<vmem>>, %arg26: memref<1xf32, #tpu.memory_space<smem>>, %arg27: memref<8x1xf32, #tpu.memory_space<vmem>>, %arg28: memref<8x8x128xf32, #tpu.memory_space<vmem>>, %arg29: memref<8x8x32xf32, #tpu.memory_space<vmem>>) attributes {dimension_semantics = [#tpu.dimension_semantics<parallel>], iteration_bounds = array<i64: 2>, scalar_prefetch = 0 : i64, scratch_operands = 2 : i64, tpu.core_type = #tpu.core_type<tc>, window_params = [{transform_indices = @transform_0, window_bounds = array<i64: 8, 8, 16>}, {transform_indices = @transform_1, window_bounds = array<i64: 8, 18, 16>}, {transform_indices = @transform_2, window_bounds = array<i64: 8, 8>}, {pipeline_mode = #tpu.pipeline_mode<synchronous>, transform_indices = @transform_3, window_bounds = array<i64: 16, 128>}, {pipeline_mode = #tpu.pipeline_mode<synchronous>, transform_indices = @transform_4, window_bounds = array<i64: 32, 128>}, {pipeline_mode = #tpu.pipeline_mode<synchronous>, transform_indices = @transform_5, window_bounds = array<i64: 1, 128>}, {pipeline_mode = #tpu.pipeline_mode<synchronous>, transform_indices = @transform_6, window_bounds = array<i64: 16, 24>}, {pipeline_mode = #tpu.pipeline_mode<synchronous>, transform_indices = @transform_7, window_bounds = array<i64: 1, 8>}, {pipeline_mode = #tpu.pipeline_mode<synchronous>, transform_indices = @transform_8, window_bounds = array<i64: 8, 8>}, {pipeline_mode = #tpu.pipeline_mode<synchronous>, transform_indices = @transform_9, window_bounds = array<i64: 1, 8>}, {pipeline_mode = #tpu.pipeline_mode<synchronous>, transform_indices = @transform_10, window_bounds = array<i64: 8, 8>}, {pipeline_mode = #tpu.pipeline_mode<synchronous>, transform_indices = @transform_11, window_bounds = array<i64: 1, 8>}, {pipeline_mode = #tpu.pipeline_mode<synchronous>, transform_indices = @transform_12, window_bounds = array<i64: 8, 8>}, {pipeline_mode = #tpu.pipeline_mode<synchronous>, transform_indices = @transform_13, window_bounds = array<i64: 1, 8>}, {pipeline_mode = #tpu.pipeline_mode<synchronous>, transform_indices = @transform_14, window_bounds = array<i64: 8, 8>}, {pipeline_mode = #tpu.pipeline_mode<synchronous>, transform_indices = @transform_15, window_bounds = array<i64: 1, 8>}, {transform_indices = @transform_16, window_bounds = array<i64: 6>}, {transform_indices = @transform_17, window_bounds = array<i64: 1>}, {pipeline_mode = #tpu.pipeline_mode<synchronous>, transform_indices = @transform_18, window_bounds = array<i64: 32, 32>}, {pipeline_mode = #tpu.pipeline_mode<synchronous>, transform_indices = @transform_19, window_bounds = array<i64: 128, 32>}, {pipeline_mode = #tpu.pipeline_mode<synchronous>, transform_indices = @transform_20, window_bounds = array<i64: 8, 32>}, {pipeline_mode = #tpu.pipeline_mode<synchronous>, transform_indices = @transform_21, window_bounds = array<i64: 1, 32>}, {pipeline_mode = #tpu.pipeline_mode<synchronous>, transform_indices = @transform_22, window_bounds = array<i64: 32, 16>}, {pipeline_mode = #tpu.pipeline_mode<synchronous>, transform_indices = @transform_23, window_bounds = array<i64: 1, 16>}, {pipeline_mode = #tpu.pipeline_mode<synchronous>, transform_indices = @transform_24, window_bounds = array<i64: 1, 16>}, {transform_indices = @transform_25, window_bounds = array<i64: 1>}, {transform_indices = @transform_26, window_bounds = array<i64: 8, 1>}]} {
    %c0 = arith.constant 0 : index
    %c0_0 = arith.constant 0 : index
    %0 = vector.load %arg5[%c0, %c0_0] : memref<32x128xbf16, #tpu.memory_space<vmem>>, vector<32x128xbf16>
    %c0_1 = arith.constant 0 : index
    %c0_2 = arith.constant 0 : index
    %c0_3 = arith.constant 0 : index
    %1 = vector.load %arg1[%c0_1, %c0_2, %c0_3] : memref<8x8x16xbf16, #tpu.memory_space<vmem>>, vector<8x8x16xbf16>
    %2 = vector.shape_cast %1 : vector<8x8x16xbf16> to vector<64x16xbf16>
    %c0_4 = arith.constant 0 : index
    %c0_5 = arith.constant 0 : index
    %3 = vector.load %arg4[%c0_4, %c0_5] : memref<16x128xbf16, #tpu.memory_space<vmem>>, vector<16x128xbf16>
    %cst = arith.constant dense<0.000000e+00> : vector<64x128xf32>
    %4 = tpu.matmul %2, %3, %cst {dimension_numbers = #tpu.dot_dimension_numbers<[1], [0], [0], [1], [0, 0, 1, 1], [], []>} : vector<64x16xbf16>, vector<16x128xbf16>, vector<64x128xf32> -> vector<64x128xf32>
    %c0_6 = arith.constant 0 : index
    %c0_7 = arith.constant 0 : index
    %5 = vector.load %arg6[%c0_6, %c0_7] : memref<1x128xf32, #tpu.memory_space<vmem>>, vector<1x128xf32>
    %6 = vector.broadcast %5 : vector<1x128xf32> to vector<64x128xf32>
    %7 = arith.addf %4, %6 : vector<64x128xf32>
    %8 = vector.shape_cast %7 : vector<64x128xf32> to vector<8x8x128xf32>
    %c0_8 = arith.constant 0 : index
    %c0_9 = arith.constant 0 : index
    %c0_10 = arith.constant 0 : index
    %9 = vector.load %arg28[%c0_8, %c0_9, %c0_10] : memref<8x8x128xf32, #tpu.memory_space<vmem>>, vector<8x8x128xf32>
    tpu.vector_store %arg28[%c0_8, %c0_9, %c0_10], %8 {strides = array<i32>} : memref<8x8x128xf32, #tpu.memory_space<vmem>>, vector<8x8x128xf32>,
    %cst_11 = arith.constant 0.000000e+00 : f32
    %10 = vector.broadcast %cst_11 : f32 to vector<8x32xf32>
    %cst_12 = arith.constant 0.000000e+00 : f32
    %11 = vector.broadcast %cst_12 : f32 to vector<8x32xf32>
    %c0_13 = arith.constant 0 : index
    %c0_14 = arith.constant 0 : index
    %c0_15 = arith.constant 0 : index
    %12 = vector.load %arg28[%c0_13, %c0_14, %c0_15] : memref<8x8x128xf32, #tpu.memory_space<vmem>>, vector<1x8x128xf32>
    %13 = vector.shape_cast %12 : vector<1x8x128xf32> to vector<8x128xf32>
    %14 = arith.truncf %10 : vector<8x32xf32> to vector<8x32xbf16>
    %cst_16 = arith.constant dense<0.000000e+00> : vector<8x128xf32>
    %15 = tpu.matmul %14, %0, %cst_16 {dimension_numbers = #tpu.dot_dimension_numbers<[1], [0], [0], [1], [0, 0, 1, 1], [], []>} : vector<8x32xbf16>, vector<32x128xbf16>, vector<8x128xf32> -> vector<8x128xf32>
    %16 = arith.addf %13, %15 : vector<8x128xf32>
    %17 = vector.extract_strided_slice %16 {offsets = [0, 0], sizes = [8, 96], strides = [1, 1]} : vector<8x128xf32> to vector<8x96xf32>
    %18 = arith.negf %17 : vector<8x96xf32>
    %19 = math.exp %18 : vector<8x96xf32>
    %cst_17 = arith.constant 1.000000e+00 : f32
    %20 = vector.broadcast %cst_17 : f32 to vector<8x96xf32>
    %21 = arith.addf %20, %19 : vector<8x96xf32>
    %22 = arith.divf %20, %21 : vector<8x96xf32>
    %23 = vector.extract_strided_slice %16 {offsets = [0, 96], sizes = [8, 32], strides = [1, 1]} : vector<8x128xf32> to vector<8x32xf32>
    %24 = math.tanh %23 : vector<8x32xf32>
    %25 = vector.extract_strided_slice %22 {offsets = [0, 0], sizes = [8, 32], strides = [1, 1]} : vector<8x96xf32> to vector<8x32xf32>
    %26 = vector.extract_strided_slice %22 {offsets = [0, 32], sizes = [8, 32], strides = [1, 1]} : vector<8x96xf32> to vector<8x32xf32>
    %27 = vector.extract_strided_slice %22 {offsets = [0, 64], sizes = [8, 32], strides = [1, 1]} : vector<8x96xf32> to vector<8x32xf32>
    %28 = arith.mulf %26, %11 : vector<8x32xf32>
    %29 = arith.mulf %25, %24 : vector<8x32xf32>
    %30 = arith.addf %28, %29 : vector<8x32xf32>
    %31 = math.tanh %30 : vector<8x32xf32>
    %32 = arith.mulf %27, %31 : vector<8x32xf32>
    %c0_18 = arith.constant 0 : index
    %c0_19 = arith.constant 0 : index
    %c0_20 = arith.constant 0 : index
    %33 = vector.load %arg29[%c0_18, %c0_19, %c0_20] : memref<8x8x32xf32, #tpu.memory_space<vmem>>, vector<1x8x32xf32>
    %34 = vector.shape_cast %33 : vector<1x8x32xf32> to vector<8x32xf32>
    %35 = vector.shape_cast %32 : vector<8x32xf32> to vector<1x8x32xf32>
    tpu.vector_store %arg29[%c0_18, %c0_19, %c0_20], %35 {strides = array<i32>} : memref<8x8x32xf32, #tpu.memory_space<vmem>>, vector<1x8x32xf32>,
    %c1 = arith.constant 1 : index
    %c0_21 = arith.constant 0 : index
    %c0_22 = arith.constant 0 : index
    %36 = vector.load %arg28[%c1, %c0_21, %c0_22] : memref<8x8x128xf32, #tpu.memory_space<vmem>>, vector<1x8x128xf32>
    %37 = vector.shape_cast %36 : vector<1x8x128xf32> to vector<8x128xf32>
    %38 = arith.truncf %32 : vector<8x32xf32> to vector<8x32xbf16>
    %cst_23 = arith.constant dense<0.000000e+00> : vector<8x128xf32>
    %39 = tpu.matmul %38, %0, %cst_23 {dimension_numbers = #tpu.dot_dimension_numbers<[1], [0], [0], [1], [0, 0, 1, 1], [], []>} : vector<8x32xbf16>, vector<32x128xbf16>, vector<8x128xf32> -> vector<8x128xf32>
    %40 = arith.addf %37, %39 : vector<8x128xf32>
    %41 = vector.extract_strided_slice %40 {offsets = [0, 0], sizes = [8, 96], strides = [1, 1]} : vector<8x128xf32> to vector<8x96xf32>
    %42 = arith.negf %41 : vector<8x96xf32>
    %43 = math.exp %42 : vector<8x96xf32>
    %cst_24 = arith.constant 1.000000e+00 : f32
    %44 = vector.broadcast %cst_24 : f32 to vector<8x96xf32>
    %45 = arith.addf %44, %43 : vector<8x96xf32>
    %46 = arith.divf %44, %45 : vector<8x96xf32>
    %47 = vector.extract_strided_slice %40 {offsets = [0, 96], sizes = [8, 32], strides = [1, 1]} : vector<8x128xf32> to vector<8x32xf32>
    %48 = math.tanh %47 : vector<8x32xf32>
    %49 = vector.extract_strided_slice %46 {offsets = [0, 0], sizes = [8, 32], strides = [1, 1]} : vector<8x96xf32> to vector<8x32xf32>
    %50 = vector.extract_strided_slice %46 {offsets = [0, 32], sizes = [8, 32], strides = [1, 1]} : vector<8x96xf32> to vector<8x32xf32>
    %51 = vector.extract_strided_slice %46 {offsets = [0, 64], sizes = [8, 32], strides = [1, 1]} : vector<8x96xf32> to vector<8x32xf32>
    %52 = arith.mulf %50, %30 : vector<8x32xf32>
    %53 = arith.mulf %49, %48 : vector<8x32xf32>
    %54 = arith.addf %52, %53 : vector<8x32xf32>
    %55 = math.tanh %54 : vector<8x32xf32>
    %56 = arith.mulf %51, %55 : vector<8x32xf32>
    %c1_25 = arith.constant 1 : index
    %c0_26 = arith.constant 0 : index
    %c0_27 = arith.constant 0 : index
    %57 = vector.load %arg29[%c1_25, %c0_26, %c0_27] : memref<8x8x32xf32, #tpu.memory_space<vmem>>, vector<1x8x32xf32>
    %58 = vector.shape_cast %57 : vector<1x8x32xf32> to vector<8x32xf32>
    %59 = vector.shape_cast %56 : vector<8x32xf32> to vector<1x8x32xf32>
    tpu.vector_store %arg29[%c1_25, %c0_26, %c0_27], %59 {strides = array<i32>} : memref<8x8x32xf32, #tpu.memory_space<vmem>>, vector<1x8x32xf32>,
    %c2 = arith.constant 2 : index
    %c0_28 = arith.constant 0 : index
    %c0_29 = arith.constant 0 : index
    %60 = vector.load %arg28[%c2, %c0_28, %c0_29] : memref<8x8x128xf32, #tpu.memory_space<vmem>>, vector<1x8x128xf32>
    %61 = vector.shape_cast %60 : vector<1x8x128xf32> to vector<8x128xf32>
    %62 = arith.truncf %56 : vector<8x32xf32> to vector<8x32xbf16>
    %cst_30 = arith.constant dense<0.000000e+00> : vector<8x128xf32>
    %63 = tpu.matmul %62, %0, %cst_30 {dimension_numbers = #tpu.dot_dimension_numbers<[1], [0], [0], [1], [0, 0, 1, 1], [], []>} : vector<8x32xbf16>, vector<32x128xbf16>, vector<8x128xf32> -> vector<8x128xf32>
    %64 = arith.addf %61, %63 : vector<8x128xf32>
    %65 = vector.extract_strided_slice %64 {offsets = [0, 0], sizes = [8, 96], strides = [1, 1]} : vector<8x128xf32> to vector<8x96xf32>
    %66 = arith.negf %65 : vector<8x96xf32>
    %67 = math.exp %66 : vector<8x96xf32>
    %cst_31 = arith.constant 1.000000e+00 : f32
    %68 = vector.broadcast %cst_31 : f32 to vector<8x96xf32>
    %69 = arith.addf %68, %67 : vector<8x96xf32>
    %70 = arith.divf %68, %69 : vector<8x96xf32>
    %71 = vector.extract_strided_slice %64 {offsets = [0, 96], sizes = [8, 32], strides = [1, 1]} : vector<8x128xf32> to vector<8x32xf32>
    %72 = math.tanh %71 : vector<8x32xf32>
    %73 = vector.extract_strided_slice %70 {offsets = [0, 0], sizes = [8, 32], strides = [1, 1]} : vector<8x96xf32> to vector<8x32xf32>
    %74 = vector.extract_strided_slice %70 {offsets = [0, 32], sizes = [8, 32], strides = [1, 1]} : vector<8x96xf32> to vector<8x32xf32>
    %75 = vector.extract_strided_slice %70 {offsets = [0, 64], sizes = [8, 32], strides = [1, 1]} : vector<8x96xf32> to vector<8x32xf32>
    %76 = arith.mulf %74, %54 : vector<8x32xf32>
    %77 = arith.mulf %73, %72 : vector<8x32xf32>
    %78 = arith.addf %76, %77 : vector<8x32xf32>
    %79 = math.tanh %78 : vector<8x32xf32>
    %80 = arith.mulf %75, %79 : vector<8x32xf32>
    %c2_32 = arith.constant 2 : index
    %c0_33 = arith.constant 0 : index
    %c0_34 = arith.constant 0 : index
    %81 = vector.load %arg29[%c2_32, %c0_33, %c0_34] : memref<8x8x32xf32, #tpu.memory_space<vmem>>, vector<1x8x32xf32>
    %82 = vector.shape_cast %81 : vector<1x8x32xf32> to vector<8x32xf32>
    %83 = vector.shape_cast %80 : vector<8x32xf32> to vector<1x8x32xf32>
    tpu.vector_store %arg29[%c2_32, %c0_33, %c0_34], %83 {strides = array<i32>} : memref<8x8x32xf32, #tpu.memory_space<vmem>>, vector<1x8x32xf32>,
    %c3 = arith.constant 3 : index
    %c0_35 = arith.constant 0 : index
    %c0_36 = arith.constant 0 : index
    %84 = vector.load %arg28[%c3, %c0_35, %c0_36] : memref<8x8x128xf32, #tpu.memory_space<vmem>>, vector<1x8x128xf32>
    %85 = vector.shape_cast %84 : vector<1x8x128xf32> to vector<8x128xf32>
    %86 = arith.truncf %80 : vector<8x32xf32> to vector<8x32xbf16>
    %cst_37 = arith.constant dense<0.000000e+00> : vector<8x128xf32>
    %87 = tpu.matmul %86, %0, %cst_37 {dimension_numbers = #tpu.dot_dimension_numbers<[1], [0], [0], [1], [0, 0, 1, 1], [], []>} : vector<8x32xbf16>, vector<32x128xbf16>, vector<8x128xf32> -> vector<8x128xf32>
    %88 = arith.addf %85, %87 : vector<8x128xf32>
    %89 = vector.extract_strided_slice %88 {offsets = [0, 0], sizes = [8, 96], strides = [1, 1]} : vector<8x128xf32> to vector<8x96xf32>
    %90 = arith.negf %89 : vector<8x96xf32>
    %91 = math.exp %90 : vector<8x96xf32>
    %cst_38 = arith.constant 1.000000e+00 : f32
    %92 = vector.broadcast %cst_38 : f32 to vector<8x96xf32>
    %93 = arith.addf %92, %91 : vector<8x96xf32>
    %94 = arith.divf %92, %93 : vector<8x96xf32>
    %95 = vector.extract_strided_slice %88 {offsets = [0, 96], sizes = [8, 32], strides = [1, 1]} : vector<8x128xf32> to vector<8x32xf32>
    %96 = math.tanh %95 : vector<8x32xf32>
    %97 = vector.extract_strided_slice %94 {offsets = [0, 0], sizes = [8, 32], strides = [1, 1]} : vector<8x96xf32> to vector<8x32xf32>
    %98 = vector.extract_strided_slice %94 {offsets = [0, 32], sizes = [8, 32], strides = [1, 1]} : vector<8x96xf32> to vector<8x32xf32>
    %99 = vector.extract_strided_slice %94 {offsets = [0, 64], sizes = [8, 32], strides = [1, 1]} : vector<8x96xf32> to vector<8x32xf32>
    %100 = arith.mulf %98, %78 : vector<8x32xf32>
    %101 = arith.mulf %97, %96 : vector<8x32xf32>
    %102 = arith.addf %100, %101 : vector<8x32xf32>
    %103 = math.tanh %102 : vector<8x32xf32>
    %104 = arith.mulf %99, %103 : vector<8x32xf32>
    %c3_39 = arith.constant 3 : index
    %c0_40 = arith.constant 0 : index
    %c0_41 = arith.constant 0 : index
    %105 = vector.load %arg29[%c3_39, %c0_40, %c0_41] : memref<8x8x32xf32, #tpu.memory_space<vmem>>, vector<1x8x32xf32>
    %106 = vector.shape_cast %105 : vector<1x8x32xf32> to vector<8x32xf32>
    %107 = vector.shape_cast %104 : vector<8x32xf32> to vector<1x8x32xf32>
    tpu.vector_store %arg29[%c3_39, %c0_40, %c0_41], %107 {strides = array<i32>} : memref<8x8x32xf32, #tpu.memory_space<vmem>>, vector<1x8x32xf32>,
    %c4 = arith.constant 4 : index
    %c0_42 = arith.constant 0 : index
    %c0_43 = arith.constant 0 : index
    %108 = vector.load %arg28[%c4, %c0_42, %c0_43] : memref<8x8x128xf32, #tpu.memory_space<vmem>>, vector<1x8x128xf32>
    %109 = vector.shape_cast %108 : vector<1x8x128xf32> to vector<8x128xf32>
    %110 = arith.truncf %104 : vector<8x32xf32> to vector<8x32xbf16>
    %cst_44 = arith.constant dense<0.000000e+00> : vector<8x128xf32>
    %111 = tpu.matmul %110, %0, %cst_44 {dimension_numbers = #tpu.dot_dimension_numbers<[1], [0], [0], [1], [0, 0, 1, 1], [], []>} : vector<8x32xbf16>, vector<32x128xbf16>, vector<8x128xf32> -> vector<8x128xf32>
    %112 = arith.addf %109, %111 : vector<8x128xf32>
    %113 = vector.extract_strided_slice %112 {offsets = [0, 0], sizes = [8, 96], strides = [1, 1]} : vector<8x128xf32> to vector<8x96xf32>
    %114 = arith.negf %113 : vector<8x96xf32>
    %115 = math.exp %114 : vector<8x96xf32>
    %cst_45 = arith.constant 1.000000e+00 : f32
    %116 = vector.broadcast %cst_45 : f32 to vector<8x96xf32>
    %117 = arith.addf %116, %115 : vector<8x96xf32>
    %118 = arith.divf %116, %117 : vector<8x96xf32>
    %119 = vector.extract_strided_slice %112 {offsets = [0, 96], sizes = [8, 32], strides = [1, 1]} : vector<8x128xf32> to vector<8x32xf32>
    %120 = math.tanh %119 : vector<8x32xf32>
    %121 = vector.extract_strided_slice %118 {offsets = [0, 0], sizes = [8, 32], strides = [1, 1]} : vector<8x96xf32> to vector<8x32xf32>
    %122 = vector.extract_strided_slice %118 {offsets = [0, 32], sizes = [8, 32], strides = [1, 1]} : vector<8x96xf32> to vector<8x32xf32>
    %123 = vector.extract_strided_slice %118 {offsets = [0, 64], sizes = [8, 32], strides = [1, 1]} : vector<8x96xf32> to vector<8x32xf32>
    %124 = arith.mulf %122, %102 : vector<8x32xf32>
    %125 = arith.mulf %121, %120 : vector<8x32xf32>
    %126 = arith.addf %124, %125 : vector<8x32xf32>
    %127 = math.tanh %126 : vector<8x32xf32>
    %128 = arith.mulf %123, %127 : vector<8x32xf32>
    %c4_46 = arith.constant 4 : index
    %c0_47 = arith.constant 0 : index
    %c0_48 = arith.constant 0 : index
    %129 = vector.load %arg29[%c4_46, %c0_47, %c0_48] : memref<8x8x32xf32, #tpu.memory_space<vmem>>, vector<1x8x32xf32>
    %130 = vector.shape_cast %129 : vector<1x8x32xf32> to vector<8x32xf32>
    %131 = vector.shape_cast %128 : vector<8x32xf32> to vector<1x8x32xf32>
    tpu.vector_store %arg29[%c4_46, %c0_47, %c0_48], %131 {strides = array<i32>} : memref<8x8x32xf32, #tpu.memory_space<vmem>>, vector<1x8x32xf32>,
    %c5 = arith.constant 5 : index
    %c0_49 = arith.constant 0 : index
    %c0_50 = arith.constant 0 : index
    %132 = vector.load %arg28[%c5, %c0_49, %c0_50] : memref<8x8x128xf32, #tpu.memory_space<vmem>>, vector<1x8x128xf32>
    %133 = vector.shape_cast %132 : vector<1x8x128xf32> to vector<8x128xf32>
    %134 = arith.truncf %128 : vector<8x32xf32> to vector<8x32xbf16>
    %cst_51 = arith.constant dense<0.000000e+00> : vector<8x128xf32>
    %135 = tpu.matmul %134, %0, %cst_51 {dimension_numbers = #tpu.dot_dimension_numbers<[1], [0], [0], [1], [0, 0, 1, 1], [], []>} : vector<8x32xbf16>, vector<32x128xbf16>, vector<8x128xf32> -> vector<8x128xf32>
    %136 = arith.addf %133, %135 : vector<8x128xf32>
    %137 = vector.extract_strided_slice %136 {offsets = [0, 0], sizes = [8, 96], strides = [1, 1]} : vector<8x128xf32> to vector<8x96xf32>
    %138 = arith.negf %137 : vector<8x96xf32>
    %139 = math.exp %138 : vector<8x96xf32>
    %cst_52 = arith.constant 1.000000e+00 : f32
    %140 = vector.broadcast %cst_52 : f32 to vector<8x96xf32>
    %141 = arith.addf %140, %139 : vector<8x96xf32>
    %142 = arith.divf %140, %141 : vector<8x96xf32>
    %143 = vector.extract_strided_slice %136 {offsets = [0, 96], sizes = [8, 32], strides = [1, 1]} : vector<8x128xf32> to vector<8x32xf32>
    %144 = math.tanh %143 : vector<8x32xf32>
    %145 = vector.extract_strided_slice %142 {offsets = [0, 0], sizes = [8, 32], strides = [1, 1]} : vector<8x96xf32> to vector<8x32xf32>
    %146 = vector.extract_strided_slice %142 {offsets = [0, 32], sizes = [8, 32], strides = [1, 1]} : vector<8x96xf32> to vector<8x32xf32>
    %147 = vector.extract_strided_slice %142 {offsets = [0, 64], sizes = [8, 32], strides = [1, 1]} : vector<8x96xf32> to vector<8x32xf32>
    %148 = arith.mulf %146, %126 : vector<8x32xf32>
    %149 = arith.mulf %145, %144 : vector<8x32xf32>
    %150 = arith.addf %148, %149 : vector<8x32xf32>
    %151 = math.tanh %150 : vector<8x32xf32>
    %152 = arith.mulf %147, %151 : vector<8x32xf32>
    %c5_53 = arith.constant 5 : index
    %c0_54 = arith.constant 0 : index
    %c0_55 = arith.constant 0 : index
    %153 = vector.load %arg29[%c5_53, %c0_54, %c0_55] : memref<8x8x32xf32, #tpu.memory_space<vmem>>, vector<1x8x32xf32>
    %154 = vector.shape_cast %153 : vector<1x8x32xf32> to vector<8x32xf32>
    %155 = vector.shape_cast %152 : vector<8x32xf32> to vector<1x8x32xf32>
    tpu.vector_store %arg29[%c5_53, %c0_54, %c0_55], %155 {strides = array<i32>} : memref<8x8x32xf32, #tpu.memory_space<vmem>>, vector<1x8x32xf32>,
    %c6 = arith.constant 6 : index
    %c0_56 = arith.constant 0 : index
    %c0_57 = arith.constant 0 : index
    %156 = vector.load %arg28[%c6, %c0_56, %c0_57] : memref<8x8x128xf32, #tpu.memory_space<vmem>>, vector<1x8x128xf32>
    %157 = vector.shape_cast %156 : vector<1x8x128xf32> to vector<8x128xf32>
    %158 = arith.truncf %152 : vector<8x32xf32> to vector<8x32xbf16>
    %cst_58 = arith.constant dense<0.000000e+00> : vector<8x128xf32>
    %159 = tpu.matmul %158, %0, %cst_58 {dimension_numbers = #tpu.dot_dimension_numbers<[1], [0], [0], [1], [0, 0, 1, 1], [], []>} : vector<8x32xbf16>, vector<32x128xbf16>, vector<8x128xf32> -> vector<8x128xf32>
    %160 = arith.addf %157, %159 : vector<8x128xf32>
    %161 = vector.extract_strided_slice %160 {offsets = [0, 0], sizes = [8, 96], strides = [1, 1]} : vector<8x128xf32> to vector<8x96xf32>
    %162 = arith.negf %161 : vector<8x96xf32>
    %163 = math.exp %162 : vector<8x96xf32>
    %cst_59 = arith.constant 1.000000e+00 : f32
    %164 = vector.broadcast %cst_59 : f32 to vector<8x96xf32>
    %165 = arith.addf %164, %163 : vector<8x96xf32>
    %166 = arith.divf %164, %165 : vector<8x96xf32>
    %167 = vector.extract_strided_slice %160 {offsets = [0, 96], sizes = [8, 32], strides = [1, 1]} : vector<8x128xf32> to vector<8x32xf32>
    %168 = math.tanh %167 : vector<8x32xf32>
    %169 = vector.extract_strided_slice %166 {offsets = [0, 0], sizes = [8, 32], strides = [1, 1]} : vector<8x96xf32> to vector<8x32xf32>
    %170 = vector.extract_strided_slice %166 {offsets = [0, 32], sizes = [8, 32], strides = [1, 1]} : vector<8x96xf32> to vector<8x32xf32>
    %171 = vector.extract_strided_slice %166 {offsets = [0, 64], sizes = [8, 32], strides = [1, 1]} : vector<8x96xf32> to vector<8x32xf32>
    %172 = arith.mulf %170, %150 : vector<8x32xf32>
    %173 = arith.mulf %169, %168 : vector<8x32xf32>
    %174 = arith.addf %172, %173 : vector<8x32xf32>
    %175 = math.tanh %174 : vector<8x32xf32>
    %176 = arith.mulf %171, %175 : vector<8x32xf32>
    %c6_60 = arith.constant 6 : index
    %c0_61 = arith.constant 0 : index
    %c0_62 = arith.constant 0 : index
    %177 = vector.load %arg29[%c6_60, %c0_61, %c0_62] : memref<8x8x32xf32, #tpu.memory_space<vmem>>, vector<1x8x32xf32>
    %178 = vector.shape_cast %177 : vector<1x8x32xf32> to vector<8x32xf32>
    %179 = vector.shape_cast %176 : vector<8x32xf32> to vector<1x8x32xf32>
    tpu.vector_store %arg29[%c6_60, %c0_61, %c0_62], %179 {strides = array<i32>} : memref<8x8x32xf32, #tpu.memory_space<vmem>>, vector<1x8x32xf32>,
    %c7 = arith.constant 7 : index
    %c0_63 = arith.constant 0 : index
    %c0_64 = arith.constant 0 : index
    %180 = vector.load %arg28[%c7, %c0_63, %c0_64] : memref<8x8x128xf32, #tpu.memory_space<vmem>>, vector<1x8x128xf32>
    %181 = vector.shape_cast %180 : vector<1x8x128xf32> to vector<8x128xf32>
    %182 = arith.truncf %176 : vector<8x32xf32> to vector<8x32xbf16>
    %cst_65 = arith.constant dense<0.000000e+00> : vector<8x128xf32>
    %183 = tpu.matmul %182, %0, %cst_65 {dimension_numbers = #tpu.dot_dimension_numbers<[1], [0], [0], [1], [0, 0, 1, 1], [], []>} : vector<8x32xbf16>, vector<32x128xbf16>, vector<8x128xf32> -> vector<8x128xf32>
    %184 = arith.addf %181, %183 : vector<8x128xf32>
    %185 = vector.extract_strided_slice %184 {offsets = [0, 0], sizes = [8, 96], strides = [1, 1]} : vector<8x128xf32> to vector<8x96xf32>
    %186 = arith.negf %185 : vector<8x96xf32>
    %187 = math.exp %186 : vector<8x96xf32>
    %cst_66 = arith.constant 1.000000e+00 : f32
    %188 = vector.broadcast %cst_66 : f32 to vector<8x96xf32>
    %189 = arith.addf %188, %187 : vector<8x96xf32>
    %190 = arith.divf %188, %189 : vector<8x96xf32>
    %191 = vector.extract_strided_slice %184 {offsets = [0, 96], sizes = [8, 32], strides = [1, 1]} : vector<8x128xf32> to vector<8x32xf32>
    %192 = math.tanh %191 : vector<8x32xf32>
    %193 = vector.extract_strided_slice %190 {offsets = [0, 0], sizes = [8, 32], strides = [1, 1]} : vector<8x96xf32> to vector<8x32xf32>
    %194 = vector.extract_strided_slice %190 {offsets = [0, 32], sizes = [8, 32], strides = [1, 1]} : vector<8x96xf32> to vector<8x32xf32>
    %195 = vector.extract_strided_slice %190 {offsets = [0, 64], sizes = [8, 32], strides = [1, 1]} : vector<8x96xf32> to vector<8x32xf32>
    %196 = arith.mulf %194, %174 : vector<8x32xf32>
    %197 = arith.mulf %193, %192 : vector<8x32xf32>
    %198 = arith.addf %196, %197 : vector<8x32xf32>
    %199 = math.tanh %198 : vector<8x32xf32>
    %200 = arith.mulf %195, %199 : vector<8x32xf32>
    %c7_67 = arith.constant 7 : index
    %c0_68 = arith.constant 0 : index
    %c0_69 = arith.constant 0 : index
    %201 = vector.load %arg29[%c7_67, %c0_68, %c0_69] : memref<8x8x32xf32, #tpu.memory_space<vmem>>, vector<1x8x32xf32>
    %202 = vector.shape_cast %201 : vector<1x8x32xf32> to vector<8x32xf32>
    %203 = vector.shape_cast %200 : vector<8x32xf32> to vector<1x8x32xf32>
    tpu.vector_store %arg29[%c7_67, %c0_68, %c0_69], %203 {strides = array<i32>} : memref<8x8x32xf32, #tpu.memory_space<vmem>>, vector<1x8x32xf32>,
    %c0_70 = arith.constant 0 : index
    %c0_71 = arith.constant 0 : index
    %c0_72 = arith.constant 0 : index
    %204 = vector.load %arg29[%c0_70, %c0_71, %c0_72] : memref<8x8x32xf32, #tpu.memory_space<vmem>>, vector<8x8x32xf32>
    %205 = vector.shape_cast %200 : vector<8x32xf32> to vector<1x8x32xf32>
    %206 = vector.broadcast %205 : vector<1x8x32xf32> to vector<8x8x32xf32>
    %207 = arith.mulf %204, %206 : vector<8x8x32xf32>
    %cst_73 = arith.constant dense<0.000000e+00> : vector<8x8xf32>
    %208 = vector.multi_reduction <add>, %207, %cst_73 [2] : vector<8x8x32xf32> to vector<8x8xf32>
    %209 = arith.negf %208 : vector<8x8xf32>
    %210 = math.exp %209 : vector<8x8xf32>
    %cst_74 = arith.constant 1.000000e+00 : f32
    %211 = vector.broadcast %cst_74 : f32 to vector<8x8xf32>
    %212 = arith.addf %211, %210 : vector<8x8xf32>
    %213 = arith.divf %211, %212 : vector<8x8xf32>
    %214 = vector.shape_cast %213 : vector<8x8xf32> to vector<8x8x1xf32>
    %215 = vector.broadcast %214 : vector<8x8x1xf32> to vector<8x8x32xf32>
    %216 = arith.mulf %215, %204 : vector<8x8x32xf32>
    %cst_75 = arith.constant dense<0.000000e+00> : vector<8x32xf32>
    %217 = vector.multi_reduction <add>, %216, %cst_75 [0] : vector<8x8x32xf32> to vector<8x32xf32>
    %cst_76 = arith.constant 8.000000e+00 : f32
    %218 = vector.broadcast %cst_76 : f32 to vector<8x32xf32>
    %219 = arith.divf %217, %218 : vector<8x32xf32>
    %c0_77 = arith.constant 0 : index
    %c0_78 = arith.constant 0 : index
    %c0_79 = arith.constant 0 : index
    %220 = vector.load %arg2[%c0_77, %c0_78, %c0_79] : memref<8x18x16xbf16, #tpu.memory_space<vmem>>, vector<8x18x16xbf16>
    %221 = vector.shape_cast %220 : vector<8x18x16xbf16> to vector<144x16xbf16>
    %c0_80 = arith.constant 0 : index
    %c0_81 = arith.constant 0 : index
    %222 = vector.load %arg7[%c0_80, %c0_81] : memref<16x24xbf16, #tpu.memory_space<vmem>>, vector<16x24xbf16>
    %cst_82 = arith.constant dense<0.000000e+00> : vector<144x24xf32>
    %223 = tpu.matmul %221, %222, %cst_82 {dimension_numbers = #tpu.dot_dimension_numbers<[1], [0], [0], [1], [0, 0, 1, 1], [], []>} : vector<144x16xbf16>, vector<16x24xbf16>, vector<144x24xf32> -> vector<144x24xf32>
    %224 = vector.shape_cast %223 : vector<144x24xf32> to vector<8x18x24xf32>
    %225 = vector.extract_strided_slice %224 {offsets = [0, 0, 0], sizes = [8, 16, 8], strides = [1, 1, 1]} : vector<8x18x24xf32> to vector<8x16x8xf32>
    %226 = vector.extract_strided_slice %224 {offsets = [0, 1, 8], sizes = [8, 16, 8], strides = [1, 1, 1]} : vector<8x18x24xf32> to vector<8x16x8xf32>
    %227 = arith.addf %225, %226 : vector<8x16x8xf32>
    %228 = vector.extract_strided_slice %224 {offsets = [0, 2, 16], sizes = [8, 16, 8], strides = [1, 1, 1]} : vector<8x18x24xf32> to vector<8x16x8xf32>
    %229 = arith.addf %227, %228 : vector<8x16x8xf32>
    %c0_83 = arith.constant 0 : index
    %c0_84 = arith.constant 0 : index
    %230 = vector.load %arg8[%c0_83, %c0_84] : memref<1x8xf32, #tpu.memory_space<vmem>>, vector<1x8xf32>
    %231 = vector.shape_cast %230 : vector<1x8xf32> to vector<1x1x8xf32>
    %232 = vector.broadcast %231 : vector<1x1x8xf32> to vector<8x16x8xf32>
    %233 = arith.addf %229, %232 : vector<8x16x8xf32>
    %cst_85 = arith.constant dense<0xFF800000> : vector<8x8xf32>
    %234 = vector.multi_reduction <maximumf>, %233, %cst_85 [1] : vector<8x16x8xf32> to vector<8x8xf32>
    %cst_86 = arith.constant dense<0.000000e+00> : vector<8x8xf32>
    %235 = vector.multi_reduction <add>, %233, %cst_86 [1] : vector<8x16x8xf32> to vector<8x8xf32>
    %cst_87 = arith.constant 1.600000e+01 : f32
    %236 = vector.broadcast %cst_87 : f32 to vector<8x8xf32>
    %237 = arith.divf %235, %236 : vector<8x8xf32>
    %c0_88 = arith.constant 0 : index
    %c0_89 = arith.constant 0 : index
    %238 = vector.load %arg9[%c0_88, %c0_89] : memref<8x8xbf16, #tpu.memory_space<vmem>>, vector<8x8xbf16>
    %c0_90 = arith.constant 0 : index
    %c0_91 = arith.constant 0 : index
    %239 = vector.load %arg10[%c0_90, %c0_91] : memref<1x8xf32, #tpu.memory_space<vmem>>, vector<1x8xf32>
    %c0_92 = arith.constant 0 : index
    %c0_93 = arith.constant 0 : index
    %240 = vector.load %arg11[%c0_92, %c0_93] : memref<8x8xbf16, #tpu.memory_space<vmem>>, vector<8x8xbf16>
    %c0_94 = arith.constant 0 : index
    %c0_95 = arith.constant 0 : index
    %241 = vector.load %arg12[%c0_94, %c0_95] : memref<1x8xf32, #tpu.memory_space<vmem>>, vector<1x8xf32>
    %242 = arith.truncf %234 : vector<8x8xf32> to vector<8x8xbf16>
    %cst_96 = arith.constant dense<0.000000e+00> : vector<8x8xf32>
    %243 = tpu.matmul %242, %238, %cst_96 {dimension_numbers = #tpu.dot_dimension_numbers<[1], [0], [0], [1], [0, 0, 1, 1], [], []>} : vector<8x8xbf16>, vector<8x8xbf16>, vector<8x8xf32> -> vector<8x8xf32>
    %244 = vector.broadcast %239 : vector<1x8xf32> to vector<8x8xf32>
    %245 = arith.addf %243, %244 : vector<8x8xf32>
    %246 = arith.negf %245 : vector<8x8xf32>
    %247 = math.exp %246 : vector<8x8xf32>
    %cst_97 = arith.constant 1.000000e+00 : f32
    %248 = vector.broadcast %cst_97 : f32 to vector<8x8xf32>
    %249 = arith.addf %248, %247 : vector<8x8xf32>
    %250 = arith.divf %248, %249 : vector<8x8xf32>
    %251 = arith.truncf %250 : vector<8x8xf32> to vector<8x8xbf16>
    %cst_98 = arith.constant dense<0.000000e+00> : vector<8x8xf32>
    %252 = tpu.matmul %251, %240, %cst_98 {dimension_numbers = #tpu.dot_dimension_numbers<[1], [0], [0], [1], [0, 0, 1, 1], [], []>} : vector<8x8xbf16>, vector<8x8xbf16>, vector<8x8xf32> -> vector<8x8xf32>
    %253 = vector.broadcast %241 : vector<1x8xf32> to vector<8x8xf32>
    %254 = arith.addf %252, %253 : vector<8x8xf32>
    %255 = arith.negf %254 : vector<8x8xf32>
    %256 = math.exp %255 : vector<8x8xf32>
    %cst_99 = arith.constant 1.000000e+00 : f32
    %257 = vector.broadcast %cst_99 : f32 to vector<8x8xf32>
    %258 = arith.addf %257, %256 : vector<8x8xf32>
    %259 = arith.divf %257, %258 : vector<8x8xf32>
    %c0_100 = arith.constant 0 : index
    %c0_101 = arith.constant 0 : index
    %260 = vector.load %arg13[%c0_100, %c0_101] : memref<8x8xbf16, #tpu.memory_space<vmem>>, vector<8x8xbf16>
    %c0_102 = arith.constant 0 : index
    %c0_103 = arith.constant 0 : index
    %261 = vector.load %arg14[%c0_102, %c0_103] : memref<1x8xf32, #tpu.memory_space<vmem>>, vector<1x8xf32>
    %c0_104 = arith.constant 0 : index
    %c0_105 = arith.constant 0 : index
    %262 = vector.load %arg15[%c0_104, %c0_105] : memref<8x8xbf16, #tpu.memory_space<vmem>>, vector<8x8xbf16>
    %c0_106 = arith.constant 0 : index
    %c0_107 = arith.constant 0 : index
    %263 = vector.load %arg16[%c0_106, %c0_107] : memref<1x8xf32, #tpu.memory_space<vmem>>, vector<1x8xf32>
    %264 = arith.truncf %237 : vector<8x8xf32> to vector<8x8xbf16>
    %cst_108 = arith.constant dense<0.000000e+00> : vector<8x8xf32>
    %265 = tpu.matmul %264, %260, %cst_108 {dimension_numbers = #tpu.dot_dimension_numbers<[1], [0], [0], [1], [0, 0, 1, 1], [], []>} : vector<8x8xbf16>, vector<8x8xbf16>, vector<8x8xf32> -> vector<8x8xf32>
    %266 = vector.broadcast %261 : vector<1x8xf32> to vector<8x8xf32>
    %267 = arith.addf %265, %266 : vector<8x8xf32>
    %268 = arith.negf %267 : vector<8x8xf32>
    %269 = math.exp %268 : vector<8x8xf32>
    %cst_109 = arith.constant 1.000000e+00 : f32
    %270 = vector.broadcast %cst_109 : f32 to vector<8x8xf32>
    %271 = arith.addf %270, %269 : vector<8x8xf32>
    %272 = arith.divf %270, %271 : vector<8x8xf32>
    %273 = arith.truncf %272 : vector<8x8xf32> to vector<8x8xbf16>
    %cst_110 = arith.constant dense<0.000000e+00> : vector<8x8xf32>
    %274 = tpu.matmul %273, %262, %cst_110 {dimension_numbers = #tpu.dot_dimension_numbers<[1], [0], [0], [1], [0, 0, 1, 1], [], []>} : vector<8x8xbf16>, vector<8x8xbf16>, vector<8x8xf32> -> vector<8x8xf32>
    %275 = vector.broadcast %263 : vector<1x8xf32> to vector<8x8xf32>
    %276 = arith.addf %274, %275 : vector<8x8xf32>
    %277 = arith.negf %276 : vector<8x8xf32>
    %278 = math.exp %277 : vector<8x8xf32>
    %cst_111 = arith.constant 1.000000e+00 : f32
    %279 = vector.broadcast %cst_111 : f32 to vector<8x8xf32>
    %280 = arith.addf %279, %278 : vector<8x8xf32>
    %281 = arith.divf %279, %280 : vector<8x8xf32>
    %282 = arith.mulf %259, %281 : vector<8x8xf32>
    %283 = vector.shape_cast %282 : vector<8x8xf32> to vector<8x1x8xf32>
    %284 = vector.broadcast %283 : vector<8x1x8xf32> to vector<8x16x8xf32>
    %285 = arith.mulf %284, %233 : vector<8x16x8xf32>
    %cst_112 = arith.constant dense<0xFF800000> : vector<8x16xf32>
    %286 = vector.multi_reduction <maximumf>, %285, %cst_112 [2] : vector<8x16x8xf32> to vector<8x16xf32>
    %cst_113 = arith.constant dense<0.000000e+00> : vector<8x16xf32>
    %287 = vector.multi_reduction <add>, %285, %cst_113 [2] : vector<8x16x8xf32> to vector<8x16xf32>
    %cst_114 = arith.constant 8.000000e+00 : f32
    %288 = vector.broadcast %cst_114 : f32 to vector<8x16xf32>
    %289 = arith.divf %287, %288 : vector<8x16xf32>
    %cst_115 = arith.constant 0.000000e+00 : f32
    %290 = vector.broadcast %cst_115 : f32 to vector<8x1xf32>
    %291 = tpu.concatenate %290, %286, %290 in 1 : vector<8x1xf32>, vector<8x16xf32>, vector<8x1xf32> -> vector<8x18xf32>
    %292 = tpu.concatenate %290, %289, %290 in 1 : vector<8x1xf32>, vector<8x16xf32>, vector<8x1xf32> -> vector<8x18xf32>
    %cst_116 = arith.constant 0.000000e+00 : f32
    %293 = vector.broadcast %cst_116 : f32 to vector<8x16xf32>
    %294 = vector.extract_strided_slice %291 {offsets = [0, 0], sizes = [8, 16], strides = [1, 1]} : vector<8x18xf32> to vector<8x16xf32>
    %c0_117 = arith.constant 0 : index
    %295 = memref.load %arg17[%c0_117] : memref<6xf32, #tpu.memory_space<smem>>
    %296 = vector.broadcast %295 : f32 to vector<8x16xf32>
    %297 = arith.mulf %294, %296 : vector<8x16xf32>
    %298 = arith.addf %293, %297 : vector<8x16xf32>
    %299 = vector.extract_strided_slice %292 {offsets = [0, 0], sizes = [8, 16], strides = [1, 1]} : vector<8x18xf32> to vector<8x16xf32>
    %c1_118 = arith.constant 1 : index
    %300 = memref.load %arg17[%c1_118] : memref<6xf32, #tpu.memory_space<smem>>
    %301 = vector.broadcast %300 : f32 to vector<8x16xf32>
    %302 = arith.mulf %299, %301 : vector<8x16xf32>
    %303 = arith.addf %298, %302 : vector<8x16xf32>
    %304 = vector.extract_strided_slice %291 {offsets = [0, 1], sizes = [8, 16], strides = [1, 1]} : vector<8x18xf32> to vector<8x16xf32>
    %c2_119 = arith.constant 2 : index
    %305 = memref.load %arg17[%c2_119] : memref<6xf32, #tpu.memory_space<smem>>
    %306 = vector.broadcast %305 : f32 to vector<8x16xf32>
    %307 = arith.mulf %304, %306 : vector<8x16xf32>
    %308 = arith.addf %303, %307 : vector<8x16xf32>
    %309 = vector.extract_strided_slice %292 {offsets = [0, 1], sizes = [8, 16], strides = [1, 1]} : vector<8x18xf32> to vector<8x16xf32>
    %c3_120 = arith.constant 3 : index
    %310 = memref.load %arg17[%c3_120] : memref<6xf32, #tpu.memory_space<smem>>
    %311 = vector.broadcast %310 : f32 to vector<8x16xf32>
    %312 = arith.mulf %309, %311 : vector<8x16xf32>
    %313 = arith.addf %308, %312 : vector<8x16xf32>
    %314 = vector.extract_strided_slice %291 {offsets = [0, 2], sizes = [8, 16], strides = [1, 1]} : vector<8x18xf32> to vector<8x16xf32>
    %c4_121 = arith.constant 4 : index
    %315 = memref.load %arg17[%c4_121] : memref<6xf32, #tpu.memory_space<smem>>
    %316 = vector.broadcast %315 : f32 to vector<8x16xf32>
    %317 = arith.mulf %314, %316 : vector<8x16xf32>
    %318 = arith.addf %313, %317 : vector<8x16xf32>
    %319 = vector.extract_strided_slice %292 {offsets = [0, 2], sizes = [8, 16], strides = [1, 1]} : vector<8x18xf32> to vector<8x16xf32>
    %c5_122 = arith.constant 5 : index
    %320 = memref.load %arg17[%c5_122] : memref<6xf32, #tpu.memory_space<smem>>
    %321 = vector.broadcast %320 : f32 to vector<8x16xf32>
    %322 = arith.mulf %319, %321 : vector<8x16xf32>
    %323 = arith.addf %318, %322 : vector<8x16xf32>
    %c0_123 = arith.constant 0 : index
    %324 = memref.load %arg18[%c0_123] : memref<1xf32, #tpu.memory_space<smem>>
    %325 = vector.broadcast %324 : f32 to vector<8x16xf32>
    %326 = arith.addf %323, %325 : vector<8x16xf32>
    %327 = arith.negf %326 : vector<8x16xf32>
    %328 = math.exp %327 : vector<8x16xf32>
    %cst_124 = arith.constant 1.000000e+00 : f32
    %329 = vector.broadcast %cst_124 : f32 to vector<8x16xf32>
    %330 = arith.addf %329, %328 : vector<8x16xf32>
    %331 = arith.divf %329, %330 : vector<8x16xf32>
    %332 = vector.shape_cast %331 : vector<8x16xf32> to vector<8x16x1xf32>
    %333 = vector.broadcast %332 : vector<8x16x1xf32> to vector<8x16x8xf32>
    %334 = arith.mulf %333, %285 : vector<8x16x8xf32>
    %335 = vector.shape_cast %334 : vector<8x16x8xf32> to vector<8x128xf32>
    %336 = arith.truncf %219 : vector<8x32xf32> to vector<8x32xbf16>
    %c0_125 = arith.constant 0 : index
    %c0_126 = arith.constant 0 : index
    %337 = vector.load %arg19[%c0_125, %c0_126] : memref<32x32xbf16, #tpu.memory_space<vmem>>, vector<32x32xbf16>
    %cst_127 = arith.constant dense<0.000000e+00> : vector<8x32xf32>
    %338 = tpu.matmul %336, %337, %cst_127 {dimension_numbers = #tpu.dot_dimension_numbers<[1], [0], [0], [1], [0, 0, 1, 1], [], []>} : vector<8x32xbf16>, vector<32x32xbf16>, vector<8x32xf32> -> vector<8x32xf32>
    %339 = arith.truncf %335 : vector<8x128xf32> to vector<8x128xbf16>
    %c0_128 = arith.constant 0 : index
    %c0_129 = arith.constant 0 : index
    %340 = vector.load %arg20[%c0_128, %c0_129] : memref<128x32xbf16, #tpu.memory_space<vmem>>, vector<128x32xbf16>
    %cst_130 = arith.constant dense<0.000000e+00> : vector<8x32xf32>
    %341 = tpu.matmul %339, %340, %cst_130 {dimension_numbers = #tpu.dot_dimension_numbers<[1], [0], [0], [1], [0, 0, 1, 1], [], []>} : vector<8x128xbf16>, vector<128x32xbf16>, vector<8x32xf32> -> vector<8x32xf32>
    %342 = arith.addf %338, %341 : vector<8x32xf32>
    %c0_131 = arith.constant 0 : index
    %c0_132 = arith.constant 0 : index
    %343 = vector.load %arg3[%c0_131, %c0_132] : memref<8x8xbf16, #tpu.memory_space<vmem>>, vector<8x8xbf16>
    %c0_133 = arith.constant 0 : index
    %c0_134 = arith.constant 0 : index
    %344 = vector.load %arg21[%c0_133, %c0_134] : memref<8x32xbf16, #tpu.memory_space<vmem>>, vector<8x32xbf16>
    %cst_135 = arith.constant dense<0.000000e+00> : vector<8x32xf32>
    %345 = tpu.matmul %343, %344, %cst_135 {dimension_numbers = #tpu.dot_dimension_numbers<[1], [0], [0], [1], [0, 0, 1, 1], [], []>} : vector<8x8xbf16>, vector<8x32xbf16>, vector<8x32xf32> -> vector<8x32xf32>
    %346 = arith.addf %342, %345 : vector<8x32xf32>
    %c0_136 = arith.constant 0 : index
    %c0_137 = arith.constant 0 : index
    %347 = vector.load %arg22[%c0_136, %c0_137] : memref<1x32xf32, #tpu.memory_space<vmem>>, vector<1x32xf32>
    %348 = vector.broadcast %347 : vector<1x32xf32> to vector<8x32xf32>
    %349 = arith.addf %346, %348 : vector<8x32xf32>
    %cst_138 = arith.constant 0.000000e+00 : f32
    %350 = vector.broadcast %cst_138 : f32 to vector<8x32xf32>
    %351 = arith.maximumf %349, %350 : vector<8x32xf32>
    %352 = arith.truncf %351 : vector<8x32xf32> to vector<8x32xbf16>
    %c0_139 = arith.constant 0 : index
    %c0_140 = arith.constant 0 : index
    %353 = vector.load %arg23[%c0_139, %c0_140] : memref<32x16xbf16, #tpu.memory_space<vmem>>, vector<32x16xbf16>
    %cst_141 = arith.constant dense<0.000000e+00> : vector<8x16xf32>
    %354 = tpu.matmul %352, %353, %cst_141 {dimension_numbers = #tpu.dot_dimension_numbers<[1], [0], [0], [1], [0, 0, 1, 1], [], []>} : vector<8x32xbf16>, vector<32x16xbf16>, vector<8x16xf32> -> vector<8x16xf32>
    %c0_142 = arith.constant 0 : index
    %c0_143 = arith.constant 0 : index
    %355 = vector.load %arg24[%c0_142, %c0_143] : memref<1x16xf32, #tpu.memory_space<vmem>>, vector<1x16xf32>
    %356 = vector.broadcast %355 : vector<1x16xf32> to vector<8x16xf32>
    %357 = arith.addf %354, %356 : vector<8x16xf32>
    %cst_144 = arith.constant 0.000000e+00 : f32
    %358 = vector.broadcast %cst_144 : f32 to vector<8x16xf32>
    %359 = arith.maximumf %357, %358 : vector<8x16xf32>
    %c0_145 = arith.constant 0 : index
    %c0_146 = arith.constant 0 : index
    %360 = vector.load %arg25[%c0_145, %c0_146] : memref<1x16xf32, #tpu.memory_space<vmem>>, vector<1x16xf32>
    %361 = vector.broadcast %360 : vector<1x16xf32> to vector<8x16xf32>
    %362 = arith.mulf %359, %361 : vector<8x16xf32>
    %cst_147 = arith.constant dense<0.000000e+00> : vector<8xf32>
    %363 = vector.multi_reduction <add>, %362, %cst_147 [1] : vector<8x16xf32> to vector<8xf32>
    %364 = vector.shape_cast %363 : vector<8xf32> to vector<8x1xf32>
    %c0_148 = arith.constant 0 : index
    %365 = memref.load %arg26[%c0_148] : memref<1xf32, #tpu.memory_space<smem>>
    %366 = vector.broadcast %365 : f32 to vector<8x1xf32>
    %367 = arith.addf %364, %366 : vector<8x1xf32>
    %368 = arith.negf %367 : vector<8x1xf32>
    %369 = math.exp %368 : vector<8x1xf32>
    %cst_149 = arith.constant 1.000000e+00 : f32
    %370 = vector.broadcast %cst_149 : f32 to vector<8x1xf32>
    %371 = arith.addf %370, %369 : vector<8x1xf32>
    %372 = arith.divf %370, %371 : vector<8x1xf32>
    %c0_150 = arith.constant 0 : index
    %c0_151 = arith.constant 0 : index
    %373 = vector.load %arg27[%c0_150, %c0_151] : memref<8x1xf32, #tpu.memory_space<vmem>>, vector<8x1xf32>
    tpu.vector_store %arg27[%c0_150, %c0_151], %372 {strides = array<i32>} : memref<8x1xf32, #tpu.memory_space<vmem>>, vector<8x1xf32>,
    return
  }
  func.func @transform_0(%arg0: i32) -> (i32, i32, i32) {
    %c0_i32 = arith.constant 0 : i32
    %c0_i32_0 = arith.constant 0 : i32
    %c0_i32_1 = arith.constant 0 : i32
    return %c0_i32, %arg0, %c0_i32_0 : i32, i32, i32
  }
  func.func @transform_1(%arg0: i32) -> (i32, i32, i32) {
    %c0_i32 = arith.constant 0 : i32
    %c0_i32_0 = arith.constant 0 : i32
    %c0_i32_1 = arith.constant 0 : i32
    return %arg0, %c0_i32, %c0_i32_0 : i32, i32, i32
  }
  func.func @transform_2(%arg0: i32) -> (i32, i32) {
    %c0_i32 = arith.constant 0 : i32
    %c0_i32_0 = arith.constant 0 : i32
    return %arg0, %c0_i32 : i32, i32
  }
  func.func @transform_3(%arg0: i32) -> (i32, i32) {
    %c0_i32 = arith.constant 0 : i32
    %c0_i32_0 = arith.constant 0 : i32
    %c0_i32_1 = arith.constant 0 : i32
    return %c0_i32, %c0_i32_0 : i32, i32
  }
  func.func @transform_4(%arg0: i32) -> (i32, i32) {
    %c0_i32 = arith.constant 0 : i32
    %c0_i32_0 = arith.constant 0 : i32
    %c0_i32_1 = arith.constant 0 : i32
    return %c0_i32, %c0_i32_0 : i32, i32
  }
  func.func @transform_5(%arg0: i32) -> (i32, i32) {
    %c0_i32 = arith.constant 0 : i32
    %c0_i32_0 = arith.constant 0 : i32
    %c0_i32_1 = arith.constant 0 : i32
    return %c0_i32, %c0_i32_0 : i32, i32
  }
  func.func @transform_6(%arg0: i32) -> (i32, i32) {
    %c0_i32 = arith.constant 0 : i32
    %c0_i32_0 = arith.constant 0 : i32
    %c0_i32_1 = arith.constant 0 : i32
    return %c0_i32, %c0_i32_0 : i32, i32
  }
  func.func @transform_7(%arg0: i32) -> (i32, i32) {
    %c0_i32 = arith.constant 0 : i32
    %c0_i32_0 = arith.constant 0 : i32
    %c0_i32_1 = arith.constant 0 : i32
    return %c0_i32, %c0_i32_0 : i32, i32
  }
  func.func @transform_8(%arg0: i32) -> (i32, i32) {
    %c0_i32 = arith.constant 0 : i32
    %c0_i32_0 = arith.constant 0 : i32
    %c0_i32_1 = arith.constant 0 : i32
    return %c0_i32, %c0_i32_0 : i32, i32
  }
  func.func @transform_9(%arg0: i32) -> (i32, i32) {
    %c0_i32 = arith.constant 0 : i32
    %c0_i32_0 = arith.constant 0 : i32
    %c0_i32_1 = arith.constant 0 : i32
    return %c0_i32, %c0_i32_0 : i32, i32
  }
  func.func @transform_10(%arg0: i32) -> (i32, i32) {
    %c0_i32 = arith.constant 0 : i32
    %c0_i32_0 = arith.constant 0 : i32
    %c0_i32_1 = arith.constant 0 : i32
    return %c0_i32, %c0_i32_0 : i32, i32
  }
  func.func @transform_11(%arg0: i32) -> (i32, i32) {
    %c0_i32 = arith.constant 0 : i32
    %c0_i32_0 = arith.constant 0 : i32
    %c0_i32_1 = arith.constant 0 : i32
    return %c0_i32, %c0_i32_0 : i32, i32
  }
  func.func @transform_12(%arg0: i32) -> (i32, i32) {
    %c0_i32 = arith.constant 0 : i32
    %c0_i32_0 = arith.constant 0 : i32
    %c0_i32_1 = arith.constant 0 : i32
    return %c0_i32, %c0_i32_0 : i32, i32
  }
  func.func @transform_13(%arg0: i32) -> (i32, i32) {
    %c0_i32 = arith.constant 0 : i32
    %c0_i32_0 = arith.constant 0 : i32
    %c0_i32_1 = arith.constant 0 : i32
    return %c0_i32, %c0_i32_0 : i32, i32
  }
  func.func @transform_14(%arg0: i32) -> (i32, i32) {
    %c0_i32 = arith.constant 0 : i32
    %c0_i32_0 = arith.constant 0 : i32
    %c0_i32_1 = arith.constant 0 : i32
    return %c0_i32, %c0_i32_0 : i32, i32
  }
  func.func @transform_15(%arg0: i32) -> (i32, i32) {
    %c0_i32 = arith.constant 0 : i32
    %c0_i32_0 = arith.constant 0 : i32
    %c0_i32_1 = arith.constant 0 : i32
    return %c0_i32, %c0_i32_0 : i32, i32
  }
  func.func @transform_16(%arg0: i32) -> i32 {
    %c0_i32 = arith.constant 0 : i32
    %c0_i32_0 = arith.constant 0 : i32
    return %c0_i32 : i32
  }
  func.func @transform_17(%arg0: i32) -> i32 {
    %c0_i32 = arith.constant 0 : i32
    %c0_i32_0 = arith.constant 0 : i32
    return %c0_i32 : i32
  }
  func.func @transform_18(%arg0: i32) -> (i32, i32) {
    %c0_i32 = arith.constant 0 : i32
    %c0_i32_0 = arith.constant 0 : i32
    %c0_i32_1 = arith.constant 0 : i32
    return %c0_i32, %c0_i32_0 : i32, i32
  }
  func.func @transform_19(%arg0: i32) -> (i32, i32) {
    %c0_i32 = arith.constant 0 : i32
    %c0_i32_0 = arith.constant 0 : i32
    %c0_i32_1 = arith.constant 0 : i32
    return %c0_i32, %c0_i32_0 : i32, i32
  }
  func.func @transform_20(%arg0: i32) -> (i32, i32) {
    %c0_i32 = arith.constant 0 : i32
    %c0_i32_0 = arith.constant 0 : i32
    %c0_i32_1 = arith.constant 0 : i32
    return %c0_i32, %c0_i32_0 : i32, i32
  }
  func.func @transform_21(%arg0: i32) -> (i32, i32) {
    %c0_i32 = arith.constant 0 : i32
    %c0_i32_0 = arith.constant 0 : i32
    %c0_i32_1 = arith.constant 0 : i32
    return %c0_i32, %c0_i32_0 : i32, i32
  }
  func.func @transform_22(%arg0: i32) -> (i32, i32) {
    %c0_i32 = arith.constant 0 : i32
    %c0_i32_0 = arith.constant 0 : i32
    %c0_i32_1 = arith.constant 0 : i32
    return %c0_i32, %c0_i32_0 : i32, i32
  }
  func.func @transform_23(%arg0: i32) -> (i32, i32) {
    %c0_i32 = arith.constant 0 : i32
    %c0_i32_0 = arith.constant 0 : i32
    %c0_i32_1 = arith.constant 0 : i32
    return %c0_i32, %c0_i32_0 : i32, i32
  }
  func.func @transform_24(%arg0: i32) -> (i32, i32) {
    %c0_i32 = arith.constant 0 : i32
    %c0_i32_0 = arith.constant 0 : i32
    %c0_i32_1 = arith.constant 0 : i32
    return %c0_i32, %c0_i32_0 : i32, i32
  }
  func.func @transform_25(%arg0: i32) -> i32 {
    %c0_i32 = arith.constant 0 : i32
    %c0_i32_0 = arith.constant 0 : i32
    return %c0_i32 : i32
  }
  func.func @transform_26(%arg0: i32) -> (i32, i32) {
    %c0_i32 = arith.constant 0 : i32
    %c0_i32_0 = arith.constant 0 : i32
    return %arg0, %c0_i32 : i32, i32
  }
}

</mosaic_0001>

<llo_original>
// kernel: main_model_forward.1
$region0: #{main_model_forward.1}
  #allocation0 [shape = 'u32[]', space=smem, size = 0x4, offset = 0x4, fixed_abs, tag = 'smem constant byte address 0x4 - core index']
  #allocation1 [shape = 'u32[144,128]{1,0:T(1,128)}', space=vmem, size = 0x12000, scoped, tag = 'internal scratch']
  #allocation2 [shape = 'f32[8,8,128]{2,1,0:T(8,128)}', space=vmem, size = 0x8000, scoped, tag = 'scratch operand']
  #allocation3 [shape = 'f32[8,8,32]{2,1,0:T(8,128)}', space=vmem, size = 0x8000, scoped, tag = 'scratch operand']
  #allocation4 [shape = 'f32[1]{0:T(128)S(6)}', space=smem, size = 0x200, scoped, tag = 'scoped memory for main_model_forward.1']
  #allocation5 [shape = 'f32[1]{0:T(128)S(6)}', space=smem, size = 0x200, scoped, tag = 'scoped memory for main_model_forward.1']
  %s0 = inlined_call_operand.vmem [shape: bf16[8,16,16], index: 0, kind: input, shape index: {}]
  %s1 = inlined_call_operand.vmem [shape: bf16[16,18,16], index: 1, kind: input, shape index: {}]
  %s2 = inlined_call_operand.vmem [shape: bf16[16,8], index: 2, kind: input, shape index: {}]
  %s3 = inlined_call_operand.vmem [shape: bf16[16,128], index: 3, kind: input, shape index: {}]
  %s4 = inlined_call_operand.vmem [shape: bf16[32,128], index: 4, kind: input, shape index: {}]
  %s5 = inlined_call_operand.vmem [shape: f32[1,128], index: 5, kind: input, shape index: {}]
  %s6 = inlined_call_operand.vmem [shape: bf16[16,24], index: 6, kind: input, shape index: {}]
  %s7 = inlined_call_operand.vmem [shape: f32[1,8], index: 7, kind: input, shape index: {}]
  %s8 = inlined_call_operand.vmem [shape: bf16[8,8], index: 8, kind: input, shape index: {}]
  %s9 = inlined_call_operand.vmem [shape: f32[1,8], index: 9, kind: input, shape index: {}]
  %s10 = inlined_call_operand.vmem [shape: bf16[8,8], index: 10, kind: input, shape index: {}]
  %s11 = inlined_call_operand.vmem [shape: f32[1,8], index: 11, kind: input, shape index: {}]
  %s12 = inlined_call_operand.vmem [shape: bf16[8,8], index: 12, kind: input, shape index: {}]
  %s13 = inlined_call_operand.vmem [shape: f32[1,8], index: 13, kind: input, shape index: {}]
  %s14 = inlined_call_operand.vmem [shape: bf16[8,8], index: 14, kind: input, shape index: {}]
  %s15 = inlined_call_operand.vmem [shape: f32[1,8], index: 15, kind: input, shape index: {}]
  %s16 = inlined_call_operand.vmem [shape: f32[6], index: 16, kind: input, shape index: {}]
  %s17 = inlined_call_operand.<no memory space> [shape: f32[1], index: 17, kind: input, shape index: {}]
  %s18 = inlined_call_operand.vmem [shape: bf16[32,32], index: 18, kind: input, shape index: {}]
  %s19 = inlined_call_operand.vmem [shape: bf16[128,32], index: 19, kind: input, shape index: {}]
  %s20 = inlined_call_operand.vmem [shape: bf16[8,32], index: 20, kind: input, shape index: {}]
  %s21 = inlined_call_operand.vmem [shape: f32[1,32], index: 21, kind: input, shape index: {}]
  %s22 = inlined_call_operand.vmem [shape: bf16[32,16], index: 22, kind: input, shape index: {}]
  %s23 = inlined_call_operand.vmem [shape: f32[1,16], index: 23, kind: input, shape index: {}]
  %s24 = inlined_call_operand.vmem [shape: f32[1,16], index: 24, kind: input, shape index: {}]
  %s25 = inlined_call_operand.<no memory space> [shape: f32[1], index: 25, kind: input, shape index: {}]
  %s26 = inlined_call_operand.vmem [shape: f32[16,1], index: 26, kind: output, shape index: {}]
  %s27 = sld [smem:[#allocation0]]
  $region182: #{main_model_forward.1} parent=0
    _
  %s29 = ssub.s32 1, %s27
  %s30 = scalar_select 0, %s29, %s27
  %31 = sst [smem:[#allocation4]] %s17
  %32 = sst [smem:[#allocation5]] %s25
  $region1: #{main_model_forward.1} parent=0
    #allocation6 [shape = 'u8[32768]{0}', space=vmem, size = 0x8000, scoped, tag = 'input window, operand 0']
    #allocation7 [shape = 'u8[512]{0}', space=smem, size = 0x200, scoped, tag = 'input window, operand 16, single buffered']
    #allocation8 [shape = 's32[2]{0}', space=sflag, size = 0x8, scoped, tag = 'scoped memory for main_model_forward.1']
    %33 = vsyncpa [#allocation8], 0
    loop: start=0, step=1, limit=4
    $region2: #{main_model_forward.1} parent=1 // loop_pre_header
      _
    $region3: #{main_model_forward.1} parent=1 // loop_header
      %s35 = sphi 0, %s39
      %p36 = scmp.ge.s32.totalorder %s35, 4
      %s45 = sphi 0, %s47
      %s48 = sphi 0, %s45
      %s49 = sphi 0, %s48
      %s65 = sphi 0, %s49
      %s71 = sphi 0, %s73
      %s74 = sphi 0, %s71
      %s75 = sphi 0, %s74
      %s91 = sphi 0, %s75
      %s97 = sphi 0, %s99
      %s100 = sphi 0, %s97
      %s101 = sphi 0, %s100
      %s117 = sphi 0, %s101
      %s121 = sphi 0, %s121
      %s123 = sphi 0, %s121
      %s124 = sphi 0, %s123
      %s138 = sphi 0, %s124
      %s142 = sphi 0, %s142
      %s144 = sphi 0, %s142
      %s145 = sphi 0, %s144
      %s159 = sphi 0, %s145
      %s163 = sphi 0, %s163
      %s165 = sphi 0, %s163
      %s166 = sphi 0, %s165
      %s180 = sphi 0, %s166
      %s184 = sphi 0, %s184
      %s186 = sphi 0, %s184
      %s187 = sphi 0, %s186
      %s201 = sphi 0, %s187
      %s205 = sphi 0, %s205
      %s207 = sphi 0, %s205
      %s208 = sphi 0, %s207
      %s222 = sphi 0, %s208
      %s226 = sphi 0, %s226
      %s228 = sphi 0, %s226
      %s229 = sphi 0, %s228
      %s243 = sphi 0, %s229
      %s247 = sphi 0, %s247
      %s249 = sphi 0, %s247
      %s250 = sphi 0, %s249
      %s264 = sphi 0, %s250
      %s268 = sphi 0, %s268
      %s270 = sphi 0, %s268
      %s271 = sphi 0, %s270
      %s285 = sphi 0, %s271
      %s289 = sphi 0, %s289
      %s291 = sphi 0, %s289
      %s292 = sphi 0, %s291
      %s306 = sphi 0, %s292
      %s310 = sphi 0, %s310
      %s312 = sphi 0, %s310
      %s313 = sphi 0, %s312
      %s327 = sphi 0, %s313
      %s331 = sphi 0, %s331
      %s333 = sphi 0, %s331
      %s334 = sphi 0, %s333
      %s348 = sphi 0, %s334
      %s352 = sphi 0, %s352
      %s354 = sphi 0, %s352
      %s355 = sphi 0, %s354
      %s369 = sphi 0, %s355
      %s373 = sphi 0, %s373
      %s375 = sphi 0, %s373
      %s376 = sphi 0, %s375
      %s390 = sphi 0, %s376
      %s394 = sphi 0, %s394
      %s396 = sphi 0, %s394
      %s397 = sphi 0, %s396
      %s411 = sphi 0, %s397
      %s415 = sphi 0, %s415
      %s417 = sphi 0, %s415
      %s418 = sphi 0, %s417
      %s432 = sphi 0, %s418
      %s436 = sphi 0, %s436
      %s438 = sphi 0, %s436
      %s439 = sphi 0, %s438
      %s453 = sphi 0, %s439
      %s457 = sphi 0, %s457
      %s459 = sphi 0, %s457
      %s460 = sphi 0, %s459
      %s474 = sphi 0, %s460
      %s478 = sphi 0, %s478
      %s480 = sphi 0, %s478
      %s481 = sphi 0, %s480
      %s495 = sphi 0, %s481
      %s499 = sphi 0, %s499
      %s501 = sphi 0, %s499
      %s502 = sphi 0, %s501
      %s516 = sphi 0, %s502
      %s520 = sphi 0, %s520
      %s522 = sphi 0, %s520
      %s523 = sphi 0, %s522
      %s537 = sphi 0, %s523
      %s541 = sphi 0, %s541
      %s543 = sphi 0, %s541
      %s544 = sphi 0, %s543
      %s558 = sphi 0, %s544
      %s562 = sphi 0, %s562
      %s564 = sphi 0, %s562
      %s565 = sphi 0, %s564
      %s579 = sphi 0, %s565
      %s583 = sphi 0, %s583
      %s585 = sphi 0, %s583
      %s586 = sphi 0, %s585
      %s600 = sphi 0, %s586
      %s606 = sphi 0, %s608
      %s609 = sphi 0, %s606
      %s610 = sphi 0, %s609
      %s626 = sphi 0, %s610
    $region4: #{main_model_forward.1} parent=1 // loop_header_branch
      %38 = sbr.rel (%p36) target = $region8
    $region5: #{main_model_forward.1} parent=1 // loop_body
      %s40 = ssub.s32 %s35, 1
      %s41 = ssub.s32 %s35, 2
      %s42 = sadd.s32 %s35, 1
      %s43 = ssub.s32 %s35, %s42
      %p44 = scmp.eq.s32.totalorder %s43, 0
      %s46 = sadd.s32 %s45, 1
      %s47 = scalar_select %p44, %s45, %s46
      %p50 = pneg %p44
      %p51 = scmp.eq.s32.totalorder %s35, 1
      %p52 = por %p50, %p51
      %p53 = scmp.ne.s32.totalorder %s45, %s48
      %p54 = scmp.eq.s32.totalorder %s35, 0
      %p55 = por %p53, %p54
      %p56 = scmp.ne.s32.totalorder %s45, %s48
      %p57 = scmp.eq.s32.totalorder %s40, 1
      %p58 = por %p56, %p57
      %p59 = scmp.ne.s32.totalorder %s48, %s49
      %p60 = scmp.eq.s32.totalorder %s40, 0
      %p61 = por %p59, %p60
      %p62 = scmp.ne.s32.totalorder %s48, %s49
      %p63 = scmp.eq.s32.totalorder %s41, 1
      %p64 = por %p62, %p63
      %p66 = scmp.ne.s32.totalorder %s49, %s65
      %p67 = scmp.eq.s32.totalorder %s41, 0
      %p68 = por %p66, %p67
      %s69 = ssub.s32 %s35, %s42
      %p70 = scmp.eq.s32.totalorder %s69, 0
      %s72 = sadd.s32 %s71, 1
      %s73 = scalar_select %p70, %s71, %s72
      %p76 = pneg %p70
      %p77 = scmp.eq.s32.totalorder %s35, 1
      %p78 = por %p76, %p77
      %p79 = scmp.ne.s32.totalorder %s71, %s74
      %p80 = scmp.eq.s32.totalorder %s35, 0
      %p81 = por %p79, %p80
      %p82 = scmp.ne.s32.totalorder %s71, %s74
      %p83 = scmp.eq.s32.totalorder %s40, 1
      %p84 = por %p82, %p83
      %p85 = scmp.ne.s32.totalorder %s74, %s75
      %p86 = scmp.eq.s32.totalorder %s40, 0
      %p87 = por %p85, %p86
      %p88 = scmp.ne.s32.totalorder %s74, %s75
      %p89 = scmp.eq.s32.totalorder %s41, 1
      %p90 = por %p88, %p89
      %p92 = scmp.ne.s32.totalorder %s75, %s91
      %p93 = scmp.eq.s32.totalorder %s41, 0
      %p94 = por %p92, %p93
      %s95 = ssub.s32 %s35, %s42
      %p96 = scmp.eq.s32.totalorder %s95, 0
      %s98 = sadd.s32 %s97, 1
      %s99 = scalar_select %p96, %s97, %s98
      %p102 = pneg %p96
      %p103 = scmp.eq.s32.totalorder %s35, 1
      %p104 = por %p102, %p103
      %p105 = scmp.ne.s32.totalorder %s97, %s100
      %p106 = scmp.eq.s32.totalorder %s35, 0
      %p107 = por %p105, %p106
      %p108 = scmp.ne.s32.totalorder %s97, %s100
      %p109 = scmp.eq.s32.totalorder %s40, 1
      %p110 = por %p108, %p109
      %p111 = scmp.ne.s32.totalorder %s100, %s101
      %p112 = scmp.eq.s32.totalorder %s40, 0
      %p113 = por %p111, %p112
      %p114 = scmp.ne.s32.totalorder %s100, %s101
      %p115 = scmp.eq.s32.totalorder %s41, 1
      %p116 = por %p114, %p115
      %p118 = scmp.ne.s32.totalorder %s101, %s117
      %p119 = scmp.eq.s32.totalorder %s41, 0
      %p120 = por %p118, %p119
      %s122 = sadd.s32 %s121, 1
      %p125 = scmp.eq.s32.totalorder %s35, 1
      %p126 = scmp.ne.s32.totalorder %s121, %s123
      %p127 = scmp.eq.s32.totalorder %s35, 0
      %p128 = por %p126, %p127
      %p129 = scmp.ne.s32.totalorder %s121, %s123
      %p130 = scmp.eq.s32.totalorder %s40, 1
      %p131 = por %p129, %p130
      %p132 = scmp.ne.s32.totalorder %s123, %s124
      %p133 = scmp.eq.s32.totalorder %s40, 0
      %p134 = por %p132, %p133
      %p135 = scmp.ne.s32.totalorder %s123, %s124
      %p136 = scmp.eq.s32.totalorder %s41, 1
      %p137 = por %p135, %p136
      %p139 = scmp.ne.s32.totalorder %s124, %s138
      %p140 = scmp.eq.s32.totalorder %s41, 0
      %p141 = por %p139, %p140
      %s143 = sadd.s32 %s142, 1
      %p146 = scmp.eq.s32.totalorder %s35, 1
      %p147 = scmp.ne.s32.totalorder %s142, %s144
      %p148 = scmp.eq.s32.totalorder %s35, 0
      %p149 = por %p147, %p148
      %p150 = scmp.ne.s32.totalorder %s142, %s144
      %p151 = scmp.eq.s32.totalorder %s40, 1
      %p152 = por %p150, %p151
      %p153 = scmp.ne.s32.totalorder %s144, %s145
      %p154 = scmp.eq.s32.totalorder %s40, 0
      %p155 = por %p153, %p154
      %p156 = scmp.ne.s32.totalorder %s144, %s145
      %p157 = scmp.eq.s32.totalorder %s41, 1
      %p158 = por %p156, %p157
      %p160 = scmp.ne.s32.totalorder %s145, %s159
      %p161 = scmp.eq.s32.totalorder %s41, 0
      %p162 = por %p160, %p161
      %s164 = sadd.s32 %s163, 1
      %p167 = scmp.eq.s32.totalorder %s35, 1
      %p168 = scmp.ne.s32.totalorder %s163, %s165
      %p169 = scmp.eq.s32.totalorder %s35, 0
      %p170 = por %p168, %p169
      %p171 = scmp.ne.s32.totalorder %s163, %s165
      %p172 = scmp.eq.s32.totalorder %s40, 1
      %p173 = por %p171, %p172
      %p174 = scmp.ne.s32.totalorder %s165, %s166
      %p175 = scmp.eq.s32.totalorder %s40, 0
      %p176 = por %p174, %p175
      %p177 = scmp.ne.s32.totalorder %s165, %s166
      %p178 = scmp.eq.s32.totalorder %s41, 1
      %p179 = por %p177, %p178
      %p181 = scmp.ne.s32.totalorder %s166, %s180
      %p182 = scmp.eq.s32.totalorder %s41, 0
      %p183 = por %p181, %p182
      %s185 = sadd.s32 %s184, 1
      %p188 = scmp.eq.s32.totalorder %s35, 1
      %p189 = scmp.ne.s32.totalorder %s184, %s186
      %p190 = scmp.eq.s32.totalorder %s35, 0
      %p191 = por %p189, %p190
      %p192 = scmp.ne.s32.totalorder %s184, %s186
      %p193 = scmp.eq.s32.totalorder %s40, 1
      %p194 = por %p192, %p193
      %p195 = scmp.ne.s32.totalorder %s186, %s187
      %p196 = scmp.eq.s32.totalorder %s40, 0
      %p197 = por %p195, %p196
      %p198 = scmp.ne.s32.totalorder %s186, %s187
      %p199 = scmp.eq.s32.totalorder %s41, 1
      %p200 = por %p198, %p199
      %p202 = scmp.ne.s32.totalorder %s187, %s201
      %p203 = scmp.eq.s32.totalorder %s41, 0
      %p204 = por %p202, %p203
      %s206 = sadd.s32 %s205, 1
      %p209 = scmp.eq.s32.totalorder %s35, 1
      %p210 = scmp.ne.s32.totalorder %s205, %s207
      %p211 = scmp.eq.s32.totalorder %s35, 0
      %p212 = por %p210, %p211
      %p213 = scmp.ne.s32.totalorder %s205, %s207
      %p214 = scmp.eq.s32.totalorder %s40, 1
      %p215 = por %p213, %p214
      %p216 = scmp.ne.s32.totalorder %s207, %s208
      %p217 = scmp.eq.s32.totalorder %s40, 0
      %p218 = por %p216, %p217
      %p219 = scmp.ne.s32.totalorder %s207, %s208
      %p220 = scmp.eq.s32.totalorder %s41, 1
      %p221 = por %p219, %p220
      %p223 = scmp.ne.s32.totalorder %s208, %s222
      %p224 = scmp.eq.s32.totalorder %s41, 0
      %p225 = por %p223, %p224
      %s227 = sadd.s32 %s226, 1
      %p230 = scmp.eq.s32.totalorder %s35, 1
      %p231 = scmp.ne.s32.totalorder %s226, %s228
      %p232 = scmp.eq.s32.totalorder %s35, 0
      %p233 = por %p231, %p232
      %p234 = scmp.ne.s32.totalorder %s226, %s228
      %p235 = scmp.eq.s32.totalorder %s40, 1
      %p236 = por %p234, %p235
      %p237 = scmp.ne.s32.totalorder %s228, %s229
      %p238 = scmp.eq.s32.totalorder %s40, 0
      %p239 = por %p237, %p238
      %p240 = scmp.ne.s32.totalorder %s228, %s229
      %p241 = scmp.eq.s32.totalorder %s41, 1
      %p242 = por %p240, %p241
      %p244 = scmp.ne.s32.totalorder %s229, %s243
      %p245 = scmp.eq.s32.totalorder %s41, 0
      %p246 = por %p244, %p245
      %s248 = sadd.s32 %s247, 1
      %p251 = scmp.eq.s32.totalorder %s35, 1
      %p252 = scmp.ne.s32.totalorder %s247, %s249
      %p253 = scmp.eq.s32.totalorder %s35, 0
      %p254 = por %p252, %p253
      %p255 = scmp.ne.s32.totalorder %s247, %s249
      %p256 = scmp.eq.s32.totalorder %s40, 1
      %p257 = por %p255, %p256
      %p258 = scmp.ne.s32.totalorder %s249, %s250
      %p259 = scmp.eq.s32.totalorder %s40, 0
      %p260 = por %p258, %p259
      %p261 = scmp.ne.s32.totalorder %s249, %s250
      %p262 = scmp.eq.s32.totalorder %s41, 1
      %p263 = por %p261, %p262
      %p265 = scmp.ne.s32.totalorder %s250, %s264
      %p266 = scmp.eq.s32.totalorder %s41, 0
      %p267 = por %p265, %p266
      %s269 = sadd.s32 %s268, 1
      %p272 = scmp.eq.s32.totalorder %s35, 1
      %p273 = scmp.ne.s32.totalorder %s268, %s270
      %p274 = scmp.eq.s32.totalorder %s35, 0
      %p275 = por %p273, %p274
      %p276 = scmp.ne.s32.totalorder %s268, %s270
      %p277 = scmp.eq.s32.totalorder %s40, 1
      %p278 = por %p276, %p277
      %p279 = scmp.ne.s32.totalorder %s270, %s271
      %p280 = scmp.eq.s32.totalorder %s40, 0
      %p281 = por %p279, %p280
      %p282 = scmp.ne.s32.totalorder %s270, %s271
      %p283 = scmp.eq.s32.totalorder %s41, 1
      %p284 = por %p282, %p283
      %p286 = scmp.ne.s32.totalorder %s271, %s285
      %p287 = scmp.eq.s32.totalorder %s41, 0
      %p288 = por %p286, %p287
      %s290 = sadd.s32 %s289, 1
      %p293 = scmp.eq.s32.totalorder %s35, 1
      %p294 = scmp.ne.s32.totalorder %s289, %s291
      %p295 = scmp.eq.s32.totalorder %s35, 0
      %p296 = por %p294, %p295
      %p297 = scmp.ne.s32.totalorder %s289, %s291
      %p298 = scmp.eq.s32.totalorder %s40, 1
      %p299 = por %p297, %p298
      %p300 = scmp.ne.s32.totalorder %s291, %s292
      %p301 = scmp.eq.s32.totalorder %s40, 0
      %p302 = por %p300, %p301
      %p303 = scmp.ne.s32.totalorder %s291, %s292
      %p304 = scmp.eq.s32.totalorder %s41, 1
      %p305 = por %p303, %p304
      %p307 = scmp.ne.s32.totalorder %s292, %s306
      %p308 = scmp.eq.s32.totalorder %s41, 0
      %p309 = por %p307, %p308
      %s311 = sadd.s32 %s310, 1
      %p314 = scmp.eq.s32.totalorder %s35, 1
      %p315 = scmp.ne.s32.totalorder %s310, %s312
      %p316 = scmp.eq.s32.totalorder %s35, 0
      %p317 = por %p315, %p316
      %p318 = scmp.ne.s32.totalorder %s310, %s312
      %p319 = scmp.eq.s32.totalorder %s40, 1
      %p320 = por %p318, %p319
      %p321 = scmp.ne.s32.totalorder %s312, %s313
      %p322 = scmp.eq.s32.totalorder %s40, 0
      %p323 = por %p321, %p322
      %p324 = scmp.ne.s32.totalorder %s312, %s313
      %p325 = scmp.eq.s32.totalorder %s41, 1
      %p326 = por %p324, %p325
      %p328 = scmp.ne.s32.totalorder %s313, %s327
      %p329 = scmp.eq.s32.totalorder %s41, 0
      %p330 = por %p328, %p329
      %s332 = sadd.s32 %s331, 1
      %p335 = scmp.eq.s32.totalorder %s35, 1
      %p336 = scmp.ne.s32.totalorder %s331, %s333
      %p337 = scmp.eq.s32.totalorder %s35, 0
      %p338 = por %p336, %p337
      %p339 = scmp.ne.s32.totalorder %s331, %s333
      %p340 = scmp.eq.s32.totalorder %s40, 1
      %p341 = por %p339, %p340
      %p342 = scmp.ne.s32.totalorder %s333, %s334
      %p343 = scmp.eq.s32.totalorder %s40, 0
      %p344 = por %p342, %p343
      %p345 = scmp.ne.s32.totalorder %s333, %s334
      %p346 = scmp.eq.s32.totalorder %s41, 1
      %p347 = por %p345, %p346
      %p349 = scmp.ne.s32.totalorder %s334, %s348
      %p350 = scmp.eq.s32.totalorder %s41, 0
      %p351 = por %p349, %p350
      %s353 = sadd.s32 %s352, 1
      %p356 = scmp.eq.s32.totalorder %s35, 1
      %p357 = scmp.ne.s32.totalorder %s352, %s354
      %p358 = scmp.eq.s32.totalorder %s35, 0
      %p359 = por %p357, %p358
      %p360 = scmp.ne.s32.totalorder %s352, %s354
      %p361 = scmp.eq.s32.totalorder %s40, 1
      %p362 = por %p360, %p361
      %p363 = scmp.ne.s32.totalorder %s354, %s355
      %p364 = scmp.eq.s32.totalorder %s40, 0
      %p365 = por %p363, %p364
      %p366 = scmp.ne.s32.totalorder %s354, %s355
      %p367 = scmp.eq.s32.totalorder %s41, 1
      %p368 = por %p366, %p367
      %p370 = scmp.ne.s32.totalorder %s355, %s369
      %p371 = scmp.eq.s32.totalorder %s41, 0
      %p372 = por %p370, %p371
      %s374 = sadd.s32 %s373, 1
      %p377 = scmp.eq.s32.totalorder %s35, 1
      %p378 = scmp.ne.s32.totalorder %s373, %s375
      %p379 = scmp.eq.s32.totalorder %s35, 0
      %p380 = por %p378, %p379
      %p381 = scmp.ne.s32.totalorder %s373, %s375
      %p382 = scmp.eq.s32.totalorder %s40, 1
      %p383 = por %p381, %p382
      %p384 = scmp.ne.s32.totalorder %s375, %s376
      %p385 = scmp.eq.s32.totalorder %s40, 0
      %p386 = por %p384, %p385
      %p387 = scmp.ne.s32.totalorder %s375, %s376
      %p388 = scmp.eq.s32.totalorder %s41, 1
      %p389 = por %p387, %p388
      %p391 = scmp.ne.s32.totalorder %s376, %s390
      %p392 = scmp.eq.s32.totalorder %s41, 0
      %p393 = por %p391, %p392
      %s395 = sadd.s32 %s394, 1
      %p398 = scmp.eq.s32.totalorder %s35, 1
      %p399 = scmp.ne.s32.totalorder %s394, %s396
      %p400 = scmp.eq.s32.totalorder %s35, 0
      %p401 = por %p399, %p400
      %p402 = scmp.ne.s32.totalorder %s394, %s396
      %p403 = scmp.eq.s32.totalorder %s40, 1
      %p404 = por %p402, %p403
      %p405 = scmp.ne.s32.totalorder %s396, %s397
      %p406 = scmp.eq.s32.totalorder %s40, 0
      %p407 = por %p405, %p406
      %p408 = scmp.ne.s32.totalorder %s396, %s397
      %p409 = scmp.eq.s32.totalorder %s41, 1
      %p410 = por %p408, %p409
      %p412 = scmp.ne.s32.totalorder %s397, %s411
      %p413 = scmp.eq.s32.totalorder %s41, 0
      %p414 = por %p412, %p413
      %s416 = sadd.s32 %s415, 1
      %p419 = scmp.eq.s32.totalorder %s35, 1
      %p420 = scmp.ne.s32.totalorder %s415, %s417
      %p421 = scmp.eq.s32.totalorder %s35, 0
      %p422 = por %p420, %p421
      %p423 = scmp.ne.s32.totalorder %s415, %s417
      %p424 = scmp.eq.s32.totalorder %s40, 1
      %p425 = por %p423, %p424
      %p426 = scmp.ne.s32.totalorder %s417, %s418
      %p427 = scmp.eq.s32.totalorder %s40, 0
      %p428 = por %p426, %p427
      %p429 = scmp.ne.s32.totalorder %s417, %s418
      %p430 = scmp.eq.s32.totalorder %s41, 1
      %p431 = por %p429, %p430
      %p433 = scmp.ne.s32.totalorder %s418, %s432
      %p434 = scmp.eq.s32.totalorder %s41, 0
      %p435 = por %p433, %p434
      %s437 = sadd.s32 %s436, 1
      %p440 = scmp.eq.s32.totalorder %s35, 1
      %p441 = scmp.ne.s32.totalorder %s436, %s438
      %p442 = scmp.eq.s32.totalorder %s35, 0
      %p443 = por %p441, %p442
      %p444 = scmp.ne.s32.totalorder %s436, %s438
      %p445 = scmp.eq.s32.totalorder %s40, 1
      %p446 = por %p444, %p445
      %p447 = scmp.ne.s32.totalorder %s438, %s439
      %p448 = scmp.eq.s32.totalorder %s40, 0
      %p449 = por %p447, %p448
      %p450 = scmp.ne.s32.totalorder %s438, %s439
      %p451 = scmp.eq.s32.totalorder %s41, 1
      %p452 = por %p450, %p451
      %p454 = scmp.ne.s32.totalorder %s439, %s453
      %p455 = scmp.eq.s32.totalorder %s41, 0
      %p456 = por %p454, %p455
      %s458 = sadd.s32 %s457, 1
      %p461 = scmp.eq.s32.totalorder %s35, 1
      %p462 = scmp.ne.s32.totalorder %s457, %s459
      %p463 = scmp.eq.s32.totalorder %s35, 0
      %p464 = por %p462, %p463
      %p465 = scmp.ne.s32.totalorder %s457, %s459
      %p466 = scmp.eq.s32.totalorder %s40, 1
      %p467 = por %p465, %p466
      %p468 = scmp.ne.s32.totalorder %s459, %s460
      %p469 = scmp.eq.s32.totalorder %s40, 0
      %p470 = por %p468, %p469
      %p471 = scmp.ne.s32.totalorder %s459, %s460
      %p472 = scmp.eq.s32.totalorder %s41, 1
      %p473 = por %p471, %p472
      %p475 = scmp.ne.s32.totalorder %s460, %s474
      %p476 = scmp.eq.s32.totalorder %s41, 0
      %p477 = por %p475, %p476
      %s479 = sadd.s32 %s478, 1
      %p482 = scmp.eq.s32.totalorder %s35, 1
      %p483 = scmp.ne.s32.totalorder %s478, %s480
      %p484 = scmp.eq.s32.totalorder %s35, 0
      %p485 = por %p483, %p484
      %p486 = scmp.ne.s32.totalorder %s478, %s480
      %p487 = scmp.eq.s32.totalorder %s40, 1
      %p488 = por %p486, %p487
      %p489 = scmp.ne.s32.totalorder %s480, %s481
      %p490 = scmp.eq.s32.totalorder %s40, 0
      %p491 = por %p489, %p490
      %p492 = scmp.ne.s32.totalorder %s480, %s481
      %p493 = scmp.eq.s32.totalorder %s41, 1
      %p494 = por %p492, %p493
      %p496 = scmp.ne.s32.totalorder %s481, %s495
      %p497 = scmp.eq.s32.totalorder %s41, 0
      %p498 = por %p496, %p497
      %s500 = sadd.s32 %s499, 1
      %p503 = scmp.eq.s32.totalorder %s35, 1
      %p504 = scmp.ne.s32.totalorder %s499, %s501
      %p505 = scmp.eq.s32.totalorder %s35, 0
      %p506 = por %p504, %p505
      %p507 = scmp.ne.s32.totalorder %s499, %s501
      %p508 = scmp.eq.s32.totalorder %s40, 1
      %p509 = por %p507, %p508
      %p510 = scmp.ne.s32.totalorder %s501, %s502
      %p511 = scmp.eq.s32.totalorder %s40, 0
      %p512 = por %p510, %p511
      %p513 = scmp.ne.s32.totalorder %s501, %s502
      %p514 = scmp.eq.s32.totalorder %s41, 1
      %p515 = por %p513, %p514
      %p517 = scmp.ne.s32.totalorder %s502, %s516
      %p518 = scmp.eq.s32.totalorder %s41, 0
      %p519 = por %p517, %p518
      %s521 = sadd.s32 %s520, 1
      %p524 = scmp.eq.s32.totalorder %s35, 1
      %p525 = scmp.ne.s32.totalorder %s520, %s522
      %p526 = scmp.eq.s32.totalorder %s35, 0
      %p527 = por %p525, %p526
      %p528 = scmp.ne.s32.totalorder %s520, %s522
      %p529 = scmp.eq.s32.totalorder %s40, 1
      %p530 = por %p528, %p529
      %p531 = scmp.ne.s32.totalorder %s522, %s523
      %p532 = scmp.eq.s32.totalorder %s40, 0
      %p533 = por %p531, %p532
      %p534 = scmp.ne.s32.totalorder %s522, %s523
      %p535 = scmp.eq.s32.totalorder %s41, 1
      %p536 = por %p534, %p535
      %p538 = scmp.ne.s32.totalorder %s523, %s537
      %p539 = scmp.eq.s32.totalorder %s41, 0
      %p540 = por %p538, %p539
      %s542 = sadd.s32 %s541, 1
      %p545 = scmp.eq.s32.totalorder %s35, 1
      %p546 = scmp.ne.s32.totalorder %s541, %s543
      %p547 = scmp.eq.s32.totalorder %s35, 0
      %p548 = por %p546, %p547
      %p549 = scmp.ne.s32.totalorder %s541, %s543
      %p550 = scmp.eq.s32.totalorder %s40, 1
      %p551 = por %p549, %p550
      %p552 = scmp.ne.s32.totalorder %s543, %s544
      %p553 = scmp.eq.s32.totalorder %s40, 0
      %p554 = por %p552, %p553
      %p555 = scmp.ne.s32.totalorder %s543, %s544
      %p556 = scmp.eq.s32.totalorder %s41, 1
      %p557 = por %p555, %p556
      %p559 = scmp.ne.s32.totalorder %s544, %s558
      %p560 = scmp.eq.s32.totalorder %s41, 0
      %p561 = por %p559, %p560
      %s563 = sadd.s32 %s562, 1
      %p566 = scmp.eq.s32.totalorder %s35, 1
      %p567 = scmp.ne.s32.totalorder %s562, %s564
      %p568 = scmp.eq.s32.totalorder %s35, 0
      %p569 = por %p567, %p568
      %p570 = scmp.ne.s32.totalorder %s562, %s564
      %p571 = scmp.eq.s32.totalorder %s40, 1
      %p572 = por %p570, %p571
      %p573 = scmp.ne.s32.totalorder %s564, %s565
      %p574 = scmp.eq.s32.totalorder %s40, 0
      %p575 = por %p573, %p574
      %p576 = scmp.ne.s32.totalorder %s564, %s565
      %p577 = scmp.eq.s32.totalorder %s41, 1
      %p578 = por %p576, %p577
      %p580 = scmp.ne.s32.totalorder %s565, %s579
      %p581 = scmp.eq.s32.totalorder %s41, 0
      %p582 = por %p580, %p581
      %s584 = sadd.s32 %s583, 1
      %p587 = scmp.eq.s32.totalorder %s35, 1
      %p588 = scmp.ne.s32.totalorder %s583, %s585
      %p589 = scmp.eq.s32.totalorder %s35, 0
      %p590 = por %p588, %p589
      %p591 = scmp.ne.s32.totalorder %s583, %s585
      %p592 = scmp.eq.s32.totalorder %s40, 1
      %p593 = por %p591, %p592
      %p594 = scmp.ne.s32.totalorder %s585, %s586
      %p595 = scmp.eq.s32.totalorder %s40, 0
      %p596 = por %p594, %p595
      %p597 = scmp.ne.s32.totalorder %s585, %s586
      %p598 = scmp.eq.s32.totalorder %s41, 1
      %p599 = por %p597, %p598
      %p601 = scmp.ne.s32.totalorder %s586, %s600
      %p602 = scmp.eq.s32.totalorder %s41, 0
      %p603 = por %p601, %p602
      %s604 = ssub.s32 %s35, %s42
      %p605 = scmp.eq.s32.totalorder %s604, 0
      %s607 = sadd.s32 %s606, 1
      %s608 = scalar_select %p605, %s606, %s607
      %p611 = pneg %p605
      %p612 = scmp.eq.s32.totalorder %s35, 1
      %p613 = por %p611, %p612
      %p614 = scmp.ne.s32.totalorder %s606, %s609
      %p615 = scmp.eq.s32.totalorder %s35, 0
      %p616 = por %p614, %p615
      %p617 = scmp.ne.s32.totalorder %s606, %s609
      %p618 = scmp.eq.s32.totalorder %s40, 1
      %p619 = por %p617, %p618
      %p620 = scmp.ne.s32.totalorder %s609, %s610
      %p621 = scmp.eq.s32.totalorder %s40, 0
      %p622 = por %p620, %p621
      %p623 = scmp.ne.s32.totalorder %s609, %s610
      %p624 = scmp.eq.s32.totalorder %s41, 1
      %p625 = por %p623, %p624
      %p627 = scmp.ne.s32.totalorder %s610, %s626
      %p628 = scmp.eq.s32.totalorder %s41, 0
      %p629 = por %p627, %p628
      %p630 = scmp.le.s32.totalorder 1, %s35
      %p631 = scmp.lt.s32.totalorder %s35, 3
      %p632 = pnand %p630, %p631
      %p633 = pneg %p632
      // Predicated region
      $region9: #{main_model_forward.1} parent=5 // pred_check
        _
      $region10: #{main_model_forward.1} parent=5 // pred_check_branch
        %635 = sbr.rel (%p632) target = $region12
      $region11: #{main_model_forward.1} parent=5 // pred_region
        %s636 = ssub.s32 %s35, 1
        // Predicated region
        $region13: #{main_model_forward.1} parent=11 // pred_check
          %p637 = pneg %p134
        $region14: #{main_model_forward.1} parent=11 // pred_check_branch
          %639 = sbr.rel (%p637) target = $region16
        $region15: #{main_model_forward.1} parent=11 // pred_region
          _
        $region16: #{main_model_forward.1} parent=11 // pred_fallthru
          _
        // Predicated region
        $region17: #{main_model_forward.1} parent=11 // pred_check
          %p640 = pneg %p155
        $region18: #{main_model_forward.1} parent=11 // pred_check_branch
          %642 = sbr.rel (%p640) target = $region20
        $region19: #{main_model_forward.1} parent=11 // pred_region
          _
        $region20: #{main_model_forward.1} parent=11 // pred_fallthru
          _
        // Predicated region
        $region21: #{main_model_forward.1} parent=11 // pred_check
          %p643 = pneg %p176
        $region22: #{main_model_forward.1} parent=11 // pred_check_branch
          %645 = sbr.rel (%p643) target = $region24
        $region23: #{main_model_forward.1} parent=11 // pred_region
          _
        $region24: #{main_model_forward.1} parent=11 // pred_fallthru
          _
        // Predicated region
        $region25: #{main_model_forward.1} parent=11 // pred_check
          %p646 = pneg %p197
        $region26: #{main_model_forward.1} parent=11 // pred_check_branch
          %648 = sbr.rel (%p646) target = $region28
        $region27: #{main_model_forward.1} parent=11 // pred_region
          _
        $region28: #{main_model_forward.1} parent=11 // pred_fallthru
          _
        // Predicated region
        $region29: #{main_model_forward.1} parent=11 // pred_check
          %p649 = pneg %p218
        $region30: #{main_model_forward.1} parent=11 // pred_check_branch
          %651 = sbr.rel (%p649) target = $region32
        $region31: #{main_model_forward.1} parent=11 // pred_region
          _
        $region32: #{main_model_forward.1} parent=11 // pred_fallthru
          _
        // Predicated region
        $region33: #{main_model_forward.1} parent=11 // pred_check
          %p652 = pneg %p239
        $region34: #{main_model_forward.1} parent=11 // pred_check_branch
          %654 = sbr.rel (%p652) target = $region36
        $region35: #{main_model_forward.1} parent=11 // pred_region
          _
        $region36: #{main_model_forward.1} parent=11 // pred_fallthru
          _
        // Predicated region
        $region37: #{main_model_forward.1} parent=11 // pred_check
          %p655 = pneg %p260
        $region38: #{main_model_forward.1} parent=11 // pred_check_branch
          %657 = sbr.rel (%p655) target = $region40
        $region39: #{main_model_forward.1} parent=11 // pred_region
          _
        $region40: #{main_model_forward.1} parent=11 // pred_fallthru
          _
        // Predicated region
        $region41: #{main_model_forward.1} parent=11 // pred_check
          %p658 = pneg %p281
        $region42: #{main_model_forward.1} parent=11 // pred_check_branch
          %660 = sbr.rel (%p658) target = $region44
        $region43: #{main_model_forward.1} parent=11 // pred_region
          _
        $region44: #{main_model_forward.1} parent=11 // pred_fallthru
          _
        // Predicated region
        $region45: #{main_model_forward.1} parent=11 // pred_check
          %p661 = pneg %p302
        $region46: #{main_model_forward.1} parent=11 // pred_check_branch
          %663 = sbr.rel (%p661) target = $region48
        $region47: #{main_model_forward.1} parent=11 // pred_region
          _
        $region48: #{main_model_forward.1} parent=11 // pred_fallthru
          _
        // Predicated region
        $region49: #{main_model_forward.1} parent=11 // pred_check
          %p664 = pneg %p323
        $region50: #{main_model_forward.1} parent=11 // pred_check_branch
          %666 = sbr.rel (%p664) target = $region52
        $region51: #{main_model_forward.1} parent=11 // pred_region
          _
        $region52: #{main_model_forward.1} parent=11 // pred_fallthru
          _
        // Predicated region
        $region53: #{main_model_forward.1} parent=11 // pred_check
          %p667 = pneg %p344
        $region54: #{main_model_forward.1} parent=11 // pred_check_branch
          %669 = sbr.rel (%p667) target = $region56
        $region55: #{main_model_forward.1} parent=11 // pred_region
          _
        $region56: #{main_model_forward.1} parent=11 // pred_fallthru
          _
        // Predicated region
        $region57: #{main_model_forward.1} parent=11 // pred_check
          %p670 = pneg %p365
        $region58: #{main_model_forward.1} parent=11 // pred_check_branch
          %672 = sbr.rel (%p670) target = $region60
        $region59: #{main_model_forward.1} parent=11 // pred_region
          _
        $region60: #{main_model_forward.1} parent=11 // pred_fallthru
          _
        // Predicated region
        $region61: #{main_model_forward.1} parent=11 // pred_check
          %p673 = pneg %p386
        $region62: #{main_model_forward.1} parent=11 // pred_check_branch
          %675 = sbr.rel (%p673) target = $region64
        $region63: #{main_model_forward.1} parent=11 // pred_region
          _
        $region64: #{main_model_forward.1} parent=11 // pred_fallthru
          _
        // Predicated region
        $region65: #{main_model_forward.1} parent=11 // pred_check
          %p676 = pneg %p407
        $region66: #{main_model_forward.1} parent=11 // pred_check_branch
          %678 = sbr.rel (%p676) target = $region68
        $region67: #{main_model_forward.1} parent=11 // pred_region
          %s680 = ssub.s32 16, 16
          %681 = vsyncadd [#allocation8], %s680
          %s683 = sshll.u32 %s16, 4
          %s684 = int_to_ptr.vmem [resolvable:$true] %s683
          %686 = dma.vmem_to_smem %s684, 16, [#allocation7], [#allocation8]
        $region68: #{main_model_forward.1} parent=11 // pred_fallthru
          _
        // Predicated region
        $region69: #{main_model_forward.1} parent=11 // pred_check
          %p687 = pneg %p428
        $region70: #{main_model_forward.1} parent=11 // pred_check_branch
          %689 = sbr.rel (%p687) target = $region72
        $region71: #{main_model_forward.1} parent=11 // pred_region
          _
        $region72: #{main_model_forward.1} parent=11 // pred_fallthru
          _
        // Predicated region
        $region73: #{main_model_forward.1} parent=11 // pred_check
          %p690 = pneg %p449
        $region74: #{main_model_forward.1} parent=11 // pred_check_branch
          %692 = sbr.rel (%p690) target = $region76
        $region75: #{main_model_forward.1} parent=11 // pred_region
          _
        $region76: #{main_model_forward.1} parent=11 // pred_fallthru
          _
        // Predicated region
        $region77: #{main_model_forward.1} parent=11 // pred_check
          %p693 = pneg %p470
        $region78: #{main_model_forward.1} parent=11 // pred_check_branch
          %695 = sbr.rel (%p693) target = $region80
        $region79: #{main_model_forward.1} parent=11 // pred_region
          _
        $region80: #{main_model_forward.1} parent=11 // pred_fallthru
          _
        // Predicated region
        $region81: #{main_model_forward.1} parent=11 // pred_check
          %p696 = pneg %p491
        $region82: #{main_model_forward.1} parent=11 // pred_check_branch
          %698 = sbr.rel (%p696) target = $region84
        $region83: #{main_model_forward.1} parent=11 // pred_region
          _
        $region84: #{main_model_forward.1} parent=11 // pred_fallthru
          _
        // Predicated region
        $region85: #{main_model_forward.1} parent=11 // pred_check
          %p699 = pneg %p512
        $region86: #{main_model_forward.1} parent=11 // pred_check_branch
          %701 = sbr.rel (%p699) target = $region88
        $region87: #{main_model_forward.1} parent=11 // pred_region
          _
        $region88: #{main_model_forward.1} parent=11 // pred_fallthru
          _
        // Predicated region
        $region89: #{main_model_forward.1} parent=11 // pred_check
          %p702 = pneg %p533
        $region90: #{main_model_forward.1} parent=11 // pred_check_branch
          %704 = sbr.rel (%p702) target = $region92
        $region91: #{main_model_forward.1} parent=11 // pred_region
          _
        $region92: #{main_model_forward.1} parent=11 // pred_fallthru
          _
        // Predicated region
        $region93: #{main_model_forward.1} parent=11 // pred_check
          %p705 = pneg %p554
        $region94: #{main_model_forward.1} parent=11 // pred_check_branch
          %707 = sbr.rel (%p705) target = $region96
        $region95: #{main_model_forward.1} parent=11 // pred_region
          _
        $region96: #{main_model_forward.1} parent=11 // pred_fallthru
          _
        // Predicated region
        $region97: #{main_model_forward.1} parent=11 // pred_check
          %p708 = pneg %p575
        $region98: #{main_model_forward.1} parent=11 // pred_check_branch
          %710 = sbr.rel (%p708) target = $region100
        $region99: #{main_model_forward.1} parent=11 // pred_region
          _
        $region100: #{main_model_forward.1} parent=11 // pred_fallthru
          _
        // Predicated region
        $region101: #{main_model_forward.1} parent=11 // pred_check
          %p711 = pneg %p596
        $region102: #{main_model_forward.1} parent=11 // pred_check_branch
          %713 = sbr.rel (%p711) target = $region104
        $region103: #{main_model_forward.1} parent=11 // pred_region
          _
        $region104: #{main_model_forward.1} parent=11 // pred_fallthru
          _
      $region12: #{main_model_forward.1} parent=5 // pred_fallthru
        _
      %p714 = scmp.lt.s32.totalorder %s35, 2
      // Predicated region
      $region105: #{main_model_forward.1} parent=5 // pred_check
        %p715 = pneg %p714
      $region106: #{main_model_forward.1} parent=5 // pred_check_branch
        %717 = sbr.rel (%p715) target = $region108
      $region107: #{main_model_forward.1} parent=5 // pred_region
        // Predicated region
        $region109: #{main_model_forward.1} parent=107 // pred_check
          %p718 = pneg %p55
        $region110: #{main_model_forward.1} parent=107 // pred_check_branch
          %720 = sbr.rel (%p718) target = $region112
        $region111: #{main_model_forward.1} parent=107 // pred_region
          %s721 = sand.u32 %s45, 1
          %s722 = sand.u32 %s45, 1
          %s723 = smul.addr %s722, 32
          %s724 = scalar_lea.vmem [#allocation6], %s723
          %s725 = smul.addr %s35, 4
          %s726 = scalar_lea.vmem %s0, %s725
          // Predicated region
          $region113: #{main_model_forward.1} parent=111 // pred_check
            _
          $region114: #{main_model_forward.1} parent=111 // pred_check_branch
            %728 = sbr.rel (0) target = $region116
          $region115: #{main_model_forward.1} parent=111 // pred_region
            // Predicated region
            $region117: #{main_model_forward.1} parent=115 // pred_check
              _
            $region118: #{main_model_forward.1} parent=115 // pred_check_branch
              %730 = sbr.rel target = $region120
            $region119: #{main_model_forward.1} parent=115 // pred_region
              // Predicated region
              $region132: #{main_model_forward.1} parent=119 // pred_check
                _
              $region133: #{main_model_forward.1} parent=119 // pred_check_branch
                %759 = sbr.rel (0) target = $region135
              $region134: #{main_model_forward.1} parent=119 // pred_region
                loop: start=0, step=1, limit=1
                $region136: #{main_model_forward.1} parent=134 // loop_pre_header
                  _
                $region137: #{main_model_forward.1} parent=134 // loop_header
                  %s761 = sphi 0, %s765
                  %p762 = scmp.ge.s32.totalorder %s761, 1
                  %s766 = sphi %s726, %s726
                  %s767 = sphi %s724, %s724
                $region138: #{main_model_forward.1} parent=134 // loop_header_branch
                  %764 = sbr.rel (%p762) target = $region142
                $region139: #{main_model_forward.1} parent=134 // loop_body
                  _
                $region140: #{main_model_forward.1} parent=134 // loop_footer
                  %s765 = sadd.s32 1, %s761
                $region141: #{main_model_forward.1} parent=134 // loop_footer_branch
                  %760 = sbr.rel target = $region137
                $region142: #{main_model_forward.1} parent=134 // loop_exit
                  _
                loop: start=0, step=1, limit=1
                $region143: #{main_model_forward.1} parent=134 // loop_pre_header
                  _
                $region144: #{main_model_forward.1} parent=134 // loop_header
                  %s770 = sphi 0, %s774
                  %p771 = scmp.ge.s32.totalorder %s770, 1
                  %s775 = sphi %s726, %s726
                  %s776 = sphi %s724, %s724
                $region145: #{main_model_forward.1} parent=134 // loop_header_branch
                  %773 = sbr.rel (%p771) target = $region149
                $region146: #{main_model_forward.1} parent=134 // loop_body
                  %v777 = vld [vmem:[%s775] sm:$0xf]
                  %778 = vst [vmem:[%s776] sm:$0xf] %v777
                  %v779 = vld [vmem:[%s775 + $0x8] sm:$0xf]
                  %780 = vst [vmem:[%s776 + $0x4] sm:$0xf] %v779
                  %v781 = vld [vmem:[%s775 + $0x10] sm:$0xf]
                  %782 = vst [vmem:[%s776 + $0x8] sm:$0xf] %v781
                  %v783 = vld [vmem:[%s775 + $0x18] sm:$0xf]
                  %784 = vst [vmem:[%s776 + $0xc] sm:$0xf] %v783
                  %v785 = vld [vmem:[%s775 + $0x20] sm:$0xf]
                  %786 = vst [vmem:[%s776 + $0x10] sm:$0xf] %v785
                  %v787 = vld [vmem:[%s775 + $0x28] sm:$0xf]
                  %788 = vst [vmem:[%s776 + $0x14] sm:$0xf] %v787
                  %v789 = vld [vmem:[%s775 + $0x30] sm:$0xf]
                  %790 = vst [vmem:[%s776 + $0x18] sm:$0xf] %v789
                  %v791 = vld [vmem:[%s775 + $0x38] sm:$0xf]
                  %792 = vst [vmem:[%s776 + $0x1c] sm:$0xf] %v791
                $region147: #{main_model_forward.1} parent=134 // loop_footer
                  %s774 = sadd.s32 1, %s770
                $region148: #{main_model_forward.1} parent=134 // loop_footer_branch
                  %769 = sbr.rel target = $region144
                $region149: #{main_model_forward.1} parent=134 // loop_exit
                  _
              $region135: #{main_model_forward.1} parent=119 // pred_fallthru
                _
            $region120: #{main_model_forward.1} parent=115 // pred_fallthru
              _
            // Predicated region
            $region121: #{main_model_forward.1} parent=115 // pred_check
              _
            $region122: #{main_model_forward.1} parent=115 // pred_check_branch
              %732 = sbr.rel (0) target = $region124
            $region123: #{main_model_forward.1} parent=115 // pred_region
              loop: start=0, step=1, limit=1
              $region125: #{main_model_forward.1} parent=123 // loop_pre_header
                _
              $region126: #{main_model_forward.1} parent=123 // loop_header
                %s735 = sphi 0, %s739
                %p736 = scmp.ge.s32.totalorder %s735, 1
                %s740 = sphi %s726, %s726
                %s741 = sphi %s724, %s724
              $region127: #{main_model_forward.1} parent=123 // loop_header_branch
                %738 = sbr.rel (%p736) target = $region131
              $region128: #{main_model_forward.1} parent=123 // loop_body
                %v742 = vld [vmem:[%s740] sm:$0xf]
                %743 = vst [vmem:[%s741] sm:$0xf] %v742
                %v744 = vld [vmem:[%s740 + $0x8] sm:$0xf]
                %745 = vst [vmem:[%s741 + $0x4] sm:$0xf] %v744
                %v746 = vld [vmem:[%s740 + $0x10] sm:$0xf]
                %747 = vst [vmem:[%s741 + $0x8] sm:$0xf] %v746
                %v748 = vld [vmem:[%s740 + $0x18] sm:$0xf]
                %749 = vst [vmem:[%s741 + $0xc] sm:$0xf] %v748
                %v750 = vld [vmem:[%s740 + $0x20] sm:$0xf]
                %751 = vst [vmem:[%s741 + $0x10] sm:$0xf] %v750
                %v752 = vld [vmem:[%s740 + $0x28] sm:$0xf]
                %753 = vst [vmem:[%s741 + $0x14] sm:$0xf] %v752
                %v754 = vld [vmem:[%s740 + $0x30] sm:$0xf]
                %755 = vst [vmem:[%s741 + $0x18] sm:$0xf] %v754
                %v756 = vld [vmem:[%s740 + $0x38] sm:$0xf]
                %757 = vst [vmem:[%s741 + $0x1c] sm:$0xf] %v756
              $region129: #{main_model_forward.1} parent=123 // loop_footer
                %s739 = sadd.s32 1, %s735
              $region130: #{main_model_forward.1} parent=123 // loop_footer_branch
                %734 = sbr.rel target = $region126
              $region131: #{main_model_forward.1} parent=123 // loop_exit
                _
            $region124: #{main_model_forward.1} parent=115 // pred_fallthru
              _
          $region116: #{main_model_forward.1} parent=111 // pred_fallthru
            _
          %793 = vnop
        $region112: #{main_model_forward.1} parent=107 // pred_fallthru
          _
        // Predicated region
        $region150: #{main_model_forward.1} parent=107 // pred_check
          %p794 = pneg %p81
        $region151: #{main_model_forward.1} parent=107 // pred_check_branch
          %796 = sbr.rel (%p794) target = $region153
        $region152: #{main_model_forward.1} parent=107 // pred_region
          %s797 = smul.u32 8, %s35
          %p798 = scmp.lt.s32.totalorder %s797, 15
          %s799 = scalar_select %p798, %s797, 15
          %s800 = smul.addr %s799, 3
          %s801 = smul.addr %s800, 4
          %s802 = scalar_lea.vmem %s1, %s801
          %s803 = smul.u32 8, %s35
        $region153: #{main_model_forward.1} parent=107 // pred_fallthru
          _
        // Predicated region
        $region154: #{main_model_forward.1} parent=107 // pred_check
          %p804 = pneg %p107
        $region155: #{main_model_forward.1} parent=107 // pred_check_branch
          %806 = sbr.rel (%p804) target = $region157
        $region156: #{main_model_forward.1} parent=107 // pred_region
          %p807 = scmp.lt.s32.totalorder %s35, 1
          %s808 = scalar_select %p807, %s35, 1
          %s809 = smul.addr %s808, 4
          %s810 = scalar_lea.vmem %s2, %s809
        $region157: #{main_model_forward.1} parent=107 // pred_fallthru
          _
      $region108: #{main_model_forward.1} parent=5 // pred_fallthru
        _
      %p811 = scmp.le.s32.totalorder 1, %s35
      %p812 = scmp.lt.s32.totalorder %s35, 3
      %p813 = pnand %p811, %p812
      %p814 = pneg %p813
      // Predicated region
      $region158: #{main_model_forward.1} parent=5 // pred_check
        _
      $region159: #{main_model_forward.1} parent=5 // pred_check_branch
        %816 = sbr.rel (%p813) target = $region161
      $region160: #{main_model_forward.1} parent=5 // pred_region
        %s817 = ssub.s32 %s35, 1
        %s818 = sand.u32 %s48, 1
        %s819 = sand.u32 %s48, 1
        %s820 = smul.addr %s819, 32
        %s821 = scalar_lea.vmem [#allocation6], %s820
        // Predicated region
        $region162: #{main_model_forward.1} parent=160 // pred_check
          %p822 = pneg %p61
        $region163: #{main_model_forward.1} parent=160 // pred_check_branch
          %824 = sbr.rel (%p822) target = $region165
        $region164: #{main_model_forward.1} parent=160 // pred_region
          _
        $region165: #{main_model_forward.1} parent=160 // pred_fallthru
          _
        // Predicated region
        $region166: #{main_model_forward.1} parent=160 // pred_check
          %p825 = pneg %p407
        $region167: #{main_model_forward.1} parent=160 // pred_check_branch
          %827 = sbr.rel (%p825) target = $region169
        $region168: #{main_model_forward.1} parent=160 // pred_region
          %828 = dma.done [#allocation8], 16
        $region169: #{main_model_forward.1} parent=160 // pred_fallthru
          _
        %829 = sfence
        %s830 = sand.u32 %s48, 1
        %s831 = sand.u32 %s48, 1
        %s832 = smul.addr %s831, 32
        %s833 = scalar_lea.vmem [#allocation6], %s832
        %p834 = pneg %p61
        %p835 = pneg %p58
        %s836 = smul.u32 8, %s40
        %p837 = scmp.lt.s32.totalorder %s836, 15
        %s838 = scalar_select %p837, %s836, 15
        %s839 = smul.addr %s838, 3
        %s840 = smul.addr %s839, 4
        %s841 = scalar_lea.vmem %s1, %s840
        %p842 = pneg %p87
        %p843 = pneg %p84
        %p844 = scmp.lt.s32.totalorder %s40, 1
        %s845 = scalar_select %p844, %s40, 1
        %s846 = smul.addr %s845, 4
        %s847 = scalar_lea.vmem %s2, %s846
        %p848 = pneg %p113
        %p849 = pneg %p110
        %p850 = pneg %p134
        %p851 = pneg %p131
        %p852 = pneg %p155
        %p853 = pneg %p152
        %p854 = pneg %p176
        %p855 = pneg %p173
        %p856 = pneg %p197
        %p857 = pneg %p194
        %p858 = pneg %p218
        %p859 = pneg %p215
        %p860 = pneg %p239
        %p861 = pneg %p236
        %p862 = pneg %p260
        %p863 = pneg %p257
        %p864 = pneg %p281
        %p865 = pneg %p278
        %p866 = pneg %p302
        %p867 = pneg %p299
        %p868 = pneg %p323
        %p869 = pneg %p320
        %p870 = pneg %p344
        %p871 = pneg %p341
        %p872 = pneg %p365
        %p873 = pneg %p362
        %p874 = pneg %p386
        %p875 = pneg %p383
        %p876 = pneg %p407
        %p877 = pneg %p404
        %p878 = pneg %p428
        %p879 = pneg %p425
        %p880 = pneg %p449
        %p881 = pneg %p446
        %p882 = pneg %p470
        %p883 = pneg %p467
        %p884 = pneg %p491
        %p885 = pneg %p488
        %p886 = pneg %p512
        %p887 = pneg %p509
        %p888 = pneg %p533
        %p889 = pneg %p530
        %p890 = pneg %p554
        %p891 = pneg %p551
        %p892 = pneg %p575
        %p893 = pneg %p572
        %p894 = pneg %p596
        %p895 = pneg %p593
        %p896 = pneg %p622
        %p897 = pneg %p619
        %p898 = scmp.lt.s32.totalorder %s40, 1
        %s899 = scalar_select %p898, %s40, 1
        %s900 = smul.addr %s899, 8
        %s901 = scalar_lea.vmem %s26, %s900
        %s902 = smul.u32 8, %s40
        %p903 = scmp.lt.s32.totalorder %s902, 15
        %s904 = scalar_select %p903, %s902, 15
        %s905 = smul.addr %s904, 3
        %s906 = smul.addr %s905, 4
        %s907 = scalar_lea.vmem %s1, %s906
        %s908 = smul.u32 8, %s40
        %p909 = scmp.lt.s32.totalorder %s40, 1
        %s910 = scalar_select %p909, %s40, 1
        %s911 = smul.addr %s910, 4
        %s912 = scalar_lea.vmem %s2, %s911
        %p913 = scmp.lt.s32.totalorder %s40, 1
        %s914 = scalar_select %p913, %s40, 1
        %s915 = smul.addr %s914, 8
        %s916 = scalar_lea.vmem %s26, %s915
        %v918 = vld [vmem:[%s4] sm:$0xf]
        %v919 = vld [vmem:[%s4 + $0x4] sm:$0xf]
        %v920 = vld [vmem:[%s4 + $0x8] sm:$0xf]
        %v921 = vld [vmem:[%s4 + $0xc] sm:$0xf]
        %v922 = vld [vmem:[%s821] sm:$0xf]
        %v923 = vld [vmem:[%s821 + $0x4] sm:$0xf]
        %v924 = vld [vmem:[%s821 + $0x8] sm:$0xf]
        %v925 = vld [vmem:[%s821 + $0xc] sm:$0xf]
        %v926 = vld [vmem:[%s821 + $0x10] sm:$0xf]
        %v927 = vld [vmem:[%s821 + $0x14] sm:$0xf]
        %v928 = vld [vmem:[%s821 + $0x18] sm:$0xf]
        %v929 = vld [vmem:[%s821 + $0x1c] sm:$0xf]
        %v930 = vld [vmem:[%s3] sm:$0xf]
        %v931 = vld [vmem:[%s3 + $0x4] sm:$0xf]
        %v932 = vld [vmem:[%s5] sm:$0x1]
        %v934 = vlaneseq
        %v935 = vshrl.u32 %v934, 7
        %v936 = vsub.s32 0, %v935
        %v937 = vrot.slane %v932, %v936
        %v947 = vunpack.c.l.b16 %v922
        %v948 = vunpack.c.l.b16 %v923
        %v949 = vunpack.c.l.b16 %v924
        %v950 = vunpack.c.l.b16 %v925
        %v951 = vunpack.c.l.b16 %v926
        %v952 = vunpack.c.l.b16 %v927
        %v953 = vunpack.c.l.b16 %v928
        %v954 = vunpack.c.l.b16 %v929
        %v955 = vpack.c.b16 %v948, %v947
        %v956 = vpack.c.b16 %v950, %v949
        %v957 = vpack.c.b16 %v952, %v951
        %v958 = vpack.c.b16 %v954, %v953
        %v961 = vunpack.c.l.b16 %v930
        %v962 = vunpack.c.l.b16 %v931
        %v963 = vpack.c.b16 %v962, %v961
        %vm965 = vcmask 130048
        %v967 = vsel %vm965, %v955, 0
        %v970 = vsel %vm965, %v956, 0
        %v973 = vsel %vm965, %v957, 0
        %v976 = vsel %vm965, %v958, 0
        %978 = vmatprep.subr.bf16.mxu0 0
        %979 = vmatpush1.bf16.msra.mxu0 %v963
        %980 = vmatprep.subr.bf16.mxu0 0
        %981 = vmatpush1.bf16.msra.mxu0 0
        %982 = vmatprep.subr.bf16.mxu0 0
        %983 = vmatpush1.bf16.msra.mxu0 0
        %984 = vmatprep.subr.bf16.mxu0 0
        %985 = vmatpush1.bf16.msra.mxu0 0
        %986 = vmatprep.subr.bf16.mxu0 0
        %987 = vmatpush1.bf16.msra.mxu0 0
        %988 = vmatprep.subr.bf16.mxu0 0
        %989 = vmatpush1.bf16.msra.mxu0 0
        %990 = vmatprep.subr.bf16.mxu0 0
        %991 = vmatpush1.bf16.msra.mxu0 0
        %992 = vmatprep.subr.bf16.mxu0 0
        %993 = vmatpush1.bf16.msra.mxu0 0
        %994 = vmatprep.subr.bf16.mxu0 0
        %995 = vmatpush1.bf16.msra.mxu0 0
        %996 = vmatprep.subr.bf16.mxu0 0
        %997 = vmatpush1.bf16.msra.mxu0 0
        %998 = vmatprep.subr.bf16.mxu0 0
        %999 = vmatpush1.bf16.msra.mxu0 0
        %1000 = vmatprep.subr.bf16.mxu0 0
        %1001 = vmatpush1.bf16.msra.mxu0 0
        %1002 = vmatprep.subr.bf16.mxu0 0
        %1003 = vmatpush1.bf16.msra.mxu0 0
        %1004 = vmatprep.subr.bf16.mxu0 0
        %1005 = vmatpush1.bf16.msra.mxu0 0
        %1006 = vmatprep.subr.bf16.mxu0 0
        %1007 = vmatpush1.bf16.msra.mxu0 0
        %1008 = vmatprep.subr.bf16.mxu0 0
        %1009 = vmatpush1.bf16.msra.mxu0 0
        %1010 = vmatprep.mubr.bf16.mxu0 0
        %1011 = vmatmul.mubr.bf16.gmra.mrb[0].mxu0 %v967
        %v1012 = vpop.f32.mrb[0].mxu0
        %v1013 = vadd.f32 %v937, %v1012
        %v1014 = vpop.f32.mrb[0].mxu0
        %v1015 = vpop.f32.mrb[0].mxu0
        %v1016 = vadd.f32 %v937, %v1015
        %v1017 = vpop.f32.mrb[0].mxu0
        %1018 = vmatprep.mubr.bf16.mxu0 0
        %1019 = vmatmul.mubr.bf16.gmra.mrb[0].mxu0 %v970
        %v1020 = vpop.f32.mrb[0].mxu0
        %v1021 = vadd.f32 %v937, %v1020
        %v1022 = vpop.f32.mrb[0].mxu0
        %v1023 = vpop.f32.mrb[0].mxu0
        %v1024 = vadd.f32 %v937, %v1023
        %v1025 = vpop.f32.mrb[0].mxu0
        %1026 = vmatprep.mubr.bf16.mxu0 0
        %1027 = vmatmul.mubr.bf16.gmra.mrb[0].mxu0 %v973
        %v1028 = vpop.f32.mrb[0].mxu0
        %v1029 = vadd.f32 %v937, %v1028
        %v1030 = vpop.f32.mrb[0].mxu0
        %v1031 = vpop.f32.mrb[0].mxu0
        %v1032 = vadd.f32 %v937, %v1031
        %v1033 = vpop.f32.mrb[0].mxu0
        %1034 = vmatprep.mubr.bf16.mxu0 0
        %1035 = vmatmul.mubr.bf16.gmra.mrb[0].mxu0 %v976
        %v1036 = vpop.f32.mrb[0].mxu0
        %v1037 = vadd.f32 %v937, %v1036
        %v1038 = vpop.f32.mrb[0].mxu0
        %v1039 = vpop.f32.mrb[0].mxu0
        %v1040 = vadd.f32 %v937, %v1039
        %v1041 = vpop.f32.mrb[0].mxu0
        %1042 = vdwg.mxu0
        %1043 = vst [vmem:[#allocation2] sm:$0xff] %v1013
        %1044 = vst [vmem:[#allocation2 + $0x8] sm:$0xff] %v1016
        %1045 = vst [vmem:[#allocation2 + $0x10] sm:$0xff] %v1021
        %1046 = vst [vmem:[#allocation2 + $0x18] sm:$0xff] %v1024
        %1047 = vst [vmem:[#allocation2 + $0x20] sm:$0xff] %v1029
        %1048 = vst [vmem:[#allocation2 + $0x28] sm:$0xff] %v1032
        %1049 = vst [vmem:[#allocation2 + $0x30] sm:$0xff] %v1037
        %1050 = vst [vmem:[#allocation2 + $0x38] sm:$0xff] %v1040
        %v1051 = vld [vmem:[#allocation2] sm:$0xff]
        %v1056 = vunpack.c.l.b16 %v918
        %v1057 = vunpack.c.l.b16 %v919
        %v1058 = vunpack.c.l.b16 %v920
        %v1059 = vunpack.c.l.b16 %v921
        %v1060 = vpack.c.b16 %v1057, %v1056
        %v1061 = vpack.c.b16 %v1059, %v1058
        %vm1064 = vcmask 261120
        %v1066 = vsel %vm1064, 0, 0
        %1068 = vmatprep.subr.bf16.mxu0 0
        %1069 = vmatpush1.bf16.msra.mxu0 %v1060
        %1070 = vmatprep.subr.bf16.mxu0 0
        %1071 = vmatpush1.bf16.msra.mxu0 %v1061
        %1072 = vmatprep.subr.bf16.mxu0 0
        %1073 = vmatpush1.bf16.msra.mxu0 0
        %1074 = vmatprep.subr.bf16.mxu0 0
        %1075 = vmatpush1.bf16.msra.mxu0 0
        %1076 = vmatprep.subr.bf16.mxu0 0
        %1077 = vmatpush1.bf16.msra.mxu0 0
        %1078 = vmatprep.subr.bf16.mxu0 0
        %1079 = vmatpush1.bf16.msra.mxu0 0
        %1080 = vmatprep.subr.bf16.mxu0 0
        %1081 = vmatpush1.bf16.msra.mxu0 0
        %1082 = vmatprep.subr.bf16.mxu0 0
        %1083 = vmatpush1.bf16.msra.mxu0 0
        %1084 = vmatprep.subr.bf16.mxu0 0
        %1085 = vmatpush1.bf16.msra.mxu0 0
        %1086 = vmatprep.subr.bf16.mxu0 0
        %1087 = vmatpush1.bf16.msra.mxu0 0
        %1088 = vmatprep.subr.bf16.mxu0 0
        %1089 = vmatpush1.bf16.msra.mxu0 0
        %1090 = vmatprep.subr.bf16.mxu0 0
        %1091 = vmatpush1.bf16.msra.mxu0 0
        %1092 = vmatprep.subr.bf16.mxu0 0
        %1093 = vmatpush1.bf16.msra.mxu0 0
        %1094 = vmatprep.subr.bf16.mxu0 0
        %1095 = vmatpush1.bf16.msra.mxu0 0
        %1096 = vmatprep.subr.bf16.mxu0 0
        %1097 = vmatpush1.bf16.msra.mxu0 0
        %1098 = vmatprep.subr.bf16.mxu0 0
        %1099 = vmatpush1.bf16.msra.mxu0 0
        %1100 = vmatprep.mubr.bf16.mxu0 0
        %1101 = vmatmul.mubr.bf16.gmra.mrb[0].mxu0 %v1066
        %v1102 = vpop.f32.mrb[0].mxu0
        %v1103 = vadd.f32 0.0, %v1102
        %v1104 = vpop.f32.mrb[0].mxu0
        %v1105 = vpop.f32.mrb[0].mxu0
        %v1106 = vpop.f32.mrb[0].mxu0
        %1107 = vdwg.mxu0
        %v1108 = vadd.f32 %v1051, %v1103
        %v1109 = vxor.u32 %v1108, 2147483648
        %v1110 = vmul.f32 %v1109, 1.442695
        %v1111 = vpow.pop %v1110
        %v1112 = vadd.f32 %v1111, 1.0
        %v1113 = vrcp.pop %v1112
        %v1114 = vmul.f32 1.0, %v1113
        %v1115 = vtanh.pop %v1108
        %v1116 = vmul.f32 %v1114, 0.0
        %1118 = vrot.lane.b32.xlu0 %v1115, 32
        %v1119 = vpop.permute.xlu0 %1118
        %v1121 = vmul.f32 %v1114, %v1119
        %1123 = vrot.lane.b32.xlu0 %v1121, 32
        %v1124 = vpop.permute.xlu0 %1123
        %v1126 = vadd.f32 %v1116, %v1124
        %v1127 = vtanh.pop %v1126
        %1129 = vrot.lane.b32.xlu0 %v1127, 32
        %v1130 = vpop.permute.xlu0 %1129
        %v1132 = vmul.f32 %v1114, %v1130
        %1134 = vrot.lane.b32.xlu0 %v1132, 64
        %v1135 = vpop.permute.xlu0 %1134
        %1137 = vst.msk [vmem:[#allocation3] sm:$0xff] %vm1064, %v1135
        %s1138 = scalar_lea.vmem [#allocation2], 8
        %v1139 = vld [vmem:[%s1138] sm:$0xff]
        %v1140 = vpack.c.bf16 %v1132, %v1132
        %1142 = vrot.lane.b32.xlu0 %v1140, 64
        %v1143 = vpop.permute.xlu0 %1142
        %v1145 = vsel %vm1064, %v1143, 0
        %1147 = vmatprep.subr.bf16.mxu0 0
        %1148 = vmatpush1.bf16.msra.mxu0 %v1060
        %1149 = vmatprep.subr.bf16.mxu0 0
        %1150 = vmatpush1.bf16.msra.mxu0 %v1061
        %1151 = vmatprep.subr.bf16.mxu0 0
        %1152 = vmatpush1.bf16.msra.mxu0 0
        %1153 = vmatprep.subr.bf16.mxu0 0
        %1154 = vmatpush1.bf16.msra.mxu0 0
        %1155 = vmatprep.subr.bf16.mxu0 0
        %1156 = vmatpush1.bf16.msra.mxu0 0
        %1157 = vmatprep.subr.bf16.mxu0 0
        %1158 = vmatpush1.bf16.msra.mxu0 0
        %1159 = vmatprep.subr.bf16.mxu0 0
        %1160 = vmatpush1.bf16.msra.mxu0 0
        %1161 = vmatprep.subr.bf16.mxu0 0
        %1162 = vmatpush1.bf16.msra.mxu0 0
        %1163 = vmatprep.subr.bf16.mxu0 0
        %1164 = vmatpush1.bf16.msra.mxu0 0
        %1165 = vmatprep.subr.bf16.mxu0 0
        %1166 = vmatpush1.bf16.msra.mxu0 0
        %1167 = vmatprep.subr.bf16.mxu0 0
        %1168 = vmatpush1.bf16.msra.mxu0 0
        %1169 = vmatprep.subr.bf16.mxu0 0
        %1170 = vmatpush1.bf16.msra.mxu0 0
        %1171 = vmatprep.subr.bf16.mxu0 0
        %1172 = vmatpush1.bf16.msra.mxu0 0
        %1173 = vmatprep.subr.bf16.mxu0 0
        %1174 = vmatpush1.bf16.msra.mxu0 0
        %1175 = vmatprep.subr.bf16.mxu0 0
        %1176 = vmatpush1.bf16.msra.mxu0 0
        %1177 = vmatprep.subr.bf16.mxu0 0
        %1178 = vmatpush1.bf16.msra.mxu0 0
        %1179 = vmatprep.mubr.bf16.mxu0 0
        %1180 = vmatmul.mubr.bf16.gmra.mrb[0].mxu0 %v1145
        %v1181 = vpop.f32.mrb[0].mxu0
        %v1182 = vadd.f32 0.0, %v1181
        %v1183 = vpop.f32.mrb[0].mxu0
        %v1184 = vpop.f32.mrb[0].mxu0
        %v1185 = vpop.f32.mrb[0].mxu0
        %1186 = vdwg.mxu0
        %v1187 = vadd.f32 %v1139, %v1182
        %v1188 = vxor.u32 %v1187, 2147483648
        %v1189 = vmul.f32 %v1188, 1.442695
        %v1190 = vpow.pop %v1189
        %v1191 = vadd.f32 %v1190, 1.0
        %v1192 = vrcp.pop %v1191
        %v1193 = vmul.f32 1.0, %v1192
        %v1194 = vtanh.pop %v1187
        %v1195 = vmul.f32 %v1193, %v1126
        %1197 = vrot.lane.b32.xlu0 %v1194, 32
        %v1198 = vpop.permute.xlu0 %1197
        %v1200 = vmul.f32 %v1193, %v1198
        %1202 = vrot.lane.b32.xlu0 %v1200, 32
        %v1203 = vpop.permute.xlu0 %1202
        %v1205 = vadd.f32 %v1195, %v1203
        %v1206 = vtanh.pop %v1205
        %1208 = vrot.lane.b32.xlu0 %v1206, 32
        %v1209 = vpop.permute.xlu0 %1208
        %v1211 = vmul.f32 %v1193, %v1209
        %1213 = vrot.lane.b32.xlu0 %v1211, 64
        %v1214 = vpop.permute.xlu0 %1213
        %s1216 = scalar_lea.vmem [#allocation3], 8
        %1217 = vst.msk [vmem:[%s1216] sm:$0xff] %vm1064, %v1214
        %s1218 = scalar_lea.vmem [#allocation2], 16
        %v1219 = vld [vmem:[%s1218] sm:$0xff]
        %v1220 = vpack.c.bf16 %v1211, %v1211
        %1222 = vrot.lane.b32.xlu0 %v1220, 64
        %v1223 = vpop.permute.xlu0 %1222
        %v1225 = vsel %vm1064, %v1223, 0
        %1227 = vmatprep.subr.bf16.mxu0 0
        %1228 = vmatpush1.bf16.msra.mxu0 %v1060
        %1229 = vmatprep.subr.bf16.mxu0 0
        %1230 = vmatpush1.bf16.msra.mxu0 %v1061
        %1231 = vmatprep.subr.bf16.mxu0 0
        %1232 = vmatpush1.bf16.msra.mxu0 0
        %1233 = vmatprep.subr.bf16.mxu0 0
        %1234 = vmatpush1.bf16.msra.mxu0 0
        %1235 = vmatprep.subr.bf16.mxu0 0
        %1236 = vmatpush1.bf16.msra.mxu0 0
        %1237 = vmatprep.subr.bf16.mxu0 0
        %1238 = vmatpush1.bf16.msra.mxu0 0
        %1239 = vmatprep.subr.bf16.mxu0 0
        %1240 = vmatpush1.bf16.msra.mxu0 0
        %1241 = vmatprep.subr.bf16.mxu0 0
        %1242 = vmatpush1.bf16.msra.mxu0 0
        %1243 = vmatprep.subr.bf16.mxu0 0
        %1244 = vmatpush1.bf16.msra.mxu0 0
        %1245 = vmatprep.subr.bf16.mxu0 0
        %1246 = vmatpush1.bf16.msra.mxu0 0
        %1247 = vmatprep.subr.bf16.mxu0 0
        %1248 = vmatpush1.bf16.msra.mxu0 0
        %1249 = vmatprep.subr.bf16.mxu0 0
        %1250 = vmatpush1.bf16.msra.mxu0 0
        %1251 = vmatprep.subr.bf16.mxu0 0
        %1252 = vmatpush1.bf16.msra.mxu0 0
        %1253 = vmatprep.subr.bf16.mxu0 0
        %1254 = vmatpush1.bf16.msra.mxu0 0
        %1255 = vmatprep.subr.bf16.mxu0 0
        %1256 = vmatpush1.bf16.msra.mxu0 0
        %1257 = vmatprep.subr.bf16.mxu0 0
        %1258 = vmatpush1.bf16.msra.mxu0 0
        %1259 = vmatprep.mubr.bf16.mxu0 0
        %1260 = vmatmul.mubr.bf16.gmra.mrb[0].mxu0 %v1225
        %v1261 = vpop.f32.mrb[0].mxu0
        %v1262 = vadd.f32 0.0, %v1261
        %v1263 = vpop.f32.mrb[0].mxu0
        %v1264 = vpop.f32.mrb[0].mxu0
        %v1265 = vpop.f32.mrb[0].mxu0
        %1266 = vdwg.mxu0
        %v1267 = vadd.f32 %v1219, %v1262
        %v1268 = vxor.u32 %v1267, 2147483648
        %v1269 = vmul.f32 %v1268, 1.442695
        %v1270 = vpow.pop %v1269
        %v1271 = vadd.f32 %v1270, 1.0
        %v1272 = vrcp.pop %v1271
        %v1273 = vmul.f32 1.0, %v1272
        %v1274 = vtanh.pop %v1267
        %v1275 = vmul.f32 %v1273, %v1205
        %1277 = vrot.lane.b32.xlu0 %v1274, 32
        %v1278 = vpop.permute.xlu0 %1277
        %v1280 = vmul.f32 %v1273, %v1278
        %1282 = vrot.lane.b32.xlu0 %v1280, 32
        %v1283 = vpop.permute.xlu0 %1282
        %v1285 = vadd.f32 %v1275, %v1283
        %v1286 = vtanh.pop %v1285
        %1288 = vrot.lane.b32.xlu0 %v1286, 32
        %v1289 = vpop.permute.xlu0 %1288
        %v1291 = vmul.f32 %v1273, %v1289
        %1293 = vrot.lane.b32.xlu0 %v1291, 64
        %v1294 = vpop.permute.xlu0 %1293
        %s1296 = scalar_lea.vmem [#allocation3], 16
        %1297 = vst.msk [vmem:[%s1296] sm:$0xff] %vm1064, %v1294
        %s1298 = scalar_lea.vmem [#allocation2], 24
        %v1299 = vld [vmem:[%s1298] sm:$0xff]
        %v1300 = vpack.c.bf16 %v1291, %v1291
        %1302 = vrot.lane.b32.xlu0 %v1300, 64
        %v1303 = vpop.permute.xlu0 %1302
        %v1305 = vsel %vm1064, %v1303, 0
        %1307 = vmatprep.subr.bf16.mxu0 0
        %1308 = vmatpush1.bf16.msra.mxu0 %v1060
        %1309 = vmatprep.subr.bf16.mxu0 0
        %1310 = vmatpush1.bf16.msra.mxu0 %v1061
        %1311 = vmatprep.subr.bf16.mxu0 0
        %1312 = vmatpush1.bf16.msra.mxu0 0
        %1313 = vmatprep.subr.bf16.mxu0 0
        %1314 = vmatpush1.bf16.msra.mxu0 0
        %1315 = vmatprep.subr.bf16.mxu0 0
        %1316 = vmatpush1.bf16.msra.mxu0 0
        %1317 = vmatprep.subr.bf16.mxu0 0
        %1318 = vmatpush1.bf16.msra.mxu0 0
        %1319 = vmatprep.subr.bf16.mxu0 0
        %1320 = vmatpush1.bf16.msra.mxu0 0
        %1321 = vmatprep.subr.bf16.mxu0 0
        %1322 = vmatpush1.bf16.msra.mxu0 0
        %1323 = vmatprep.subr.bf16.mxu0 0
        %1324 = vmatpush1.bf16.msra.mxu0 0
        %1325 = vmatprep.subr.bf16.mxu0 0
        %1326 = vmatpush1.bf16.msra.mxu0 0
        %1327 = vmatprep.subr.bf16.mxu0 0
        %1328 = vmatpush1.bf16.msra.mxu0 0
        %1329 = vmatprep.subr.bf16.mxu0 0
        %1330 = vmatpush1.bf16.msra.mxu0 0
        %1331 = vmatprep.subr.bf16.mxu0 0
        %1332 = vmatpush1.bf16.msra.mxu0 0
        %1333 = vmatprep.subr.bf16.mxu0 0
        %1334 = vmatpush1.bf16.msra.mxu0 0
        %1335 = vmatprep.subr.bf16.mxu0 0
        %1336 = vmatpush1.bf16.msra.mxu0 0
        %1337 = vmatprep.subr.bf16.mxu0 0
        %1338 = vmatpush1.bf16.msra.mxu0 0
        %1339 = vmatprep.mubr.bf16.mxu0 0
        %1340 = vmatmul.mubr.bf16.gmra.mrb[0].mxu0 %v1305
        %v1341 = vpop.f32.mrb[0].mxu0
        %v1342 = vadd.f32 0.0, %v1341
        %v1343 = vpop.f32.mrb[0].mxu0
        %v1344 = vpop.f32.mrb[0].mxu0
        %v1345 = vpop.f32.mrb[0].mxu0
        %1346 = vdwg.mxu0
        %v1347 = vadd.f32 %v1299, %v1342
        %v1348 = vxor.u32 %v1347, 2147483648
        %v1349 = vmul.f32 %v1348, 1.442695
        %v1350 = vpow.pop %v1349
        %v1351 = vadd.f32 %v1350, 1.0
        %v1352 = vrcp.pop %v1351
        %v1353 = vmul.f32 1.0, %v1352
        %v1354 = vtanh.pop %v1347
        %v1355 = vmul.f32 %v1353, %v1285
        %1357 = vrot.lane.b32.xlu0 %v1354, 32
        %v1358 = vpop.permute.xlu0 %1357
        %v1360 = vmul.f32 %v1353, %v1358
        %1362 = vrot.lane.b32.xlu0 %v1360, 32
        %v1363 = vpop.permute.xlu0 %1362
        %v1365 = vadd.f32 %v1355, %v1363
        %v1366 = vtanh.pop %v1365
        %1368 = vrot.lane.b32.xlu0 %v1366, 32
        %v1369 = vpop.permute.xlu0 %1368
        %v1371 = vmul.f32 %v1353, %v1369
        %1373 = vrot.lane.b32.xlu0 %v1371, 64
        %v1374 = vpop.permute.xlu0 %1373
        %s1376 = scalar_lea.vmem [#allocation3], 24
        %1377 = vst.msk [vmem:[%s1376] sm:$0xff] %vm1064, %v1374
        %s1378 = scalar_lea.vmem [#allocation2], 32
        %v1379 = vld [vmem:[%s1378] sm:$0xff]
        %v1380 = vpack.c.bf16 %v1371, %v1371
        %1382 = vrot.lane.b32.xlu0 %v1380, 64
        %v1383 = vpop.permute.xlu0 %1382
        %v1385 = vsel %vm1064, %v1383, 0
        %1387 = vmatprep.subr.bf16.mxu0 0
        %1388 = vmatpush1.bf16.msra.mxu0 %v1060
        %1389 = vmatprep.subr.bf16.mxu0 0
        %1390 = vmatpush1.bf16.msra.mxu0 %v1061
        %1391 = vmatprep.subr.bf16.mxu0 0
        %1392 = vmatpush1.bf16.msra.mxu0 0
        %1393 = vmatprep.subr.bf16.mxu0 0
        %1394 = vmatpush1.bf16.msra.mxu0 0
        %1395 = vmatprep.subr.bf16.mxu0 0
        %1396 = vmatpush1.bf16.msra.mxu0 0
        %1397 = vmatprep.subr.bf16.mxu0 0
        %1398 = vmatpush1.bf16.msra.mxu0 0
        %1399 = vmatprep.subr.bf16.mxu0 0
        %1400 = vmatpush1.bf16.msra.mxu0 0
        %1401 = vmatprep.subr.bf16.mxu0 0
        %1402 = vmatpush1.bf16.msra.mxu0 0
        %1403 = vmatprep.subr.bf16.mxu0 0
        %1404 = vmatpush1.bf16.msra.mxu0 0
        %1405 = vmatprep.subr.bf16.mxu0 0
        %1406 = vmatpush1.bf16.msra.mxu0 0
        %1407 = vmatprep.subr.bf16.mxu0 0
        %1408 = vmatpush1.bf16.msra.mxu0 0
        %1409 = vmatprep.subr.bf16.mxu0 0
        %1410 = vmatpush1.bf16.msra.mxu0 0
        %1411 = vmatprep.subr.bf16.mxu0 0
        %1412 = vmatpush1.bf16.msra.mxu0 0
        %1413 = vmatprep.subr.bf16.mxu0 0
        %1414 = vmatpush1.bf16.msra.mxu0 0
        %1415 = vmatprep.subr.bf16.mxu0 0
        %1416 = vmatpush1.bf16.msra.mxu0 0
        %1417 = vmatprep.subr.bf16.mxu0 0
        %1418 = vmatpush1.bf16.msra.mxu0 0
        %1419 = vmatprep.mubr.bf16.mxu0 0
        %1420 = vmatmul.mubr.bf16.gmra.mrb[0].mxu0 %v1385
        %v1421 = vpop.f32.mrb[0].mxu0
        %v1422 = vadd.f32 0.0, %v1421
        %v1423 = vpop.f32.mrb[0].mxu0
        %v1424 = vpop.f32.mrb[0].mxu0
        %v1425 = vpop.f32.mrb[0].mxu0
        %1426 = vdwg.mxu0
        %v1427 = vadd.f32 %v1379, %v1422
        %v1428 = vxor.u32 %v1427, 2147483648
        %v1429 = vmul.f32 %v1428, 1.442695
        %v1430 = vpow.pop %v1429
        %v1431 = vadd.f32 %v1430, 1.0
        %v1432 = vrcp.pop %v1431
        %v1433 = vmul.f32 1.0, %v1432
        %v1434 = vtanh.pop %v1427
        %v1435 = vmul.f32 %v1433, %v1365
        %1437 = vrot.lane.b32.xlu0 %v1434, 32
        %v1438 = vpop.permute.xlu0 %1437
        %v1440 = vmul.f32 %v1433, %v1438
        %1442 = vrot.lane.b32.xlu0 %v1440, 32
        %v1443 = vpop.permute.xlu0 %1442
        %v1445 = vadd.f32 %v1435, %v1443
        %v1446 = vtanh.pop %v1445
        %1448 = vrot.lane.b32.xlu0 %v1446, 32
        %v1449 = vpop.permute.xlu0 %1448
        %v1451 = vmul.f32 %v1433, %v1449
        %1453 = vrot.lane.b32.xlu0 %v1451, 64
        %v1454 = vpop.permute.xlu0 %1453
        %s1456 = scalar_lea.vmem [#allocation3], 32
        %1457 = vst.msk [vmem:[%s1456] sm:$0xff] %vm1064, %v1454
        %s1458 = scalar_lea.vmem [#allocation2], 40
        %v1459 = vld [vmem:[%s1458] sm:$0xff]
        %v1460 = vpack.c.bf16 %v1451, %v1451
        %1462 = vrot.lane.b32.xlu0 %v1460, 64
        %v1463 = vpop.permute.xlu0 %1462
        %v1465 = vsel %vm1064, %v1463, 0
        %1467 = vmatprep.subr.bf16.mxu0 0
        %1468 = vmatpush1.bf16.msra.mxu0 %v1060
        %1469 = vmatprep.subr.bf16.mxu0 0
        %1470 = vmatpush1.bf16.msra.mxu0 %v1061
        %1471 = vmatprep.subr.bf16.mxu0 0
        %1472 = vmatpush1.bf16.msra.mxu0 0
        %1473 = vmatprep.subr.bf16.mxu0 0
        %1474 = vmatpush1.bf16.msra.mxu0 0
        %1475 = vmatprep.subr.bf16.mxu0 0
        %1476 = vmatpush1.bf16.msra.mxu0 0
        %1477 = vmatprep.subr.bf16.mxu0 0
        %1478 = vmatpush1.bf16.msra.mxu0 0
        %1479 = vmatprep.subr.bf16.mxu0 0
        %1480 = vmatpush1.bf16.msra.mxu0 0
        %1481 = vmatprep.subr.bf16.mxu0 0
        %1482 = vmatpush1.bf16.msra.mxu0 0
        %1483 = vmatprep.subr.bf16.mxu0 0
        %1484 = vmatpush1.bf16.msra.mxu0 0
        %1485 = vmatprep.subr.bf16.mxu0 0
        %1486 = vmatpush1.bf16.msra.mxu0 0
        %1487 = vmatprep.subr.bf16.mxu0 0
        %1488 = vmatpush1.bf16.msra.mxu0 0
        %1489 = vmatprep.subr.bf16.mxu0 0
        %1490 = vmatpush1.bf16.msra.mxu0 0
        %1491 = vmatprep.subr.bf16.mxu0 0
        %1492 = vmatpush1.bf16.msra.mxu0 0
        %1493 = vmatprep.subr.bf16.mxu0 0
        %1494 = vmatpush1.bf16.msra.mxu0 0
        %1495 = vmatprep.subr.bf16.mxu0 0
        %1496 = vmatpush1.bf16.msra.mxu0 0
        %1497 = vmatprep.subr.bf16.mxu0 0
        %1498 = vmatpush1.bf16.msra.mxu0 0
        %1499 = vmatprep.mubr.bf16.mxu0 0
        %1500 = vmatmul.mubr.bf16.gmra.mrb[0].mxu0 %v1465
        %v1501 = vpop.f32.mrb[0].mxu0
        %v1502 = vadd.f32 0.0, %v1501
        %v1503 = vpop.f32.mrb[0].mxu0
        %v1504 = vpop.f32.mrb[0].mxu0
        %v1505 = vpop.f32.mrb[0].mxu0
        %1506 = vdwg.mxu0
        %v1507 = vadd.f32 %v1459, %v1502
        %v1508 = vxor.u32 %v1507, 2147483648
        %v1509 = vmul.f32 %v1508, 1.442695
        %v1510 = vpow.pop %v1509
        %v1511 = vadd.f32 %v1510, 1.0
        %v1512 = vrcp.pop %v1511
        %v1513 = vmul.f32 1.0, %v1512
        %v1514 = vtanh.pop %v1507
        %v1515 = vmul.f32 %v1513, %v1445
        %1517 = vrot.lane.b32.xlu0 %v1514, 32
        %v1518 = vpop.permute.xlu0 %1517
        %v1520 = vmul.f32 %v1513, %v1518
        %1522 = vrot.lane.b32.xlu0 %v1520, 32
        %v1523 = vpop.permute.xlu0 %1522
        %v1525 = vadd.f32 %v1515, %v1523
        %v1526 = vtanh.pop %v1525
        %1528 = vrot.lane.b32.xlu0 %v1526, 32
        %v1529 = vpop.permute.xlu0 %1528
        %v1531 = vmul.f32 %v1513, %v1529
        %1533 = vrot.lane.b32.xlu0 %v1531, 64
        %v1534 = vpop.permute.xlu0 %1533
        %s1536 = scalar_lea.vmem [#allocation3], 40
        %1537 = vst.msk [vmem:[%s1536] sm:$0xff] %vm1064, %v1534
        %s1538 = scalar_lea.vmem [#allocation2], 48
        %v1539 = vld [vmem:[%s1538] sm:$0xff]
        %v1540 = vpack.c.bf16 %v1531, %v1531
        %1542 = vrot.lane.b32.xlu0 %v1540, 64
        %v1543 = vpop.permute.xlu0 %1542
        %v1545 = vsel %vm1064, %v1543, 0
        %1547 = vmatprep.subr.bf16.mxu0 0
        %1548 = vmatpush1.bf16.msra.mxu0 %v1060
        %1549 = vmatprep.subr.bf16.mxu0 0
        %1550 = vmatpush1.bf16.msra.mxu0 %v1061
        %1551 = vmatprep.subr.bf16.mxu0 0
        %1552 = vmatpush1.bf16.msra.mxu0 0
        %1553 = vmatprep.subr.bf16.mxu0 0
        %1554 = vmatpush1.bf16.msra.mxu0 0
        %1555 = vmatprep.subr.bf16.mxu0 0
        %1556 = vmatpush1.bf16.msra.mxu0 0
        %1557 = vmatprep.subr.bf16.mxu0 0
        %1558 = vmatpush1.bf16.msra.mxu0 0
        %1559 = vmatprep.subr.bf16.mxu0 0
        %1560 = vmatpush1.bf16.msra.mxu0 0
        %1561 = vmatprep.subr.bf16.mxu0 0
        %1562 = vmatpush1.bf16.msra.mxu0 0
        %1563 = vmatprep.subr.bf16.mxu0 0
        %1564 = vmatpush1.bf16.msra.mxu0 0
        %1565 = vmatprep.subr.bf16.mxu0 0
        %1566 = vmatpush1.bf16.msra.mxu0 0
        %1567 = vmatprep.subr.bf16.mxu0 0
        %1568 = vmatpush1.bf16.msra.mxu0 0
        %1569 = vmatprep.subr.bf16.mxu0 0
        %1570 = vmatpush1.bf16.msra.mxu0 0
        %1571 = vmatprep.subr.bf16.mxu0 0
        %1572 = vmatpush1.bf16.msra.mxu0 0
        %1573 = vmatprep.subr.bf16.mxu0 0
        %1574 = vmatpush1.bf16.msra.mxu0 0
        %1575 = vmatprep.subr.bf16.mxu0 0
        %1576 = vmatpush1.bf16.msra.mxu0 0
        %1577 = vmatprep.subr.bf16.mxu0 0
        %1578 = vmatpush1.bf16.msra.mxu0 0
        %1579 = vmatprep.mubr.bf16.mxu0 0
        %1580 = vmatmul.mubr.bf16.gmra.mrb[0].mxu0 %v1545
        %v1581 = vpop.f32.mrb[0].mxu0
        %v1582 = vadd.f32 0.0, %v1581
        %v1583 = vpop.f32.mrb[0].mxu0
        %v1584 = vpop.f32.mrb[0].mxu0
        %v1585 = vpop.f32.mrb[0].mxu0
        %1586 = vdwg.mxu0
        %v1587 = vadd.f32 %v1539, %v1582
        %v1588 = vxor.u32 %v1587, 2147483648
        %v1589 = vmul.f32 %v1588, 1.442695
        %v1590 = vpow.pop %v1589
        %v1591 = vadd.f32 %v1590, 1.0
        %v1592 = vrcp.pop %v1591
        %v1593 = vmul.f32 1.0, %v1592
        %v1594 = vtanh.pop %v1587
        %v1595 = vmul.f32 %v1593, %v1525
        %1597 = vrot.lane.b32.xlu0 %v1594, 32
        %v1598 = vpop.permute.xlu0 %1597
        %v1600 = vmul.f32 %v1593, %v1598
        %1602 = vrot.lane.b32.xlu0 %v1600, 32
        %v1603 = vpop.permute.xlu0 %1602
        %v1605 = vadd.f32 %v1595, %v1603
        %v1606 = vtanh.pop %v1605
        %1608 = vrot.lane.b32.xlu0 %v1606, 32
        %v1609 = vpop.permute.xlu0 %1608
        %v1611 = vmul.f32 %v1593, %v1609
        %1613 = vrot.lane.b32.xlu0 %v1611, 64
        %v1614 = vpop.permute.xlu0 %1613
        %s1616 = scalar_lea.vmem [#allocation3], 48
        %1617 = vst.msk [vmem:[%s1616] sm:$0xff] %vm1064, %v1614
        %s1618 = scalar_lea.vmem [#allocation2], 56
        %v1619 = vld [vmem:[%s1618] sm:$0xff]
        %v1620 = vpack.c.bf16 %v1611, %v1611
        %1622 = vrot.lane.b32.xlu0 %v1620, 64
        %v1623 = vpop.permute.xlu0 %1622
        %v1625 = vsel %vm1064, %v1623, 0
        %1627 = vmatprep.subr.bf16.mxu0 0
        %1628 = vmatpush1.bf16.msra.mxu0 %v1060
        %1629 = vmatprep.subr.bf16.mxu0 0
        %1630 = vmatpush1.bf16.msra.mxu0 %v1061
        %1631 = vmatprep.subr.bf16.mxu0 0
        %1632 = vmatpush1.bf16.msra.mxu0 0
        %1633 = vmatprep.subr.bf16.mxu0 0
        %1634 = vmatpush1.bf16.msra.mxu0 0
        %1635 = vmatprep.subr.bf16.mxu0 0
        %1636 = vmatpush1.bf16.msra.mxu0 0
        %1637 = vmatprep.subr.bf16.mxu0 0
        %1638 = vmatpush1.bf16.msra.mxu0 0
        %1639 = vmatprep.subr.bf16.mxu0 0
        %1640 = vmatpush1.bf16.msra.mxu0 0
        %1641 = vmatprep.subr.bf16.mxu0 0
        %1642 = vmatpush1.bf16.msra.mxu0 0
        %1643 = vmatprep.subr.bf16.mxu0 0
        %1644 = vmatpush1.bf16.msra.mxu0 0
        %1645 = vmatprep.subr.bf16.mxu0 0
        %1646 = vmatpush1.bf16.msra.mxu0 0
        %1647 = vmatprep.subr.bf16.mxu0 0
        %1648 = vmatpush1.bf16.msra.mxu0 0
        %1649 = vmatprep.subr.bf16.mxu0 0
        %1650 = vmatpush1.bf16.msra.mxu0 0
        %1651 = vmatprep.subr.bf16.mxu0 0
        %1652 = vmatpush1.bf16.msra.mxu0 0
        %1653 = vmatprep.subr.bf16.mxu0 0
        %1654 = vmatpush1.bf16.msra.mxu0 0
        %1655 = vmatprep.subr.bf16.mxu0 0
        %1656 = vmatpush1.bf16.msra.mxu0 0
        %1657 = vmatprep.subr.bf16.mxu0 0
        %1658 = vmatpush1.bf16.msra.mxu0 0
        %1659 = vmatprep.mubr.bf16.mxu0 0
        %1660 = vmatmul.mubr.bf16.gmra.mrb[0].mxu0 %v1625
        %v1661 = vpop.f32.mrb[0].mxu0
        %v1662 = vadd.f32 0.0, %v1661
        %v1663 = vpop.f32.mrb[0].mxu0
        %v1664 = vpop.f32.mrb[0].mxu0
        %v1665 = vpop.f32.mrb[0].mxu0
        %1666 = vdwg.mxu0
        %v1667 = vadd.f32 %v1619, %v1662
        %v1668 = vxor.u32 %v1667, 2147483648
        %v1669 = vmul.f32 %v1668, 1.442695
        %v1670 = vpow.pop %v1669
        %v1671 = vadd.f32 %v1670, 1.0
        %v1672 = vrcp.pop %v1671
        %v1673 = vmul.f32 1.0, %v1672
        %v1674 = vtanh.pop %v1667
        %v1675 = vmul.f32 %v1673, %v1605
        %1677 = vrot.lane.b32.xlu0 %v1674, 32
        %v1678 = vpop.permute.xlu0 %1677
        %v1680 = vmul.f32 %v1673, %v1678
        %1682 = vrot.lane.b32.xlu0 %v1680, 32
        %v1683 = vpop.permute.xlu0 %1682
        %v1685 = vadd.f32 %v1675, %v1683
        %v1686 = vtanh.pop %v1685
        %1688 = vrot.lane.b32.xlu0 %v1686, 32
        %v1689 = vpop.permute.xlu0 %1688
        %v1691 = vmul.f32 %v1673, %v1689
        %1693 = vrot.lane.b32.xlu0 %v1691, 64
        %v1694 = vpop.permute.xlu0 %1693
        %s1696 = scalar_lea.vmem [#allocation3], 56
        %1697 = vst.msk [vmem:[%s1696] sm:$0xff] %vm1064, %v1694
        %v1698 = vld [vmem:[#allocation3] sm:$0xff]
        %v1699 = vld [vmem:[#allocation3 + $0x8] sm:$0xff]
        %v1700 = vld [vmem:[#allocation3 + $0x10] sm:$0xff]
        %v1701 = vld [vmem:[#allocation3 + $0x18] sm:$0xff]
        %v1702 = vld [vmem:[#allocation3 + $0x20] sm:$0xff]
        %v1703 = vld [vmem:[#allocation3 + $0x28] sm:$0xff]
        %v1704 = vld [vmem:[#allocation3 + $0x30] sm:$0xff]
        %v1705 = vld [vmem:[#allocation3 + $0x38] sm:$0xff]
        %v1706 = vmul.f32 %v1698, %v1694
        %v1707 = vmul.f32 %v1699, %v1694
        %v1708 = vmul.f32 %v1700, %v1694
        %v1709 = vmul.f32 %v1701, %v1694
        %v1710 = vmul.f32 %v1702, %v1694
        %v1711 = vmul.f32 %v1703, %v1694
        %v1712 = vmul.f32 %v1704, %v1694
        %v1713 = vmul.f32 %v1705, %v1694
        %v1714 = vsel %vm1064, %v1706, 0.0
        %1715 = vadd.xlane.f32.xlu0 %v1714
        %v1716 = vpop.xlane.xlu0 %1715
        %v1717 = vsel %vm1064, %v1707, 0.0
        %1718 = vadd.xlane.f32.xlu0 %v1717
        %v1719 = vpop.xlane.xlu0 %1718
        %v1720 = vsel %vm1064, %v1708, 0.0
        %1721 = vadd.xlane.f32.xlu0 %v1720
        %v1722 = vpop.xlane.xlu0 %1721
        %v1723 = vsel %vm1064, %v1709, 0.0
        %1724 = vadd.xlane.f32.xlu0 %v1723
        %v1725 = vpop.xlane.xlu0 %1724
        %v1726 = vsel %vm1064, %v1710, 0.0
        %1727 = vadd.xlane.f32.xlu0 %v1726
        %v1728 = vpop.xlane.xlu0 %1727
        %v1729 = vsel %vm1064, %v1711, 0.0
        %1730 = vadd.xlane.f32.xlu0 %v1729
        %v1731 = vpop.xlane.xlu0 %1730
        %v1732 = vsel %vm1064, %v1712, 0.0
        %1733 = vadd.xlane.f32.xlu0 %v1732
        %v1734 = vpop.xlane.xlu0 %1733
        %v1735 = vsel %vm1064, %v1713, 0.0
        %1736 = vadd.xlane.f32.xlu0 %v1735
        %v1737 = vpop.xlane.xlu0 %1736
        %v1738 = vxor.u32 %v1716, 2147483648
        %v1739 = vxor.u32 %v1719, 2147483648
        %v1740 = vxor.u32 %v1722, 2147483648
        %v1741 = vxor.u32 %v1725, 2147483648
        %v1742 = vxor.u32 %v1728, 2147483648
        %v1743 = vxor.u32 %v1731, 2147483648
        %v1744 = vxor.u32 %v1734, 2147483648
        %v1745 = vxor.u32 %v1737, 2147483648
        %v1746 = vmul.f32 %v1738, 1.442695
        %v1747 = vpow.pop %v1746
        %v1748 = vmul.f32 %v1739, 1.442695
        %v1749 = vpow.pop %v1748
        %v1750 = vmul.f32 %v1740, 1.442695
        %v1751 = vpow.pop %v1750
        %v1752 = vmul.f32 %v1741, 1.442695
        %v1753 = vpow.pop %v1752
        %v1754 = vmul.f32 %v1742, 1.442695
        %v1755 = vpow.pop %v1754
        %v1756 = vmul.f32 %v1743, 1.442695
        %v1757 = vpow.pop %v1756
        %v1758 = vmul.f32 %v1744, 1.442695
        %v1759 = vpow.pop %v1758
        %v1760 = vmul.f32 %v1745, 1.442695
        %v1761 = vpow.pop %v1760
        %v1762 = vadd.f32 %v1747, 1.0
        %v1763 = vadd.f32 %v1749, 1.0
        %v1764 = vadd.f32 %v1751, 1.0
        %v1765 = vadd.f32 %v1753, 1.0
        %v1766 = vadd.f32 %v1755, 1.0
        %v1767 = vadd.f32 %v1757, 1.0
        %v1768 = vadd.f32 %v1759, 1.0
        %v1769 = vadd.f32 %v1761, 1.0
        %v1770 = vrcp.pop %v1762
        %v1771 = vmul.f32 1.0, %v1770
        %v1772 = vrcp.pop %v1763
        %v1773 = vmul.f32 1.0, %v1772
        %v1774 = vrcp.pop %v1764
        %v1775 = vmul.f32 1.0, %v1774
        %v1776 = vrcp.pop %v1765
        %v1777 = vmul.f32 1.0, %v1776
        %v1778 = vrcp.pop %v1766
        %v1779 = vmul.f32 1.0, %v1778
        %v1780 = vrcp.pop %v1767
        %v1781 = vmul.f32 1.0, %v1780
        %v1782 = vrcp.pop %v1768
        %v1783 = vmul.f32 1.0, %v1782
        %v1784 = vrcp.pop %v1769
        %v1785 = vmul.f32 1.0, %v1784
        %v1786 = vmul.f32 %v1771, %v1698
        %v1787 = vmul.f32 %v1773, %v1699
        %v1788 = vmul.f32 %v1775, %v1700
        %v1789 = vmul.f32 %v1777, %v1701
        %v1790 = vmul.f32 %v1779, %v1702
        %v1791 = vmul.f32 %v1781, %v1703
        %v1792 = vmul.f32 %v1783, %v1704
        %v1793 = vmul.f32 %v1785, %v1705
        %v1794 = vsel %vm1064, %v1786, 0.0
        %v1795 = vsel %vm1064, %v1787, 0.0
        %v1796 = vadd.f32 %v1794, %v1795
        %v1797 = vsel %vm1064, %v1788, 0.0
        %v1798 = vadd.f32 %v1796, %v1797
        %v1799 = vsel %vm1064, %v1789, 0.0
        %v1800 = vadd.f32 %v1798, %v1799
        %v1801 = vsel %vm1064, %v1790, 0.0
        %v1802 = vadd.f32 %v1800, %v1801
        %v1803 = vsel %vm1064, %v1791, 0.0
        %v1804 = vadd.f32 %v1802, %v1803
        %v1805 = vsel %vm1064, %v1792, 0.0
        %v1806 = vadd.f32 %v1804, %v1805
        %v1807 = vsel %vm1064, %v1793, 0.0
        %v1808 = vadd.f32 %v1806, %v1807
        %v1809 = vrcp.pop 8.0
        %v1810 = vmul.f32 %v1808, %v1809
        %v1811 = vld [vmem:[%s907] sm:$0xf]
        %v1812 = vld [vmem:[%s907 + $0x4] sm:$0xf]
        %v1813 = vld [vmem:[%s907 + $0x8] sm:$0x1]
        %v1814 = vld [vmem:[%s907 + $0xc] sm:$0xf]
        %v1815 = vld [vmem:[%s907 + $0x10] sm:$0xf]
        %v1816 = vld [vmem:[%s907 + $0x14] sm:$0x1]
        %v1817 = vld [vmem:[%s907 + $0x18] sm:$0xf]
        %v1818 = vld [vmem:[%s907 + $0x1c] sm:$0xf]
        %v1819 = vld [vmem:[%s907 + $0x20] sm:$0x1]
        %v1820 = vld [vmem:[%s907 + $0x24] sm:$0xf]
        %v1821 = vld [vmem:[%s907 + $0x28] sm:$0xf]
        %v1822 = vld [vmem:[%s907 + $0x2c] sm:$0x1]
        %v1823 = vld [vmem:[%s907 + $0x30] sm:$0xf]
        %v1824 = vld [vmem:[%s907 + $0x34] sm:$0xf]
        %v1825 = vld [vmem:[%s907 + $0x38] sm:$0x1]
        %v1826 = vld [vmem:[%s907 + $0x3c] sm:$0xf]
        %v1827 = vld [vmem:[%s907 + $0x40] sm:$0xf]
        %v1828 = vld [vmem:[%s907 + $0x44] sm:$0x1]
        %v1829 = vld [vmem:[%s907 + $0x48] sm:$0xf]
        %v1830 = vld [vmem:[%s907 + $0x4c] sm:$0xf]
        %v1831 = vld [vmem:[%s907 + $0x50] sm:$0x1]
        %v1832 = vld [vmem:[%s907 + $0x54] sm:$0xf]
        %v1833 = vld [vmem:[%s907 + $0x58] sm:$0xf]
        %v1834 = vld [vmem:[%s907 + $0x5c] sm:$0x1]
        %v1860 = vunpack.c.l.s4 1966171168
        %v1861 = vunpack.c.0.s8 %v1860
        %v1862 = vlaneseq
        %v1863 = vshrl.u32 %v1862, 7
        %v1864 = vsub.s32 %v1861, %v1863
        %v1865 = vrot.slane %v1811, %v1864
        %v1866 = vcombine.high %v1865, %v1865
        %v1868 = vunpack.c.l.s4 1966171168
        %v1869 = vunpack.c.0.s8 %v1868
        %v1870 = vlaneseq
        %v1871 = vshrl.u32 %v1870, 7
        %v1872 = vsub.s32 %v1869, %v1871
        %v1873 = vrot.slane %v1865, %v1872
        %v1875 = vunpack.c.l.s4 1966171168
        %v1876 = vunpack.c.0.s8 %v1875
        %v1877 = vlaneseq
        %v1878 = vshrl.u32 %v1877, 7
        %v1879 = vsub.s32 %v1876, %v1878
        %v1880 = vrot.slane %v1866, %v1879
        %v1881 = vcombine.high %v1873, %v1873
        %v1882 = vcombine.high %v1880, %v1880
        %v1884 = vunpack.c.l.s4 1966171168
        %v1885 = vunpack.c.0.s8 %v1884
        %v1886 = vlaneseq
        %v1887 = vshrl.u32 %v1886, 7
        %v1888 = vsub.s32 %v1885, %v1887
        %v1889 = vrot.slane %v1812, %v1888
        %v1890 = vcombine.high %v1889, %v1889
        %v1892 = vunpack.c.l.s4 1966171168
        %v1893 = vunpack.c.0.s8 %v1892
        %v1894 = vlaneseq
        %v1895 = vshrl.u32 %v1894, 7
        %v1896 = vsub.s32 %v1893, %v1895
        %v1897 = vrot.slane %v1889, %v1896
        %v1899 = vunpack.c.l.s4 1966171168
        %v1900 = vunpack.c.0.s8 %v1899
        %v1901 = vlaneseq
        %v1902 = vshrl.u32 %v1901, 7
        %v1903 = vsub.s32 %v1900, %v1902
        %v1904 = vrot.slane %v1890, %v1903
        %v1905 = vcombine.high %v1897, %v1897
        %v1906 = vcombine.high %v1904, %v1904
        %v1908 = vunpack.c.l.s4 1966171168
        %v1909 = vunpack.c.0.s8 %v1908
        %v1910 = vlaneseq
        %v1911 = vshrl.u32 %v1910, 7
        %v1912 = vsub.s32 %v1909, %v1911
        %v1913 = vrot.slane %v1813, %v1912
        %v1915 = vunpack.c.l.s4 1966171168
        %v1916 = vunpack.c.0.s8 %v1915
        %v1917 = vlaneseq
        %v1918 = vshrl.u32 %v1917, 7
        %v1919 = vsub.s32 %v1916, %v1918
        %v1920 = vrot.slane %v1913, %v1919
        %v1922 = vunpack.c.l.s4 1966171168
        %v1923 = vunpack.c.0.s8 %v1922
        %v1924 = vlaneseq
        %v1925 = vshrl.u32 %v1924, 7
        %v1926 = vsub.s32 %v1923, %v1925
        %v1927 = vrot.slane %v1814, %v1926
        %v1928 = vcombine.high %v1927, %v1927
        %v1930 = vunpack.c.l.s4 1966171168
        %v1931 = vunpack.c.0.s8 %v1930
        %v1932 = vlaneseq
        %v1933 = vshrl.u32 %v1932, 7
        %v1934 = vsub.s32 %v1931, %v1933
        %v1935 = vrot.slane %v1927, %v1934
        %v1937 = vunpack.c.l.s4 1966171168
        %v1938 = vunpack.c.0.s8 %v1937
        %v1939 = vlaneseq
        %v1940 = vshrl.u32 %v1939, 7
        %v1941 = vsub.s32 %v1938, %v1940
        %v1942 = vrot.slane %v1928, %v1941
        %v1943 = vcombine.high %v1935, %v1935
        %v1944 = vcombine.high %v1942, %v1942
        %v1946 = vunpack.c.l.s4 1966171168
        %v1947 = vunpack.c.0.s8 %v1946
        %v1948 = vlaneseq
        %v1949 = vshrl.u32 %v1948, 7
        %v1950 = vsub.s32 %v1947, %v1949
        %v1951 = vrot.slane %v1815, %v1950
        %v1952 = vcombine.high %v1951, %v1951
        %v1954 = vunpack.c.l.s4 1966171168
        %v1955 = vunpack.c.0.s8 %v1954
        %v1956 = vlaneseq
        %v1957 = vshrl.u32 %v1956, 7
        %v1958 = vsub.s32 %v1955, %v1957
        %v1959 = vrot.slane %v1951, %v1958
        %v1961 = vunpack.c.l.s4 1966171168
        %v1962 = vunpack.c.0.s8 %v1961
        %v1963 = vlaneseq
        %v1964 = vshrl.u32 %v1963, 7
        %v1965 = vsub.s32 %v1962, %v1964
        %v1966 = vrot.slane %v1952, %v1965
        %v1967 = vcombine.high %v1959, %v1959
        %v1968 = vcombine.high %v1966, %v1966
        %v1970 = vunpack.c.l.s4 1966171168
        %v1971 = vunpack.c.0.s8 %v1970
        %v1972 = vlaneseq
        %v1973 = vshrl.u32 %v1972, 7
        %v1974 = vsub.s32 %v1971, %v1973
        %v1975 = vrot.slane %v1816, %v1974
        %v1977 = vunpack.c.l.s4 1966171168
        %v1978 = vunpack.c.0.s8 %v1977
        %v1979 = vlaneseq
        %v1980 = vshrl.u32 %v1979, 7
        %v1981 = vsub.s32 %v1978, %v1980
        %v1982 = vrot.slane %v1975, %v1981
        %v1984 = vunpack.c.l.s4 1966171168
        %v1985 = vunpack.c.0.s8 %v1984
        %v1986 = vlaneseq
        %v1987 = vshrl.u32 %v1986, 7
        %v1988 = vsub.s32 %v1985, %v1987
        %v1989 = vrot.slane %v1817, %v1988
        %v1990 = vcombine.high %v1989, %v1989
        %v1992 = vunpack.c.l.s4 1966171168
        %v1993 = vunpack.c.0.s8 %v1992
        %v1994 = vlaneseq
        %v1995 = vshrl.u32 %v1994, 7
        %v1996 = vsub.s32 %v1993, %v1995
        %v1997 = vrot.slane %v1989, %v1996
        %v1999 = vunpack.c.l.s4 1966171168
        %v2000 = vunpack.c.0.s8 %v1999
        %v2001 = vlaneseq
        %v2002 = vshrl.u32 %v2001, 7
        %v2003 = vsub.s32 %v2000, %v2002
        %v2004 = vrot.slane %v1990, %v2003
        %v2005 = vcombine.high %v1997, %v1997
        %v2006 = vcombine.high %v2004, %v2004
        %v2008 = vunpack.c.l.s4 1966171168
        %v2009 = vunpack.c.0.s8 %v2008
        %v2010 = vlaneseq
        %v2011 = vshrl.u32 %v2010, 7
        %v2012 = vsub.s32 %v2009, %v2011
        %v2013 = vrot.slane %v1818, %v2012
        %v2014 = vcombine.high %v2013, %v2013
        %v2016 = vunpack.c.l.s4 1966171168
        %v2017 = vunpack.c.0.s8 %v2016
        %v2018 = vlaneseq
        %v2019 = vshrl.u32 %v2018, 7
        %v2020 = vsub.s32 %v2017, %v2019
        %v2021 = vrot.slane %v2013, %v2020
        %v2023 = vunpack.c.l.s4 1966171168
        %v2024 = vunpack.c.0.s8 %v2023
        %v2025 = vlaneseq
        %v2026 = vshrl.u32 %v2025, 7
        %v2027 = vsub.s32 %v2024, %v2026
        %v2028 = vrot.slane %v2014, %v2027
        %v2029 = vcombine.high %v2021, %v2021
        %v2030 = vcombine.high %v2028, %v2028
        %v2032 = vunpack.c.l.s4 1966171168
        %v2033 = vunpack.c.0.s8 %v2032
        %v2034 = vlaneseq
        %v2035 = vshrl.u32 %v2034, 7
        %v2036 = vsub.s32 %v2033, %v2035
        %v2037 = vrot.slane %v1819, %v2036
        %v2039 = vunpack.c.l.s4 1966171168
        %v2040 = vunpack.c.0.s8 %v2039
        %v2041 = vlaneseq
        %v2042 = vshrl.u32 %v2041, 7
        %v2043 = vsub.s32 %v2040, %v2042
        %v2044 = vrot.slane %v2037, %v2043
        %v2046 = vunpack.c.l.s4 1966171168
        %v2047 = vunpack.c.0.s8 %v2046
        %v2048 = vlaneseq
        %v2049 = vshrl.u32 %v2048, 7
        %v2050 = vsub.s32 %v2047, %v2049
        %v2051 = vrot.slane %v1820, %v2050
        %v2052 = vcombine.high %v2051, %v2051
        %v2054 = vunpack.c.l.s4 1966171168
        %v2055 = vunpack.c.0.s8 %v2054
        %v2056 = vlaneseq
        %v2057 = vshrl.u32 %v2056, 7
        %v2058 = vsub.s32 %v2055, %v2057
        %v2059 = vrot.slane %v2051, %v2058
        %v2061 = vunpack.c.l.s4 1966171168
        %v2062 = vunpack.c.0.s8 %v2061
        %v2063 = vlaneseq
        %v2064 = vshrl.u32 %v2063, 7
        %v2065 = vsub.s32 %v2062, %v2064
        %v2066 = vrot.slane %v2052, %v2065
        %v2067 = vcombine.high %v2059, %v2059
        %v2068 = vcombine.high %v2066, %v2066
        %v2070 = vunpack.c.l.s4 1966171168
        %v2071 = vunpack.c.0.s8 %v2070
        %v2072 = vlaneseq
        %v2073 = vshrl.u32 %v2072, 7
        %v2074 = vsub.s32 %v2071, %v2073
        %v2075 = vrot.slane %v1821, %v2074
        %v2076 = vcombine.high %v2075, %v2075
        %v2078 = vunpack.c.l.s4 1966171168
        %v2079 = vunpack.c.0.s8 %v2078
        %v2080 = vlaneseq
        %v2081 = vshrl.u32 %v2080, 7
        %v2082 = vsub.s32 %v2079, %v2081
        %v2083 = vrot.slane %v2075, %v2082
        %v2085 = vunpack.c.l.s4 1966171168
        %v2086 = vunpack.c.0.s8 %v2085
        %v2087 = vlaneseq
        %v2088 = vshrl.u32 %v2087, 7
        %v2089 = vsub.s32 %v2086, %v2088
        %v2090 = vrot.slane %v2076, %v2089
        %v2091 = vcombine.high %v2083, %v2083
        %v2092 = vcombine.high %v2090, %v2090
        %v2094 = vunpack.c.l.s4 1966171168
        %v2095 = vunpack.c.0.s8 %v2094
        %v2096 = vlaneseq
        %v2097 = vshrl.u32 %v2096, 7
        %v2098 = vsub.s32 %v2095, %v2097
        %v2099 = vrot.slane %v1822, %v2098
        %v2101 = vunpack.c.l.s4 1966171168
        %v2102 = vunpack.c.0.s8 %v2101
        %v2103 = vlaneseq
        %v2104 = vshrl.u32 %v2103, 7
        %v2105 = vsub.s32 %v2102, %v2104
        %v2106 = vrot.slane %v2099, %v2105
        %v2108 = vunpack.c.l.s4 1966171168
        %v2109 = vunpack.c.0.s8 %v2108
        %v2110 = vlaneseq
        %v2111 = vshrl.u32 %v2110, 7
        %v2112 = vsub.s32 %v2109, %v2111
        %v2113 = vrot.slane %v1823, %v2112
        %v2114 = vcombine.high %v2113, %v2113
        %v2116 = vunpack.c.l.s4 1966171168
        %v2117 = vunpack.c.0.s8 %v2116
        %v2118 = vlaneseq
        %v2119 = vshrl.u32 %v2118, 7
        %v2120 = vsub.s32 %v2117, %v2119
        %v2121 = vrot.slane %v2113, %v2120
        %v2123 = vunpack.c.l.s4 1966171168
        %v2124 = vunpack.c.0.s8 %v2123
        %v2125 = vlaneseq
        %v2126 = vshrl.u32 %v2125, 7
        %v2127 = vsub.s32 %v2124, %v2126
        %v2128 = vrot.slane %v2114, %v2127
        %v2129 = vcombine.high %v2121, %v2121
        %v2130 = vcombine.high %v2128, %v2128
        %v2132 = vunpack.c.l.s4 1966171168
        %v2133 = vunpack.c.0.s8 %v2132
        %v2134 = vlaneseq
        %v2135 = vshrl.u32 %v2134, 7
        %v2136 = vsub.s32 %v2133, %v2135
        %v2137 = vrot.slane %v1824, %v2136
        %v2138 = vcombine.high %v2137, %v2137
        %v2140 = vunpack.c.l.s4 1966171168
        %v2141 = vunpack.c.0.s8 %v2140
        %v2142 = vlaneseq
        %v2143 = vshrl.u32 %v2142, 7
        %v2144 = vsub.s32 %v2141, %v2143
        %v2145 = vrot.slane %v2137, %v2144
        %v2147 = vunpack.c.l.s4 1966171168
        %v2148 = vunpack.c.0.s8 %v2147
        %v2149 = vlaneseq
        %v2150 = vshrl.u32 %v2149, 7
        %v2151 = vsub.s32 %v2148, %v2150
        %v2152 = vrot.slane %v2138, %v2151
        %v2153 = vcombine.high %v2145, %v2145
        %v2154 = vcombine.high %v2152, %v2152
        %v2156 = vunpack.c.l.s4 1966171168
        %v2157 = vunpack.c.0.s8 %v2156
        %v2158 = vlaneseq
        %v2159 = vshrl.u32 %v2158, 7
        %v2160 = vsub.s32 %v2157, %v2159
        %v2161 = vrot.slane %v1825, %v2160
        %v2163 = vunpack.c.l.s4 1966171168
        %v2164 = vunpack.c.0.s8 %v2163
        %v2165 = vlaneseq
        %v2166 = vshrl.u32 %v2165, 7
        %v2167 = vsub.s32 %v2164, %v2166
        %v2168 = vrot.slane %v2161, %v2167
        %v2170 = vunpack.c.l.s4 1966171168
        %v2171 = vunpack.c.0.s8 %v2170
        %v2172 = vlaneseq
        %v2173 = vshrl.u32 %v2172, 7
        %v2174 = vsub.s32 %v2171, %v2173
        %v2175 = vrot.slane %v1826, %v2174
        %v2176 = vcombine.high %v2175, %v2175
        %v2178 = vunpack.c.l.s4 1966171168
        %v2179 = vunpack.c.0.s8 %v2178
        %v2180 = vlaneseq
        %v2181 = vshrl.u32 %v2180, 7
        %v2182 = vsub.s32 %v2179, %v2181
        %v2183 = vrot.slane %v2175, %v2182
        %v2185 = vunpack.c.l.s4 1966171168
        %v2186 = vunpack.c.0.s8 %v2185
        %v2187 = vlaneseq
        %v2188 = vshrl.u32 %v2187, 7
        %v2189 = vsub.s32 %v2186, %v2188
        %v2190 = vrot.slane %v2176, %v2189
        %v2191 = vcombine.high %v2183, %v2183
        %v2192 = vcombine.high %v2190, %v2190
        %v2194 = vunpack.c.l.s4 1966171168
        %v2195 = vunpack.c.0.s8 %v2194
        %v2196 = vlaneseq
        %v2197 = vshrl.u32 %v2196, 7
        %v2198 = vsub.s32 %v2195, %v2197
        %v2199 = vrot.slane %v1827, %v2198
        %v2200 = vcombine.high %v2199, %v2199
        %v2202 = vunpack.c.l.s4 1966171168
        %v2203 = vunpack.c.0.s8 %v2202
        %v2204 = vlaneseq
        %v2205 = vshrl.u32 %v2204, 7
        %v2206 = vsub.s32 %v2203, %v2205
        %v2207 = vrot.slane %v2199, %v2206
        %v2209 = vunpack.c.l.s4 1966171168
        %v2210 = vunpack.c.0.s8 %v2209
        %v2211 = vlaneseq
        %v2212 = vshrl.u32 %v2211, 7
        %v2213 = vsub.s32 %v2210, %v2212
        %v2214 = vrot.slane %v2200, %v2213
        %v2215 = vcombine.high %v2207, %v2207
        %v2216 = vcombine.high %v2214, %v2214
        %v2218 = vunpack.c.l.s4 1966171168
        %v2219 = vunpack.c.0.s8 %v2218
        %v2220 = vlaneseq
        %v2221 = vshrl.u32 %v2220, 7
        %v2222 = vsub.s32 %v2219, %v2221
        %v2223 = vrot.slane %v1828, %v2222
        %v2225 = vunpack.c.l.s4 1966171168
        %v2226 = vunpack.c.0.s8 %v2225
        %v2227 = vlaneseq
        %v2228 = vshrl.u32 %v2227, 7
        %v2229 = vsub.s32 %v2226, %v2228
        %v2230 = vrot.slane %v2223, %v2229
        %v2232 = vunpack.c.l.s4 1966171168
        %v2233 = vunpack.c.0.s8 %v2232
        %v2234 = vlaneseq
        %v2235 = vshrl.u32 %v2234, 7
        %v2236 = vsub.s32 %v2233, %v2235
        %v2237 = vrot.slane %v1829, %v2236
        %v2238 = vcombine.high %v2237, %v2237
        %v2240 = vunpack.c.l.s4 1966171168
        %v2241 = vunpack.c.0.s8 %v2240
        %v2242 = vlaneseq
        %v2243 = vshrl.u32 %v2242, 7
        %v2244 = vsub.s32 %v2241, %v2243
        %v2245 = vrot.slane %v2237, %v2244
        %v2247 = vunpack.c.l.s4 1966171168
        %v2248 = vunpack.c.0.s8 %v2247
        %v2249 = vlaneseq
        %v2250 = vshrl.u32 %v2249, 7
        %v2251 = vsub.s32 %v2248, %v2250
        %v2252 = vrot.slane %v2238, %v2251
        %v2253 = vcombine.high %v2245, %v2245
        %v2254 = vcombine.high %v2252, %v2252
        %v2256 = vunpack.c.l.s4 1966171168
        %v2257 = vunpack.c.0.s8 %v2256
        %v2258 = vlaneseq
        %v2259 = vshrl.u32 %v2258, 7
        %v2260 = vsub.s32 %v2257, %v2259
        %v2261 = vrot.slane %v1830, %v2260
        %v2262 = vcombine.high %v2261, %v2261
        %v2264 = vunpack.c.l.s4 1966171168
        %v2265 = vunpack.c.0.s8 %v2264
        %v2266 = vlaneseq
        %v2267 = vshrl.u32 %v2266, 7
        %v2268 = vsub.s32 %v2265, %v2267
        %v2269 = vrot.slane %v2261, %v2268
        %v2271 = vunpack.c.l.s4 1966171168
        %v2272 = vunpack.c.0.s8 %v2271
        %v2273 = vlaneseq
        %v2274 = vshrl.u32 %v2273, 7
        %v2275 = vsub.s32 %v2272, %v2274
        %v2276 = vrot.slane %v2262, %v2275
        %v2277 = vcombine.high %v2269, %v2269
        %v2278 = vcombine.high %v2276, %v2276
        %v2280 = vunpack.c.l.s4 1966171168
        %v2281 = vunpack.c.0.s8 %v2280
        %v2282 = vlaneseq
        %v2283 = vshrl.u32 %v2282, 7
        %v2284 = vsub.s32 %v2281, %v2283
        %v2285 = vrot.slane %v1831, %v2284
        %v2287 = vunpack.c.l.s4 1966171168
        %v2288 = vunpack.c.0.s8 %v2287
        %v2289 = vlaneseq
        %v2290 = vshrl.u32 %v2289, 7
        %v2291 = vsub.s32 %v2288, %v2290
        %v2292 = vrot.slane %v2285, %v2291
        %v2294 = vunpack.c.l.s4 1966171168
        %v2295 = vunpack.c.0.s8 %v2294
        %v2296 = vlaneseq
        %v2297 = vshrl.u32 %v2296, 7
        %v2298 = vsub.s32 %v2295, %v2297
        %v2299 = vrot.slane %v1832, %v2298
        %v2300 = vcombine.high %v2299, %v2299
        %v2302 = vunpack.c.l.s4 1966171168
        %v2303 = vunpack.c.0.s8 %v2302
        %v2304 = vlaneseq
        %v2305 = vshrl.u32 %v2304, 7
        %v2306 = vsub.s32 %v2303, %v2305
        %v2307 = vrot.slane %v2299, %v2306
        %v2309 = vunpack.c.l.s4 1966171168
        %v2310 = vunpack.c.0.s8 %v2309
        %v2311 = vlaneseq
        %v2312 = vshrl.u32 %v2311, 7
        %v2313 = vsub.s32 %v2310, %v2312
        %v2314 = vrot.slane %v2300, %v2313
        %v2315 = vcombine.high %v2307, %v2307
        %v2316 = vcombine.high %v2314, %v2314
        %v2318 = vunpack.c.l.s4 1966171168
        %v2319 = vunpack.c.0.s8 %v2318
        %v2320 = vlaneseq
        %v2321 = vshrl.u32 %v2320, 7
        %v2322 = vsub.s32 %v2319, %v2321
        %v2323 = vrot.slane %v1833, %v2322
        %v2324 = vcombine.high %v2323, %v2323
        %v2326 = vunpack.c.l.s4 1966171168
        %v2327 = vunpack.c.0.s8 %v2326
        %v2328 = vlaneseq
        %v2329 = vshrl.u32 %v2328, 7
        %v2330 = vsub.s32 %v2327, %v2329
        %v2331 = vrot.slane %v2323, %v2330
        %v2333 = vunpack.c.l.s4 1966171168
        %v2334 = vunpack.c.0.s8 %v2333
        %v2335 = vlaneseq
        %v2336 = vshrl.u32 %v2335, 7
        %v2337 = vsub.s32 %v2334, %v2336
        %v2338 = vrot.slane %v2324, %v2337
        %v2339 = vcombine.high %v2331, %v2331
        %v2340 = vcombine.high %v2338, %v2338
        %v2342 = vunpack.c.l.s4 1966171168
        %v2343 = vunpack.c.0.s8 %v2342
        %v2344 = vlaneseq
        %v2345 = vshrl.u32 %v2344, 7
        %v2346 = vsub.s32 %v2343, %v2345
        %v2347 = vrot.slane %v1834, %v2346
        %v2349 = vunpack.c.l.s4 1966171168
        %v2350 = vunpack.c.0.s8 %v2349
        %v2351 = vlaneseq
        %v2352 = vshrl.u32 %v2351, 7
        %v2353 = vsub.s32 %v2350, %v2352
        %v2354 = vrot.slane %v2347, %v2353
        %v2355 = vld [vmem:[%s6] sm:$0xf]
        %v2356 = vld [vmem:[%s6 + $0x4] sm:$0xf]
        %v2357 = vcombine.low %v1873, %v1880
        %v2358 = vcombine.low %v1881, %v1882
        %v2359 = vcombine.low %v1897, %v1904
        %v2360 = vcombine.low %v1905, %v1906
        %v2362 = vunpack.c.l.s4 1966171168
        %v2363 = vunpack.c.0.s8 %v2362
        %v2364 = vlaneseq
        %v2365 = vshrl.u32 %v2364, 7
        %v2366 = vsub.s32 %v2363, %v2365
        %v2367 = vrot.slane %v2357, %v2366
        %v2369 = vunpack.c.l.s4 1966171168
        %v2370 = vunpack.c.0.s8 %v2369
        %v2371 = vlaneseq
        %v2372 = vshrl.u32 %v2371, 7
        %v2373 = vsub.s32 %v2370, %v2372
        %v2374 = vrot.slane %v2358, %v2373
        %v2376 = vunpack.c.l.s4 1966171168
        %v2377 = vunpack.c.0.s8 %v2376
        %v2378 = vlaneseq
        %v2379 = vshrl.u32 %v2378, 7
        %v2380 = vsub.s32 %v2377, %v2379
        %v2381 = vrot.slane %v2359, %v2380
        %v2383 = vunpack.c.l.s4 1966171168
        %v2384 = vunpack.c.0.s8 %v2383
        %v2385 = vlaneseq
        %v2386 = vshrl.u32 %v2385, 7
        %v2387 = vsub.s32 %v2384, %v2386
        %v2388 = vrot.slane %v2360, %v2387
        %v2389 = vcombine.low %v2367, %v2374
        %v2390 = vcombine.low %v2381, %v2388
        %v2392 = vunpack.c.l.s4 1966171168
        %v2393 = vunpack.c.0.s8 %v2392
        %v2394 = vlaneseq
        %v2395 = vshrl.u32 %v2394, 7
        %v2396 = vsub.s32 %v2393, %v2395
        %v2397 = vrot.slane %v2389, %v2396
        %v2399 = vunpack.c.l.s4 1966171168
        %v2400 = vunpack.c.0.s8 %v2399
        %v2401 = vlaneseq
        %v2402 = vshrl.u32 %v2401, 7
        %v2403 = vsub.s32 %v2400, %v2402
        %v2404 = vrot.slane %v2390, %v2403
        %v2405 = vcombine.low %v2397, %v2404
        %v2406 = vcombine.low %v1920, %v1935
        %v2407 = vcombine.low %v1942, %v1943
        %v2408 = vcombine.low %v1944, %v1959
        %v2409 = vcombine.low %v1966, %v1967
        %v2411 = vunpack.c.l.s4 1966171168
        %v2412 = vunpack.c.0.s8 %v2411
        %v2413 = vlaneseq
        %v2414 = vshrl.u32 %v2413, 7
        %v2415 = vsub.s32 %v2412, %v2414
        %v2416 = vrot.slane %v2406, %v2415
        %v2418 = vunpack.c.l.s4 1966171168
        %v2419 = vunpack.c.0.s8 %v2418
        %v2420 = vlaneseq
        %v2421 = vshrl.u32 %v2420, 7
        %v2422 = vsub.s32 %v2419, %v2421
        %v2423 = vrot.slane %v2407, %v2422
        %v2425 = vunpack.c.l.s4 1966171168
        %v2426 = vunpack.c.0.s8 %v2425
        %v2427 = vlaneseq
        %v2428 = vshrl.u32 %v2427, 7
        %v2429 = vsub.s32 %v2426, %v2428
        %v2430 = vrot.slane %v2408, %v2429
        %v2432 = vunpack.c.l.s4 1966171168
        %v2433 = vunpack.c.0.s8 %v2432
        %v2434 = vlaneseq
        %v2435 = vshrl.u32 %v2434, 7
        %v2436 = vsub.s32 %v2433, %v2435
        %v2437 = vrot.slane %v2409, %v2436
        %v2438 = vcombine.low %v2416, %v2423
        %v2439 = vcombine.low %v2430, %v2437
        %v2441 = vunpack.c.l.s4 1966171168
        %v2442 = vunpack.c.0.s8 %v2441
        %v2443 = vlaneseq
        %v2444 = vshrl.u32 %v2443, 7
        %v2445 = vsub.s32 %v2442, %v2444
        %v2446 = vrot.slane %v2438, %v2445
        %v2448 = vunpack.c.l.s4 1966171168
        %v2449 = vunpack.c.0.s8 %v2448
        %v2450 = vlaneseq
        %v2451 = vshrl.u32 %v2450, 7
        %v2452 = vsub.s32 %v2449, %v2451
        %v2453 = vrot.slane %v2439, %v2452
        %v2454 = vcombine.low %v2446, %v2453
        %v2455 = vcombine.low %v1968, %v1982
        %v2456 = vcombine.low %v1997, %v2004
        %v2457 = vcombine.low %v2005, %v2006
        %v2458 = vcombine.low %v2021, %v2028
        %v2460 = vunpack.c.l.s4 1966171168
        %v2461 = vunpack.c.0.s8 %v2460
        %v2462 = vlaneseq
        %v2463 = vshrl.u32 %v2462, 7
        %v2464 = vsub.s32 %v2461, %v2463
        %v2465 = vrot.slane %v2455, %v2464
        %v2467 = vunpack.c.l.s4 1966171168
        %v2468 = vunpack.c.0.s8 %v2467
        %v2469 = vlaneseq
        %v2470 = vshrl.u32 %v2469, 7
        %v2471 = vsub.s32 %v2468, %v2470
        %v2472 = vrot.slane %v2456, %v2471
        %v2474 = vunpack.c.l.s4 1966171168
        %v2475 = vunpack.c.0.s8 %v2474
        %v2476 = vlaneseq
        %v2477 = vshrl.u32 %v2476, 7
        %v2478 = vsub.s32 %v2475, %v2477
        %v2479 = vrot.slane %v2457, %v2478
        %v2481 = vunpack.c.l.s4 1966171168
        %v2482 = vunpack.c.0.s8 %v2481
        %v2483 = vlaneseq
        %v2484 = vshrl.u32 %v2483, 7
        %v2485 = vsub.s32 %v2482, %v2484
        %v2486 = vrot.slane %v2458, %v2485
        %v2487 = vcombine.low %v2465, %v2472
        %v2488 = vcombine.low %v2479, %v2486
        %v2490 = vunpack.c.l.s4 1966171168
        %v2491 = vunpack.c.0.s8 %v2490
        %v2492 = vlaneseq
        %v2493 = vshrl.u32 %v2492, 7
        %v2494 = vsub.s32 %v2491, %v2493
        %v2495 = vrot.slane %v2487, %v2494
        %v2497 = vunpack.c.l.s4 1966171168
        %v2498 = vunpack.c.0.s8 %v2497
        %v2499 = vlaneseq
        %v2500 = vshrl.u32 %v2499, 7
        %v2501 = vsub.s32 %v2498, %v2500
        %v2502 = vrot.slane %v2488, %v2501
        %v2503 = vcombine.low %v2495, %v2502
        %v2504 = vcombine.low %v2029, %v2030
        %v2505 = vcombine.low %v2044, %v2059
        %v2506 = vcombine.low %v2066, %v2067
        %v2507 = vcombine.low %v2068, %v2083
        %v2509 = vunpack.c.l.s4 1966171168
        %v2510 = vunpack.c.0.s8 %v2509
        %v2511 = vlaneseq
        %v2512 = vshrl.u32 %v2511, 7
        %v2513 = vsub.s32 %v2510, %v2512
        %v2514 = vrot.slane %v2504, %v2513
        %v2516 = vunpack.c.l.s4 1966171168
        %v2517 = vunpack.c.0.s8 %v2516
        %v2518 = vlaneseq
        %v2519 = vshrl.u32 %v2518, 7
        %v2520 = vsub.s32 %v2517, %v2519
        %v2521 = vrot.slane %v2505, %v2520
        %v2523 = vunpack.c.l.s4 1966171168
        %v2524 = vunpack.c.0.s8 %v2523
        %v2525 = vlaneseq
        %v2526 = vshrl.u32 %v2525, 7
        %v2527 = vsub.s32 %v2524, %v2526
        %v2528 = vrot.slane %v2506, %v2527
        %v2530 = vunpack.c.l.s4 1966171168
        %v2531 = vunpack.c.0.s8 %v2530
        %v2532 = vlaneseq
        %v2533 = vshrl.u32 %v2532, 7
        %v2534 = vsub.s32 %v2531, %v2533
        %v2535 = vrot.slane %v2507, %v2534
        %v2536 = vcombine.low %v2514, %v2521
        %v2537 = vcombine.low %v2528, %v2535
        %v2539 = vunpack.c.l.s4 1966171168
        %v2540 = vunpack.c.0.s8 %v2539
        %v2541 = vlaneseq
        %v2542 = vshrl.u32 %v2541, 7
        %v2543 = vsub.s32 %v2540, %v2542
        %v2544 = vrot.slane %v2536, %v2543
        %v2546 = vunpack.c.l.s4 1966171168
        %v2547 = vunpack.c.0.s8 %v2546
        %v2548 = vlaneseq
        %v2549 = vshrl.u32 %v2548, 7
        %v2550 = vsub.s32 %v2547, %v2549
        %v2551 = vrot.slane %v2537, %v2550
        %v2552 = vcombine.low %v2544, %v2551
        %v2553 = vcombine.low %v2090, %v2091
        %v2554 = vcombine.low %v2092, %v2106
        %v2555 = vcombine.low %v2121, %v2128
        %v2556 = vcombine.low %v2129, %v2130
        %v2558 = vunpack.c.l.s4 1966171168
        %v2559 = vunpack.c.0.s8 %v2558
        %v2560 = vlaneseq
        %v2561 = vshrl.u32 %v2560, 7
        %v2562 = vsub.s32 %v2559, %v2561
        %v2563 = vrot.slane %v2553, %v2562
        %v2565 = vunpack.c.l.s4 1966171168
        %v2566 = vunpack.c.0.s8 %v2565
        %v2567 = vlaneseq
        %v2568 = vshrl.u32 %v2567, 7
        %v2569 = vsub.s32 %v2566, %v2568
        %v2570 = vrot.slane %v2554, %v2569
        %v2572 = vunpack.c.l.s4 1966171168
        %v2573 = vunpack.c.0.s8 %v2572
        %v2574 = vlaneseq
        %v2575 = vshrl.u32 %v2574, 7
        %v2576 = vsub.s32 %v2573, %v2575
        %v2577 = vrot.slane %v2555, %v2576
        %v2579 = vunpack.c.l.s4 1966171168
        %v2580 = vunpack.c.0.s8 %v2579
        %v2581 = vlaneseq
        %v2582 = vshrl.u32 %v2581, 7
        %v2583 = vsub.s32 %v2580, %v2582
        %v2584 = vrot.slane %v2556, %v2583
        %v2585 = vcombine.low %v2563, %v2570
        %v2586 = vcombine.low %v2577, %v2584
        %v2588 = vunpack.c.l.s4 1966171168
        %v2589 = vunpack.c.0.s8 %v2588
        %v2590 = vlaneseq
        %v2591 = vshrl.u32 %v2590, 7
        %v2592 = vsub.s32 %v2589, %v2591
        %v2593 = vrot.slane %v2585, %v2592
        %v2595 = vunpack.c.l.s4 1966171168
        %v2596 = vunpack.c.0.s8 %v2595
        %v2597 = vlaneseq
        %v2598 = vshrl.u32 %v2597, 7
        %v2599 = vsub.s32 %v2596, %v2598
        %v2600 = vrot.slane %v2586, %v2599
        %v2601 = vcombine.low %v2593, %v2600
        %v2602 = vcombine.low %v2145, %v2152
        %v2603 = vcombine.low %v2153, %v2154
        %v2604 = vcombine.low %v2168, %v2183
        %v2605 = vcombine.low %v2190, %v2191
        %v2607 = vunpack.c.l.s4 1966171168
        %v2608 = vunpack.c.0.s8 %v2607
        %v2609 = vlaneseq
        %v2610 = vshrl.u32 %v2609, 7
        %v2611 = vsub.s32 %v2608, %v2610
        %v2612 = vrot.slane %v2602, %v2611
        %v2614 = vunpack.c.l.s4 1966171168
        %v2615 = vunpack.c.0.s8 %v2614
        %v2616 = vlaneseq
        %v2617 = vshrl.u32 %v2616, 7
        %v2618 = vsub.s32 %v2615, %v2617
        %v2619 = vrot.slane %v2603, %v2618
        %v2621 = vunpack.c.l.s4 1966171168
        %v2622 = vunpack.c.0.s8 %v2621
        %v2623 = vlaneseq
        %v2624 = vshrl.u32 %v2623, 7
        %v2625 = vsub.s32 %v2622, %v2624
        %v2626 = vrot.slane %v2604, %v2625
        %v2628 = vunpack.c.l.s4 1966171168
        %v2629 = vunpack.c.0.s8 %v2628
        %v2630 = vlaneseq
        %v2631 = vshrl.u32 %v2630, 7
        %v2632 = vsub.s32 %v2629, %v2631
        %v2633 = vrot.slane %v2605, %v2632
        %v2634 = vcombine.low %v2612, %v2619
        %v2635 = vcombine.low %v2626, %v2633
        %v2637 = vunpack.c.l.s4 1966171168
        %v2638 = vunpack.c.0.s8 %v2637
        %v2639 = vlaneseq
        %v2640 = vshrl.u32 %v2639, 7
        %v2641 = vsub.s32 %v2638, %v2640
        %v2642 = vrot.slane %v2634, %v2641
        %v2644 = vunpack.c.l.s4 1966171168
        %v2645 = vunpack.c.0.s8 %v2644
        %v2646 = vlaneseq
        %v2647 = vshrl.u32 %v2646, 7
        %v2648 = vsub.s32 %v2645, %v2647
        %v2649 = vrot.slane %v2635, %v2648
        %v2650 = vcombine.low %v2642, %v2649
        %v2651 = vcombine.low %v2192, %v2207
        %v2652 = vcombine.low %v2214, %v2215
        %v2653 = vcombine.low %v2216, %v2230
        %v2654 = vcombine.low %v2245, %v2252
        %v2656 = vunpack.c.l.s4 1966171168
        %v2657 = vunpack.c.0.s8 %v2656
        %v2658 = vlaneseq
        %v2659 = vshrl.u32 %v2658, 7
        %v2660 = vsub.s32 %v2657, %v2659
        %v2661 = vrot.slane %v2651, %v2660
        %v2663 = vunpack.c.l.s4 1966171168
        %v2664 = vunpack.c.0.s8 %v2663
        %v2665 = vlaneseq
        %v2666 = vshrl.u32 %v2665, 7
        %v2667 = vsub.s32 %v2664, %v2666
        %v2668 = vrot.slane %v2652, %v2667
        %v2670 = vunpack.c.l.s4 1966171168
        %v2671 = vunpack.c.0.s8 %v2670
        %v2672 = vlaneseq
        %v2673 = vshrl.u32 %v2672, 7
        %v2674 = vsub.s32 %v2671, %v2673
        %v2675 = vrot.slane %v2653, %v2674
        %v2677 = vunpack.c.l.s4 1966171168
        %v2678 = vunpack.c.0.s8 %v2677
        %v2679 = vlaneseq
        %v2680 = vshrl.u32 %v2679, 7
        %v2681 = vsub.s32 %v2678, %v2680
        %v2682 = vrot.slane %v2654, %v2681
        %v2683 = vcombine.low %v2661, %v2668
        %v2684 = vcombine.low %v2675, %v2682
        %v2686 = vunpack.c.l.s4 1966171168
        %v2687 = vunpack.c.0.s8 %v2686
        %v2688 = vlaneseq
        %v2689 = vshrl.u32 %v2688, 7
        %v2690 = vsub.s32 %v2687, %v2689
        %v2691 = vrot.slane %v2683, %v2690
        %v2693 = vunpack.c.l.s4 1966171168
        %v2694 = vunpack.c.0.s8 %v2693
        %v2695 = vlaneseq
        %v2696 = vshrl.u32 %v2695, 7
        %v2697 = vsub.s32 %v2694, %v2696
        %v2698 = vrot.slane %v2684, %v2697
        %v2699 = vcombine.low %v2691, %v2698
        %v2700 = vcombine.low %v2253, %v2254
        %v2701 = vcombine.low %v2269, %v2276
        %v2702 = vcombine.low %v2277, %v2278
        %v2703 = vcombine.low %v2292, %v2307
        %v2705 = vunpack.c.l.s4 1966171168
        %v2706 = vunpack.c.0.s8 %v2705
        %v2707 = vlaneseq
        %v2708 = vshrl.u32 %v2707, 7
        %v2709 = vsub.s32 %v2706, %v2708
        %v2710 = vrot.slane %v2700, %v2709
        %v2712 = vunpack.c.l.s4 1966171168
        %v2713 = vunpack.c.0.s8 %v2712
        %v2714 = vlaneseq
        %v2715 = vshrl.u32 %v2714, 7
        %v2716 = vsub.s32 %v2713, %v2715
        %v2717 = vrot.slane %v2701, %v2716
        %v2719 = vunpack.c.l.s4 1966171168
        %v2720 = vunpack.c.0.s8 %v2719
        %v2721 = vlaneseq
        %v2722 = vshrl.u32 %v2721, 7
        %v2723 = vsub.s32 %v2720, %v2722
        %v2724 = vrot.slane %v2702, %v2723
        %v2726 = vunpack.c.l.s4 1966171168
        %v2727 = vunpack.c.0.s8 %v2726
        %v2728 = vlaneseq
        %v2729 = vshrl.u32 %v2728, 7
        %v2730 = vsub.s32 %v2727, %v2729
        %v2731 = vrot.slane %v2703, %v2730
        %v2732 = vcombine.low %v2710, %v2717
        %v2733 = vcombine.low %v2724, %v2731
        %v2735 = vunpack.c.l.s4 1966171168
        %v2736 = vunpack.c.0.s8 %v2735
        %v2737 = vlaneseq
        %v2738 = vshrl.u32 %v2737, 7
        %v2739 = vsub.s32 %v2736, %v2738
        %v2740 = vrot.slane %v2732, %v2739
        %v2742 = vunpack.c.l.s4 1966171168
        %v2743 = vunpack.c.0.s8 %v2742
        %v2744 = vlaneseq
        %v2745 = vshrl.u32 %v2744, 7
        %v2746 = vsub.s32 %v2743, %v2745
        %v2747 = vrot.slane %v2733, %v2746
        %v2748 = vcombine.low %v2740, %v2747
        %v2749 = vcombine.low %v2314, %v2315
        %v2750 = vcombine.low %v2316, %v2331
        %v2751 = vcombine.low %v2338, %v2339
        %v2752 = vcombine.low %v2340, %v2354
        %v2754 = vunpack.c.l.s4 1966171168
        %v2755 = vunpack.c.0.s8 %v2754
        %v2756 = vlaneseq
        %v2757 = vshrl.u32 %v2756, 7
        %v2758 = vsub.s32 %v2755, %v2757
        %v2759 = vrot.slane %v2749, %v2758
        %v2761 = vunpack.c.l.s4 1966171168
        %v2762 = vunpack.c.0.s8 %v2761
        %v2763 = vlaneseq
        %v2764 = vshrl.u32 %v2763, 7
        %v2765 = vsub.s32 %v2762, %v2764
        %v2766 = vrot.slane %v2750, %v2765
        %v2768 = vunpack.c.l.s4 1966171168
        %v2769 = vunpack.c.0.s8 %v2768
        %v2770 = vlaneseq
        %v2771 = vshrl.u32 %v2770, 7
        %v2772 = vsub.s32 %v2769, %v2771
        %v2773 = vrot.slane %v2751, %v2772
        %v2775 = vunpack.c.l.s4 1966171168
        %v2776 = vunpack.c.0.s8 %v2775
        %v2777 = vlaneseq
        %v2778 = vshrl.u32 %v2777, 7
        %v2779 = vsub.s32 %v2776, %v2778
        %v2780 = vrot.slane %v2752, %v2779
        %v2781 = vcombine.low %v2759, %v2766
        %v2782 = vcombine.low %v2773, %v2780
        %v2784 = vunpack.c.l.s4 1966171168
        %v2785 = vunpack.c.0.s8 %v2784
        %v2786 = vlaneseq
        %v2787 = vshrl.u32 %v2786, 7
        %v2788 = vsub.s32 %v2785, %v2787
        %v2789 = vrot.slane %v2781, %v2788
        %v2791 = vunpack.c.l.s4 1966171168
        %v2792 = vunpack.c.0.s8 %v2791
        %v2793 = vlaneseq
        %v2794 = vshrl.u32 %v2793, 7
        %v2795 = vsub.s32 %v2792, %v2794
        %v2796 = vrot.slane %v2782, %v2795
        %v2797 = vcombine.low %v2789, %v2796
        %v2800 = vunpack.c.l.b16 %v2355
        %v2801 = vunpack.c.l.b16 %v2356
        %v2802 = vpack.c.b16 %v2801, %v2800
        %v2805 = vsel %vm965, %v2405, 0
        %v2808 = vsel %vm965, %v2454, 0
        %v2811 = vsel %vm965, %v2503, 0
        %v2814 = vsel %vm965, %v2552, 0
        %v2817 = vsel %vm965, %v2601, 0
        %v2820 = vsel %vm965, %v2650, 0
        %v2823 = vsel %vm965, %v2699, 0
        %v2826 = vsel %vm965, %v2748, 0
        %v2829 = vsel %vm965, %v2797, 0
        %2831 = vmatprep.subr.bf16.mxu0 0
        %2832 = vmatpush1.bf16.msra.mxu0 %v2802
        %2833 = vmatprep.subr.bf16.mxu0 0
        %2834 = vmatpush1.bf16.msra.mxu0 0
        %2835 = vmatprep.subr.bf16.mxu0 0
        %2836 = vmatpush1.bf16.msra.mxu0 0
        %2837 = vmatprep.subr.bf16.mxu0 0
        %2838 = vmatpush1.bf16.msra.mxu0 0
        %2839 = vmatprep.subr.bf16.mxu0 0
        %2840 = vmatpush1.bf16.msra.mxu0 0
        %2841 = vmatprep.subr.bf16.mxu0 0
        %2842 = vmatpush1.bf16.msra.mxu0 0
        %2843 = vmatprep.subr.bf16.mxu0 0
        %2844 = vmatpush1.bf16.msra.mxu0 0
        %2845 = vmatprep.subr.bf16.mxu0 0
        %2846 = vmatpush1.bf16.msra.mxu0 0
        %2847 = vmatprep.subr.bf16.mxu0 0
        %2848 = vmatpush1.bf16.msra.mxu0 0
        %2849 = vmatprep.subr.bf16.mxu0 0
        %2850 = vmatpush1.bf16.msra.mxu0 0
        %2851 = vmatprep.subr.bf16.mxu0 0
        %2852 = vmatpush1.bf16.msra.mxu0 0
        %2853 = vmatprep.subr.bf16.mxu0 0
        %2854 = vmatpush1.bf16.msra.mxu0 0
        %2855 = vmatprep.subr.bf16.mxu0 0
        %2856 = vmatpush1.bf16.msra.mxu0 0
        %2857 = vmatprep.subr.bf16.mxu0 0
        %2858 = vmatpush1.bf16.msra.mxu0 0
        %2859 = vmatprep.subr.bf16.mxu0 0
        %2860 = vmatpush1.bf16.msra.mxu0 0
        %2861 = vmatprep.subr.bf16.mxu0 0
        %2862 = vmatpush1.bf16.msra.mxu0 0
        %2863 = vmatprep.mubr.bf16.mxu0 0
        %2864 = vmatmul.mubr.bf16.gmra.mrb[0].mxu0 %v2805
        %v2865 = vpop.f32.mrb[0].mxu0
        %v2866 = vadd.f32 0.0, %v2865
        %v2867 = vpop.f32.mrb[0].mxu0
        %v2868 = vpop.f32.mrb[0].mxu0
        %v2869 = vadd.f32 0.0, %v2868
        %v2870 = vpop.f32.mrb[0].mxu0
        %2871 = vmatprep.mubr.bf16.mxu0 0
        %2872 = vmatmul.mubr.bf16.gmra.mrb[0].mxu0 %v2808
        %v2873 = vpop.f32.mrb[0].mxu0
        %v2874 = vadd.f32 0.0, %v2873
        %v2875 = vpop.f32.mrb[0].mxu0
        %v2876 = vpop.f32.mrb[0].mxu0
        %v2877 = vadd.f32 0.0, %v2876
        %v2878 = vpop.f32.mrb[0].mxu0
        %2879 = vmatprep.mubr.bf16.mxu0 0
        %2880 = vmatmul.mubr.bf16.gmra.mrb[0].mxu0 %v2811
        %v2881 = vpop.f32.mrb[0].mxu0
        %v2882 = vadd.f32 0.0, %v2881
        %v2883 = vpop.f32.mrb[0].mxu0
        %v2884 = vpop.f32.mrb[0].mxu0
        %v2885 = vadd.f32 0.0, %v2884
        %v2886 = vpop.f32.mrb[0].mxu0
        %2887 = vmatprep.mubr.bf16.mxu0 0
        %2888 = vmatmul.mubr.bf16.gmra.mrb[0].mxu0 %v2814
        %v2889 = vpop.f32.mrb[0].mxu0
        %v2890 = vadd.f32 0.0, %v2889
        %v2891 = vpop.f32.mrb[0].mxu0
        %v2892 = vpop.f32.mrb[0].mxu0
        %v2893 = vadd.f32 0.0, %v2892
        %v2894 = vpop.f32.mrb[0].mxu0
        %2895 = vmatprep.mubr.bf16.mxu0 0
        %2896 = vmatmul.mubr.bf16.gmra.mrb[0].mxu0 %v2817
        %v2897 = vpop.f32.mrb[0].mxu0
        %v2898 = vadd.f32 0.0, %v2897
        %v2899 = vpop.f32.mrb[0].mxu0
        %v2900 = vpop.f32.mrb[0].mxu0
        %v2901 = vadd.f32 0.0, %v2900
        %v2902 = vpop.f32.mrb[0].mxu0
        %2903 = vmatprep.mubr.bf16.mxu0 0
        %2904 = vmatmul.mubr.bf16.gmra.mrb[0].mxu0 %v2820
        %v2905 = vpop.f32.mrb[0].mxu0
        %v2906 = vadd.f32 0.0, %v2905
        %v2907 = vpop.f32.mrb[0].mxu0
        %v2908 = vpop.f32.mrb[0].mxu0
        %v2909 = vadd.f32 0.0, %v2908
        %v2910 = vpop.f32.mrb[0].mxu0
        %2911 = vmatprep.mubr.bf16.mxu0 0
        %2912 = vmatmul.mubr.bf16.gmra.mrb[0].mxu0 %v2823
        %v2913 = vpop.f32.mrb[0].mxu0
        %v2914 = vadd.f32 0.0, %v2913
        %v2915 = vpop.f32.mrb[0].mxu0
        %v2916 = vpop.f32.mrb[0].mxu0
        %v2917 = vadd.f32 0.0, %v2916
        %v2918 = vpop.f32.mrb[0].mxu0
        %2919 = vmatprep.mubr.bf16.mxu0 0
        %2920 = vmatmul.mubr.bf16.gmra.mrb[0].mxu0 %v2826
        %v2921 = vpop.f32.mrb[0].mxu0
        %v2922 = vadd.f32 0.0, %v2921
        %v2923 = vpop.f32.mrb[0].mxu0
        %v2924 = vpop.f32.mrb[0].mxu0
        %v2925 = vadd.f32 0.0, %v2924
        %v2926 = vpop.f32.mrb[0].mxu0
        %2927 = vmatprep.mubr.bf16.mxu0 0
        %2928 = vmatmul.mubr.bf16.gmra.mrb[0].mxu0 %v2829
        %v2929 = vpop.f32.mrb[0].mxu0
        %v2930 = vadd.f32 0.0, %v2929
        %v2931 = vpop.f32.mrb[0].mxu0
        %v2932 = vpop.f32.mrb[0].mxu0
        %v2933 = vadd.f32 0.0, %v2932
        %v2934 = vpop.f32.mrb[0].mxu0
        %2935 = vdwg.mxu0
        %v2954 = vcombine.high %v2866, %v2866
        %v2956 = vunpack.c.l.s4 1983009808
        %v2957 = vunpack.c.0.s8 %v2956
        %v2958 = vlaneseq
        %v2959 = vshrl.u32 %v2958, 7
        %v2960 = vsub.s32 %v2957, %v2959
        %v2961 = vrot.slane %v2866, %v2960
        %v2963 = vunpack.c.l.s4 1983009808
        %v2964 = vunpack.c.0.s8 %v2963
        %v2965 = vlaneseq
        %v2966 = vshrl.u32 %v2965, 7
        %v2967 = vsub.s32 %v2964, %v2966
        %v2968 = vrot.slane %v2954, %v2967
        %v2969 = vcombine.high %v2961, %v2961
        %v2970 = vcombine.high %v2968, %v2968
        %v2971 = vcombine.high %v2869, %v2869
        %v2973 = vunpack.c.l.s4 1983009808
        %v2974 = vunpack.c.0.s8 %v2973
        %v2975 = vlaneseq
        %v2976 = vshrl.u32 %v2975, 7
        %v2977 = vsub.s32 %v2974, %v2976
        %v2978 = vrot.slane %v2869, %v2977
        %v2980 = vunpack.c.l.s4 1983009808
        %v2981 = vunpack.c.0.s8 %v2980
        %v2982 = vlaneseq
        %v2983 = vshrl.u32 %v2982, 7
        %v2984 = vsub.s32 %v2981, %v2983
        %v2985 = vrot.slane %v2971, %v2984
        %v2986 = vcombine.high %v2978, %v2978
        %v2987 = vcombine.high %v2985, %v2985
        %v2988 = vcombine.high %v2874, %v2874
        %v2990 = vunpack.c.l.s4 1983009808
        %v2991 = vunpack.c.0.s8 %v2990
        %v2992 = vlaneseq
        %v2993 = vshrl.u32 %v2992, 7
        %v2994 = vsub.s32 %v2991, %v2993
        %v2995 = vrot.slane %v2874, %v2994
        %v2997 = vunpack.c.l.s4 1983009808
        %v2998 = vunpack.c.0.s8 %v2997
        %v2999 = vlaneseq
        %v3000 = vshrl.u32 %v2999, 7
        %v3001 = vsub.s32 %v2998, %v3000
        %v3002 = vrot.slane %v2988, %v3001
        %v3003 = vcombine.high %v2995, %v2995
        %v3004 = vcombine.high %v3002, %v3002
        %v3005 = vcombine.high %v2877, %v2877
        %v3007 = vunpack.c.l.s4 1983009808
        %v3008 = vunpack.c.0.s8 %v3007
        %v3009 = vlaneseq
        %v3010 = vshrl.u32 %v3009, 7
        %v3011 = vsub.s32 %v3008, %v3010
        %v3012 = vrot.slane %v2877, %v3011
        %v3014 = vunpack.c.l.s4 1983009808
        %v3015 = vunpack.c.0.s8 %v3014
        %v3016 = vlaneseq
        %v3017 = vshrl.u32 %v3016, 7
        %v3018 = vsub.s32 %v3015, %v3017
        %v3019 = vrot.slane %v3005, %v3018
        %v3020 = vcombine.high %v3012, %v3012
        %v3021 = vcombine.high %v3019, %v3019
        %v3022 = vcombine.high %v2882, %v2882
        %v3024 = vunpack.c.l.s4 1983009808
        %v3025 = vunpack.c.0.s8 %v3024
        %v3026 = vlaneseq
        %v3027 = vshrl.u32 %v3026, 7
        %v3028 = vsub.s32 %v3025, %v3027
        %v3029 = vrot.slane %v2882, %v3028
        %v3031 = vunpack.c.l.s4 1983009808
        %v3032 = vunpack.c.0.s8 %v3031
        %v3033 = vlaneseq
        %v3034 = vshrl.u32 %v3033, 7
        %v3035 = vsub.s32 %v3032, %v3034
        %v3036 = vrot.slane %v3022, %v3035
        %v3037 = vcombine.high %v3029, %v3029
        %v3038 = vcombine.high %v3036, %v3036
        %v3039 = vcombine.high %v2885, %v2885
        %v3041 = vunpack.c.l.s4 1983009808
        %v3042 = vunpack.c.0.s8 %v3041
        %v3043 = vlaneseq
        %v3044 = vshrl.u32 %v3043, 7
        %v3045 = vsub.s32 %v3042, %v3044
        %v3046 = vrot.slane %v2885, %v3045
        %v3048 = vunpack.c.l.s4 1983009808
        %v3049 = vunpack.c.0.s8 %v3048
        %v3050 = vlaneseq
        %v3051 = vshrl.u32 %v3050, 7
        %v3052 = vsub.s32 %v3049, %v3051
        %v3053 = vrot.slane %v3039, %v3052
        %v3054 = vcombine.high %v3046, %v3046
        %v3055 = vcombine.high %v3053, %v3053
        %v3056 = vcombine.high %v2890, %v2890
        %v3058 = vunpack.c.l.s4 1983009808
        %v3059 = vunpack.c.0.s8 %v3058
        %v3060 = vlaneseq
        %v3061 = vshrl.u32 %v3060, 7
        %v3062 = vsub.s32 %v3059, %v3061
        %v3063 = vrot.slane %v2890, %v3062
        %v3065 = vunpack.c.l.s4 1983009808
        %v3066 = vunpack.c.0.s8 %v3065
        %v3067 = vlaneseq
        %v3068 = vshrl.u32 %v3067, 7
        %v3069 = vsub.s32 %v3066, %v3068
        %v3070 = vrot.slane %v3056, %v3069
        %v3071 = vcombine.high %v3063, %v3063
        %v3072 = vcombine.high %v3070, %v3070
        %v3073 = vcombine.high %v2893, %v2893
        %v3075 = vunpack.c.l.s4 1983009808
        %v3076 = vunpack.c.0.s8 %v3075
        %v3077 = vlaneseq
        %v3078 = vshrl.u32 %v3077, 7
        %v3079 = vsub.s32 %v3076, %v3078
        %v3080 = vrot.slane %v2893, %v3079
        %v3082 = vunpack.c.l.s4 1983009808
        %v3083 = vunpack.c.0.s8 %v3082
        %v3084 = vlaneseq
        %v3085 = vshrl.u32 %v3084, 7
        %v3086 = vsub.s32 %v3083, %v3085
        %v3087 = vrot.slane %v3073, %v3086
        %v3088 = vcombine.high %v3080, %v3080
        %v3089 = vcombine.high %v3087, %v3087
        %v3090 = vcombine.high %v2898, %v2898
        %v3092 = vunpack.c.l.s4 1983009808
        %v3093 = vunpack.c.0.s8 %v3092
        %v3094 = vlaneseq
        %v3095 = vshrl.u32 %v3094, 7
        %v3096 = vsub.s32 %v3093, %v3095
        %v3097 = vrot.slane %v2898, %v3096
        %v3099 = vunpack.c.l.s4 1983009808
        %v3100 = vunpack.c.0.s8 %v3099
        %v3101 = vlaneseq
        %v3102 = vshrl.u32 %v3101, 7
        %v3103 = vsub.s32 %v3100, %v3102
        %v3104 = vrot.slane %v3090, %v3103
        %v3105 = vcombine.high %v3097, %v3097
        %v3106 = vcombine.high %v3104, %v3104
        %v3107 = vcombine.high %v2901, %v2901
        %v3109 = vunpack.c.l.s4 1983009808
        %v3110 = vunpack.c.0.s8 %v3109
        %v3111 = vlaneseq
        %v3112 = vshrl.u32 %v3111, 7
        %v3113 = vsub.s32 %v3110, %v3112
        %v3114 = vrot.slane %v2901, %v3113
        %v3116 = vunpack.c.l.s4 1983009808
        %v3117 = vunpack.c.0.s8 %v3116
        %v3118 = vlaneseq
        %v3119 = vshrl.u32 %v3118, 7
        %v3120 = vsub.s32 %v3117, %v3119
        %v3121 = vrot.slane %v3107, %v3120
        %v3122 = vcombine.high %v3114, %v3114
        %v3123 = vcombine.high %v3121, %v3121
        %v3124 = vcombine.high %v2906, %v2906
        %v3126 = vunpack.c.l.s4 1983009808
        %v3127 = vunpack.c.0.s8 %v3126
        %v3128 = vlaneseq
        %v3129 = vshrl.u32 %v3128, 7
        %v3130 = vsub.s32 %v3127, %v3129
        %v3131 = vrot.slane %v2906, %v3130
        %v3133 = vunpack.c.l.s4 1983009808
        %v3134 = vunpack.c.0.s8 %v3133
        %v3135 = vlaneseq
        %v3136 = vshrl.u32 %v3135, 7
        %v3137 = vsub.s32 %v3134, %v3136
        %v3138 = vrot.slane %v3124, %v3137
        %v3139 = vcombine.high %v3131, %v3131
        %v3140 = vcombine.high %v3138, %v3138
        %v3141 = vcombine.high %v2909, %v2909
        %v3143 = vunpack.c.l.s4 1983009808
        %v3144 = vunpack.c.0.s8 %v3143
        %v3145 = vlaneseq
        %v3146 = vshrl.u32 %v3145, 7
        %v3147 = vsub.s32 %v3144, %v3146
        %v3148 = vrot.slane %v2909, %v3147
        %v3150 = vunpack.c.l.s4 1983009808
        %v3151 = vunpack.c.0.s8 %v3150
        %v3152 = vlaneseq
        %v3153 = vshrl.u32 %v3152, 7
        %v3154 = vsub.s32 %v3151, %v3153
        %v3155 = vrot.slane %v3141, %v3154
        %v3156 = vcombine.high %v3148, %v3148
        %v3157 = vcombine.high %v3155, %v3155
        %v3158 = vcombine.high %v2914, %v2914
        %v3160 = vunpack.c.l.s4 1983009808
        %v3161 = vunpack.c.0.s8 %v3160
        %v3162 = vlaneseq
        %v3163 = vshrl.u32 %v3162, 7
        %v3164 = vsub.s32 %v3161, %v3163
        %v3165 = vrot.slane %v2914, %v3164
        %v3167 = vunpack.c.l.s4 1983009808
        %v3168 = vunpack.c.0.s8 %v3167
        %v3169 = vlaneseq
        %v3170 = vshrl.u32 %v3169, 7
        %v3171 = vsub.s32 %v3168, %v3170
        %v3172 = vrot.slane %v3158, %v3171
        %v3173 = vcombine.high %v3165, %v3165
        %v3174 = vcombine.high %v3172, %v3172
        %v3175 = vcombine.high %v2917, %v2917
        %v3177 = vunpack.c.l.s4 1983009808
        %v3178 = vunpack.c.0.s8 %v3177
        %v3179 = vlaneseq
        %v3180 = vshrl.u32 %v3179, 7
        %v3181 = vsub.s32 %v3178, %v3180
        %v3182 = vrot.slane %v2917, %v3181
        %v3184 = vunpack.c.l.s4 1983009808
        %v3185 = vunpack.c.0.s8 %v3184
        %v3186 = vlaneseq
        %v3187 = vshrl.u32 %v3186, 7
        %v3188 = vsub.s32 %v3185, %v3187
        %v3189 = vrot.slane %v3175, %v3188
        %v3190 = vcombine.high %v3182, %v3182
        %v3191 = vcombine.high %v3189, %v3189
        %v3192 = vcombine.high %v2922, %v2922
        %v3194 = vunpack.c.l.s4 1983009808
        %v3195 = vunpack.c.0.s8 %v3194
        %v3196 = vlaneseq
        %v3197 = vshrl.u32 %v3196, 7
        %v3198 = vsub.s32 %v3195, %v3197
        %v3199 = vrot.slane %v2922, %v3198
        %v3201 = vunpack.c.l.s4 1983009808
        %v3202 = vunpack.c.0.s8 %v3201
        %v3203 = vlaneseq
        %v3204 = vshrl.u32 %v3203, 7
        %v3205 = vsub.s32 %v3202, %v3204
        %v3206 = vrot.slane %v3192, %v3205
        %v3207 = vcombine.high %v3199, %v3199
        %v3208 = vcombine.high %v3206, %v3206
        %v3209 = vcombine.high %v2925, %v2925
        %v3211 = vunpack.c.l.s4 1983009808
        %v3212 = vunpack.c.0.s8 %v3211
        %v3213 = vlaneseq
        %v3214 = vshrl.u32 %v3213, 7
        %v3215 = vsub.s32 %v3212, %v3214
        %v3216 = vrot.slane %v2925, %v3215
        %v3218 = vunpack.c.l.s4 1983009808
        %v3219 = vunpack.c.0.s8 %v3218
        %v3220 = vlaneseq
        %v3221 = vshrl.u32 %v3220, 7
        %v3222 = vsub.s32 %v3219, %v3221
        %v3223 = vrot.slane %v3209, %v3222
        %v3224 = vcombine.high %v3216, %v3216
        %v3225 = vcombine.high %v3223, %v3223
        %v3226 = vcombine.high %v2930, %v2930
        %v3228 = vunpack.c.l.s4 1983009808
        %v3229 = vunpack.c.0.s8 %v3228
        %v3230 = vlaneseq
        %v3231 = vshrl.u32 %v3230, 7
        %v3232 = vsub.s32 %v3229, %v3231
        %v3233 = vrot.slane %v2930, %v3232
        %v3235 = vunpack.c.l.s4 1983009808
        %v3236 = vunpack.c.0.s8 %v3235
        %v3237 = vlaneseq
        %v3238 = vshrl.u32 %v3237, 7
        %v3239 = vsub.s32 %v3236, %v3238
        %v3240 = vrot.slane %v3226, %v3239
        %v3241 = vcombine.high %v3233, %v3233
        %v3242 = vcombine.high %v3240, %v3240
        %v3243 = vcombine.high %v2933, %v2933
        %v3245 = vunpack.c.l.s4 1983009808
        %v3246 = vunpack.c.0.s8 %v3245
        %v3247 = vlaneseq
        %v3248 = vshrl.u32 %v3247, 7
        %v3249 = vsub.s32 %v3246, %v3248
        %v3250 = vrot.slane %v2933, %v3249
        %v3252 = vunpack.c.l.s4 1983009808
        %v3253 = vunpack.c.0.s8 %v3252
        %v3254 = vlaneseq
        %v3255 = vshrl.u32 %v3254, 7
        %v3256 = vsub.s32 %v3253, %v3255
        %v3257 = vrot.slane %v3243, %v3256
        %v3258 = vcombine.high %v3250, %v3250
        %v3259 = vcombine.high %v3257, %v3257
        %vm3324 = vcmask 1040384
        %vm3325 = vcmask 1042434
        %vm3326 = vmor %vm3324, %vm3325
        %vm3327 = vcmask 1044484
        %vm3328 = vmor %vm3326, %vm3327
        %vm3329 = vcmask 1046534
        %vm3330 = vmor %vm3328, %vm3329
        %v3331 = vrot.slane %v2961, 7
        %v3332 = vrot.slane %v3331, 2
        %v3333 = vrot.slane %v2969, 7
        %v3334 = vsel %vm3330, %v3332, %v3333
        %v3335 = vrot.slane %v3333, 2
        %v3336 = vrot.slane %v2968, 7
        %v3337 = vsel %vm3330, %v3335, %v3336
        %v3338 = vrot.slane %v3336, 2
        %v3339 = vrot.slane %v2970, 7
        %v3340 = vsel %vm3330, %v3338, %v3339
        %v3341 = vrot.slane %v3339, 2
        %v3342 = vrot.slane %v2978, 7
        %v3343 = vsel %vm3330, %v3341, %v3342
        %v3344 = vrot.slane %v3342, 2
        %v3345 = vrot.slane %v2986, 7
        %v3346 = vsel %vm3330, %v3344, %v3345
        %v3347 = vrot.slane %v3345, 2
        %v3348 = vrot.slane %v2985, 7
        %v3349 = vsel %vm3330, %v3347, %v3348
        %v3350 = vrot.slane %v3348, 2
        %v3351 = vrot.slane %v2987, 7
        %v3352 = vsel %vm3330, %v3350, %v3351
        %v3353 = vrot.slane %v3351, 2
        %v3354 = vrot.slane %v2995, 7
        %v3355 = vsel %vm3330, %v3353, %v3354
        %v3356 = vrot.slane %v3003, 7
        %v3357 = vrot.slane %v3356, 2
        %v3358 = vrot.slane %v3002, 7
        %v3359 = vsel %vm3330, %v3357, %v3358
        %v3360 = vrot.slane %v3358, 2
        %v3361 = vrot.slane %v3004, 7
        %v3362 = vsel %vm3330, %v3360, %v3361
        %v3363 = vrot.slane %v3361, 2
        %v3364 = vrot.slane %v3012, 7
        %v3365 = vsel %vm3330, %v3363, %v3364
        %v3366 = vrot.slane %v3364, 2
        %v3367 = vrot.slane %v3020, 7
        %v3368 = vsel %vm3330, %v3366, %v3367
        %v3369 = vrot.slane %v3367, 2
        %v3370 = vrot.slane %v3019, 7
        %v3371 = vsel %vm3330, %v3369, %v3370
        %v3372 = vrot.slane %v3370, 2
        %v3373 = vrot.slane %v3021, 7
        %v3374 = vsel %vm3330, %v3372, %v3373
        %v3375 = vrot.slane %v3373, 2
        %v3376 = vrot.slane %v3029, 7
        %v3377 = vsel %vm3330, %v3375, %v3376
        %v3378 = vrot.slane %v3376, 2
        %v3379 = vrot.slane %v3037, 7
        %v3380 = vsel %vm3330, %v3378, %v3379
        %v3381 = vrot.slane %v3036, 7
        %v3382 = vrot.slane %v3381, 2
        %v3383 = vrot.slane %v3038, 7
        %v3384 = vsel %vm3330, %v3382, %v3383
        %v3385 = vrot.slane %v3383, 2
        %v3386 = vrot.slane %v3046, 7
        %v3387 = vsel %vm3330, %v3385, %v3386
        %v3388 = vrot.slane %v3386, 2
        %v3389 = vrot.slane %v3054, 7
        %v3390 = vsel %vm3330, %v3388, %v3389
        %v3391 = vrot.slane %v3389, 2
        %v3392 = vrot.slane %v3053, 7
        %v3393 = vsel %vm3330, %v3391, %v3392
        %v3394 = vrot.slane %v3392, 2
        %v3395 = vrot.slane %v3055, 7
        %v3396 = vsel %vm3330, %v3394, %v3395
        %v3397 = vrot.slane %v3395, 2
        %v3398 = vrot.slane %v3063, 7
        %v3399 = vsel %vm3330, %v3397, %v3398
        %v3400 = vrot.slane %v3398, 2
        %v3401 = vrot.slane %v3071, 7
        %v3402 = vsel %vm3330, %v3400, %v3401
        %v3403 = vrot.slane %v3401, 2
        %v3404 = vrot.slane %v3070, 7
        %v3405 = vsel %vm3330, %v3403, %v3404
        %v3406 = vrot.slane %v3072, 7
        %v3407 = vrot.slane %v3406, 2
        %v3408 = vrot.slane %v3080, 7
        %v3409 = vsel %vm3330, %v3407, %v3408
        %v3410 = vrot.slane %v3408, 2
        %v3411 = vrot.slane %v3088, 7
        %v3412 = vsel %vm3330, %v3410, %v3411
        %v3413 = vrot.slane %v3411, 2
        %v3414 = vrot.slane %v3087, 7
        %v3415 = vsel %vm3330, %v3413, %v3414
        %v3416 = vrot.slane %v3414, 2
        %v3417 = vrot.slane %v3089, 7
        %v3418 = vsel %vm3330, %v3416, %v3417
        %v3419 = vrot.slane %v3417, 2
        %v3420 = vrot.slane %v3097, 7
        %v3421 = vsel %vm3330, %v3419, %v3420
        %v3422 = vrot.slane %v3420, 2
        %v3423 = vrot.slane %v3105, 7
        %v3424 = vsel %vm3330, %v3422, %v3423
        %v3425 = vrot.slane %v3423, 2
        %v3426 = vrot.slane %v3104, 7
        %v3427 = vsel %vm3330, %v3425, %v3426
        %v3428 = vrot.slane %v3426, 2
        %v3429 = vrot.slane %v3106, 7
        %v3430 = vsel %vm3330, %v3428, %v3429
        %v3431 = vrot.slane %v3114, 7
        %v3432 = vrot.slane %v3431, 2
        %v3433 = vrot.slane %v3122, 7
        %v3434 = vsel %vm3330, %v3432, %v3433
        %v3435 = vrot.slane %v3433, 2
        %v3436 = vrot.slane %v3121, 7
        %v3437 = vsel %vm3330, %v3435, %v3436
        %v3438 = vrot.slane %v3436, 2
        %v3439 = vrot.slane %v3123, 7
        %v3440 = vsel %vm3330, %v3438, %v3439
        %v3441 = vrot.slane %v3439, 2
        %v3442 = vrot.slane %v3131, 7
        %v3443 = vsel %vm3330, %v3441, %v3442
        %v3444 = vrot.slane %v3442, 2
        %v3445 = vrot.slane %v3139, 7
        %v3446 = vsel %vm3330, %v3444, %v3445
        %v3447 = vrot.slane %v3445, 2
        %v3448 = vrot.slane %v3138, 7
        %v3449 = vsel %vm3330, %v3447, %v3448
        %v3450 = vrot.slane %v3448, 2
        %v3451 = vrot.slane %v3140, 7
        %v3452 = vsel %vm3330, %v3450, %v3451
        %v3453 = vrot.slane %v3451, 2
        %v3454 = vrot.slane %v3148, 7
        %v3455 = vsel %vm3330, %v3453, %v3454
        %v3456 = vrot.slane %v3156, 7
        %v3457 = vrot.slane %v3456, 2
        %v3458 = vrot.slane %v3155, 7
        %v3459 = vsel %vm3330, %v3457, %v3458
        %v3460 = vrot.slane %v3458, 2
        %v3461 = vrot.slane %v3157, 7
        %v3462 = vsel %vm3330, %v3460, %v3461
        %v3463 = vrot.slane %v3461, 2
        %v3464 = vrot.slane %v3165, 7
        %v3465 = vsel %vm3330, %v3463, %v3464
        %v3466 = vrot.slane %v3464, 2
        %v3467 = vrot.slane %v3173, 7
        %v3468 = vsel %vm3330, %v3466, %v3467
        %v3469 = vrot.slane %v3467, 2
        %v3470 = vrot.slane %v3172, 7
        %v3471 = vsel %vm3330, %v3469, %v3470
        %v3472 = vrot.slane %v3470, 2
        %v3473 = vrot.slane %v3174, 7
        %v3474 = vsel %vm3330, %v3472, %v3473
        %v3475 = vrot.slane %v3473, 2
        %v3476 = vrot.slane %v3182, 7
        %v3477 = vsel %vm3330, %v3475, %v3476
        %v3478 = vrot.slane %v3476, 2
        %v3479 = vrot.slane %v3190, 7
        %v3480 = vsel %vm3330, %v3478, %v3479
        %v3481 = vrot.slane %v3189, 7
        %v3482 = vrot.slane %v3481, 2
        %v3483 = vrot.slane %v3191, 7
        %v3484 = vsel %vm3330, %v3482, %v3483
        %v3485 = vrot.slane %v3483, 2
        %v3486 = vrot.slane %v3199, 7
        %v3487 = vsel %vm3330, %v3485, %v3486
        %v3488 = vrot.slane %v3486, 2
        %v3489 = vrot.slane %v3207, 7
        %v3490 = vsel %vm3330, %v3488, %v3489
        %v3491 = vrot.slane %v3489, 2
        %v3492 = vrot.slane %v3206, 7
        %v3493 = vsel %vm3330, %v3491, %v3492
        %v3494 = vrot.slane %v3492, 2
        %v3495 = vrot.slane %v3208, 7
        %v3496 = vsel %vm3330, %v3494, %v3495
        %v3497 = vrot.slane %v3495, 2
        %v3498 = vrot.slane %v3216, 7
        %v3499 = vsel %vm3330, %v3497, %v3498
        %v3500 = vrot.slane %v3498, 2
        %v3501 = vrot.slane %v3224, 7
        %v3502 = vsel %vm3330, %v3500, %v3501
        %v3503 = vrot.slane %v3501, 2
        %v3504 = vrot.slane %v3223, 7
        %v3505 = vsel %vm3330, %v3503, %v3504
        %v3506 = vrot.slane %v3225, 7
        %v3507 = vrot.slane %v3506, 2
        %v3508 = vrot.slane %v3233, 7
        %v3509 = vsel %vm3330, %v3507, %v3508
        %v3510 = vrot.slane %v3508, 2
        %v3511 = vrot.slane %v3241, 7
        %v3512 = vsel %vm3330, %v3510, %v3511
        %v3513 = vrot.slane %v3511, 2
        %v3514 = vrot.slane %v3240, 7
        %v3515 = vsel %vm3330, %v3513, %v3514
        %v3516 = vrot.slane %v3514, 2
        %v3517 = vrot.slane %v3242, 7
        %v3518 = vsel %vm3330, %v3516, %v3517
        %v3519 = vrot.slane %v3517, 2
        %v3520 = vrot.slane %v3250, 7
        %v3521 = vsel %vm3330, %v3519, %v3520
        %v3522 = vrot.slane %v3520, 2
        %v3523 = vrot.slane %v3258, 7
        %v3524 = vsel %vm3330, %v3522, %v3523
        %v3525 = vrot.slane %v3523, 2
        %v3526 = vrot.slane %v3257, 7
        %v3527 = vsel %vm3330, %v3525, %v3526
        %v3528 = vrot.slane %v3526, 2
        %v3529 = vrot.slane %v3259, 7
        %v3530 = vsel %vm3330, %v3528, %v3529
        %3531 = vrot.lane.b32.xlu0 %v3334, 120
        %v3532 = vpop.permute.xlu0 %3531
        %3533 = vrot.lane.b32.xlu0 %v3337, 120
        %v3534 = vpop.permute.xlu0 %3533
        %3535 = vrot.lane.b32.xlu0 %v3340, 120
        %v3536 = vpop.permute.xlu0 %3535
        %3537 = vrot.lane.b32.xlu0 %v3343, 120
        %v3538 = vpop.permute.xlu0 %3537
        %3539 = vrot.lane.b32.xlu0 %v3346, 120
        %v3540 = vpop.permute.xlu0 %3539
        %3541 = vrot.lane.b32.xlu0 %v3349, 120
        %v3542 = vpop.permute.xlu0 %3541
        %3543 = vrot.lane.b32.xlu0 %v3352, 120
        %v3544 = vpop.permute.xlu0 %3543
        %3545 = vrot.lane.b32.xlu0 %v3355, 120
        %v3546 = vpop.permute.xlu0 %3545
        %3547 = vrot.lane.b32.xlu0 %v3359, 120
        %v3548 = vpop.permute.xlu0 %3547
        %3549 = vrot.lane.b32.xlu0 %v3362, 120
        %v3550 = vpop.permute.xlu0 %3549
        %3551 = vrot.lane.b32.xlu0 %v3365, 120
        %v3552 = vpop.permute.xlu0 %3551
        %3553 = vrot.lane.b32.xlu0 %v3368, 120
        %v3554 = vpop.permute.xlu0 %3553
        %3555 = vrot.lane.b32.xlu0 %v3371, 120
        %v3556 = vpop.permute.xlu0 %3555
        %3557 = vrot.lane.b32.xlu0 %v3374, 120
        %v3558 = vpop.permute.xlu0 %3557
        %3559 = vrot.lane.b32.xlu0 %v3377, 120
        %v3560 = vpop.permute.xlu0 %3559
        %3561 = vrot.lane.b32.xlu0 %v3380, 120
        %v3562 = vpop.permute.xlu0 %3561
        %3563 = vrot.lane.b32.xlu0 %v3384, 120
        %v3564 = vpop.permute.xlu0 %3563
        %3565 = vrot.lane.b32.xlu0 %v3387, 120
        %v3566 = vpop.permute.xlu0 %3565
        %3567 = vrot.lane.b32.xlu0 %v3390, 120
        %v3568 = vpop.permute.xlu0 %3567
        %3569 = vrot.lane.b32.xlu0 %v3393, 120
        %v3570 = vpop.permute.xlu0 %3569
        %3571 = vrot.lane.b32.xlu0 %v3396, 120
        %v3572 = vpop.permute.xlu0 %3571
        %3573 = vrot.lane.b32.xlu0 %v3399, 120
        %v3574 = vpop.permute.xlu0 %3573
        %3575 = vrot.lane.b32.xlu0 %v3402, 120
        %v3576 = vpop.permute.xlu0 %3575
        %3577 = vrot.lane.b32.xlu0 %v3405, 120
        %v3578 = vpop.permute.xlu0 %3577
        %3579 = vrot.lane.b32.xlu0 %v3409, 120
        %v3580 = vpop.permute.xlu0 %3579
        %3581 = vrot.lane.b32.xlu0 %v3412, 120
        %v3582 = vpop.permute.xlu0 %3581
        %3583 = vrot.lane.b32.xlu0 %v3415, 120
        %v3584 = vpop.permute.xlu0 %3583
        %3585 = vrot.lane.b32.xlu0 %v3418, 120
        %v3586 = vpop.permute.xlu0 %3585
        %3587 = vrot.lane.b32.xlu0 %v3421, 120
        %v3588 = vpop.permute.xlu0 %3587
        %3589 = vrot.lane.b32.xlu0 %v3424, 120
        %v3590 = vpop.permute.xlu0 %3589
        %3591 = vrot.lane.b32.xlu0 %v3427, 120
        %v3592 = vpop.permute.xlu0 %3591
        %3593 = vrot.lane.b32.xlu0 %v3430, 120
        %v3594 = vpop.permute.xlu0 %3593
        %3595 = vrot.lane.b32.xlu0 %v3434, 120
        %v3596 = vpop.permute.xlu0 %3595
        %3597 = vrot.lane.b32.xlu0 %v3437, 120
        %v3598 = vpop.permute.xlu0 %3597
        %3599 = vrot.lane.b32.xlu0 %v3440, 120
        %v3600 = vpop.permute.xlu0 %3599
        %3601 = vrot.lane.b32.xlu0 %v3443, 120
        %v3602 = vpop.permute.xlu0 %3601
        %3603 = vrot.lane.b32.xlu0 %v3446, 120
        %v3604 = vpop.permute.xlu0 %3603
        %3605 = vrot.lane.b32.xlu0 %v3449, 120
        %v3606 = vpop.permute.xlu0 %3605
        %3607 = vrot.lane.b32.xlu0 %v3452, 120
        %v3608 = vpop.permute.xlu0 %3607
        %3609 = vrot.lane.b32.xlu0 %v3455, 120
        %v3610 = vpop.permute.xlu0 %3609
        %3611 = vrot.lane.b32.xlu0 %v3459, 120
        %v3612 = vpop.permute.xlu0 %3611
        %3613 = vrot.lane.b32.xlu0 %v3462, 120
        %v3614 = vpop.permute.xlu0 %3613
        %3615 = vrot.lane.b32.xlu0 %v3465, 120
        %v3616 = vpop.permute.xlu0 %3615
        %3617 = vrot.lane.b32.xlu0 %v3468, 120
        %v3618 = vpop.permute.xlu0 %3617
        %3619 = vrot.lane.b32.xlu0 %v3471, 120
        %v3620 = vpop.permute.xlu0 %3619
        %3621 = vrot.lane.b32.xlu0 %v3474, 120
        %v3622 = vpop.permute.xlu0 %3621
        %3623 = vrot.lane.b32.xlu0 %v3477, 120
        %v3624 = vpop.permute.xlu0 %3623
        %3625 = vrot.lane.b32.xlu0 %v3480, 120
        %v3626 = vpop.permute.xlu0 %3625
        %3627 = vrot.lane.b32.xlu0 %v3484, 120
        %v3628 = vpop.permute.xlu0 %3627
        %3629 = vrot.lane.b32.xlu0 %v3487, 120
        %v3630 = vpop.permute.xlu0 %3629
        %3631 = vrot.lane.b32.xlu0 %v3490, 120
        %v3632 = vpop.permute.xlu0 %3631
        %3633 = vrot.lane.b32.xlu0 %v3493, 120
        %v3634 = vpop.permute.xlu0 %3633
        %3635 = vrot.lane.b32.xlu0 %v3496, 120
        %v3636 = vpop.permute.xlu0 %3635
        %3637 = vrot.lane.b32.xlu0 %v3499, 120
        %v3638 = vpop.permute.xlu0 %3637
        %3639 = vrot.lane.b32.xlu0 %v3502, 120
        %v3640 = vpop.permute.xlu0 %3639
        %3641 = vrot.lane.b32.xlu0 %v3505, 120
        %v3642 = vpop.permute.xlu0 %3641
        %3643 = vrot.lane.b32.xlu0 %v3509, 120
        %v3644 = vpop.permute.xlu0 %3643
        %3645 = vrot.lane.b32.xlu0 %v3512, 120
        %v3646 = vpop.permute.xlu0 %3645
        %3647 = vrot.lane.b32.xlu0 %v3515, 120
        %v3648 = vpop.permute.xlu0 %3647
        %3649 = vrot.lane.b32.xlu0 %v3518, 120
        %v3650 = vpop.permute.xlu0 %3649
        %3651 = vrot.lane.b32.xlu0 %v3521, 120
        %v3652 = vpop.permute.xlu0 %3651
        %3653 = vrot.lane.b32.xlu0 %v3524, 120
        %v3654 = vpop.permute.xlu0 %3653
        %3655 = vrot.lane.b32.xlu0 %v3527, 120
        %v3656 = vpop.permute.xlu0 %3655
        %3657 = vrot.lane.b32.xlu0 %v3530, 120
        %v3658 = vpop.permute.xlu0 %3657
        %v3723 = vadd.f32 %v2961, %v3532
        %v3724 = vadd.f32 %v2969, %v3534
        %v3725 = vadd.f32 %v2968, %v3536
        %v3726 = vadd.f32 %v2970, %v3538
        %v3727 = vadd.f32 %v2978, %v3540
        %v3728 = vadd.f32 %v2986, %v3542
        %v3729 = vadd.f32 %v2985, %v3544
        %v3730 = vadd.f32 %v2987, %v3546
        %v3731 = vadd.f32 %v3003, %v3548
        %v3732 = vadd.f32 %v3002, %v3550
        %v3733 = vadd.f32 %v3004, %v3552
        %v3734 = vadd.f32 %v3012, %v3554
        %v3735 = vadd.f32 %v3020, %v3556
        %v3736 = vadd.f32 %v3019, %v3558
        %v3737 = vadd.f32 %v3021, %v3560
        %v3738 = vadd.f32 %v3029, %v3562
        %v3739 = vadd.f32 %v3036, %v3564
        %v3740 = vadd.f32 %v3038, %v3566
        %v3741 = vadd.f32 %v3046, %v3568
        %v3742 = vadd.f32 %v3054, %v3570
        %v3743 = vadd.f32 %v3053, %v3572
        %v3744 = vadd.f32 %v3055, %v3574
        %v3745 = vadd.f32 %v3063, %v3576
        %v3746 = vadd.f32 %v3071, %v3578
        %v3747 = vadd.f32 %v3072, %v3580
        %v3748 = vadd.f32 %v3080, %v3582
        %v3749 = vadd.f32 %v3088, %v3584
        %v3750 = vadd.f32 %v3087, %v3586
        %v3751 = vadd.f32 %v3089, %v3588
        %v3752 = vadd.f32 %v3097, %v3590
        %v3753 = vadd.f32 %v3105, %v3592
        %v3754 = vadd.f32 %v3104, %v3594
        %v3755 = vadd.f32 %v3114, %v3596
        %v3756 = vadd.f32 %v3122, %v3598
        %v3757 = vadd.f32 %v3121, %v3600
        %v3758 = vadd.f32 %v3123, %v3602
        %v3759 = vadd.f32 %v3131, %v3604
        %v3760 = vadd.f32 %v3139, %v3606
        %v3761 = vadd.f32 %v3138, %v3608
        %v3762 = vadd.f32 %v3140, %v3610
        %v3763 = vadd.f32 %v3156, %v3612
        %v3764 = vadd.f32 %v3155, %v3614
        %v3765 = vadd.f32 %v3157, %v3616
        %v3766 = vadd.f32 %v3165, %v3618
        %v3767 = vadd.f32 %v3173, %v3620
        %v3768 = vadd.f32 %v3172, %v3622
        %v3769 = vadd.f32 %v3174, %v3624
        %v3770 = vadd.f32 %v3182, %v3626
        %v3771 = vadd.f32 %v3189, %v3628
        %v3772 = vadd.f32 %v3191, %v3630
        %v3773 = vadd.f32 %v3199, %v3632
        %v3774 = vadd.f32 %v3207, %v3634
        %v3775 = vadd.f32 %v3206, %v3636
        %v3776 = vadd.f32 %v3208, %v3638
        %v3777 = vadd.f32 %v3216, %v3640
        %v3778 = vadd.f32 %v3224, %v3642
        %v3779 = vadd.f32 %v3225, %v3644
        %v3780 = vadd.f32 %v3233, %v3646
        %v3781 = vadd.f32 %v3241, %v3648
        %v3782 = vadd.f32 %v3240, %v3650
        %v3783 = vadd.f32 %v3242, %v3652
        %v3784 = vadd.f32 %v3250, %v3654
        %v3785 = vadd.f32 %v3258, %v3656
        %v3786 = vadd.f32 %v3257, %v3658
        %3787 = vrot.lane.b32.xlu0 %v2969, 112
        %v3788 = vpop.permute.xlu0 %3787
        %3789 = vrot.lane.b32.xlu0 %v2968, 112
        %v3790 = vpop.permute.xlu0 %3789
        %3791 = vrot.lane.b32.xlu0 %v2970, 112
        %v3792 = vpop.permute.xlu0 %3791
        %3793 = vrot.lane.b32.xlu0 %v2978, 112
        %v3794 = vpop.permute.xlu0 %3793
        %3795 = vrot.lane.b32.xlu0 %v2986, 112
        %v3796 = vpop.permute.xlu0 %3795
        %3797 = vrot.lane.b32.xlu0 %v2985, 112
        %v3798 = vpop.permute.xlu0 %3797
        %3799 = vrot.lane.b32.xlu0 %v2987, 112
        %v3800 = vpop.permute.xlu0 %3799
        %3801 = vrot.lane.b32.xlu0 %v2995, 112
        %v3802 = vpop.permute.xlu0 %3801
        %3803 = vrot.lane.b32.xlu0 %v3002, 112
        %v3804 = vpop.permute.xlu0 %3803
        %3805 = vrot.lane.b32.xlu0 %v3004, 112
        %v3806 = vpop.permute.xlu0 %3805
        %3807 = vrot.lane.b32.xlu0 %v3012, 112
        %v3808 = vpop.permute.xlu0 %3807
        %3809 = vrot.lane.b32.xlu0 %v3020, 112
        %v3810 = vpop.permute.xlu0 %3809
        %3811 = vrot.lane.b32.xlu0 %v3019, 112
        %v3812 = vpop.permute.xlu0 %3811
        %3813 = vrot.lane.b32.xlu0 %v3021, 112
        %v3814 = vpop.permute.xlu0 %3813
        %3815 = vrot.lane.b32.xlu0 %v3029, 112
        %v3816 = vpop.permute.xlu0 %3815
        %3817 = vrot.lane.b32.xlu0 %v3037, 112
        %v3818 = vpop.permute.xlu0 %3817
        %3819 = vrot.lane.b32.xlu0 %v3038, 112
        %v3820 = vpop.permute.xlu0 %3819
        %3821 = vrot.lane.b32.xlu0 %v3046, 112
        %v3822 = vpop.permute.xlu0 %3821
        %3823 = vrot.lane.b32.xlu0 %v3054, 112
        %v3824 = vpop.permute.xlu0 %3823
        %3825 = vrot.lane.b32.xlu0 %v3053, 112
        %v3826 = vpop.permute.xlu0 %3825
        %3827 = vrot.lane.b32.xlu0 %v3055, 112
        %v3828 = vpop.permute.xlu0 %3827
        %3829 = vrot.lane.b32.xlu0 %v3063, 112
        %v3830 = vpop.permute.xlu0 %3829
        %3831 = vrot.lane.b32.xlu0 %v3071, 112
        %v3832 = vpop.permute.xlu0 %3831
        %3833 = vrot.lane.b32.xlu0 %v3070, 112
        %v3834 = vpop.permute.xlu0 %3833
        %3835 = vrot.lane.b32.xlu0 %v3080, 112
        %v3836 = vpop.permute.xlu0 %3835
        %3837 = vrot.lane.b32.xlu0 %v3088, 112
        %v3838 = vpop.permute.xlu0 %3837
        %3839 = vrot.lane.b32.xlu0 %v3087, 112
        %v3840 = vpop.permute.xlu0 %3839
        %3841 = vrot.lane.b32.xlu0 %v3089, 112
        %v3842 = vpop.permute.xlu0 %3841
        %3843 = vrot.lane.b32.xlu0 %v3097, 112
        %v3844 = vpop.permute.xlu0 %3843
        %3845 = vrot.lane.b32.xlu0 %v3105, 112
        %v3846 = vpop.permute.xlu0 %3845
        %3847 = vrot.lane.b32.xlu0 %v3104, 112
        %v3848 = vpop.permute.xlu0 %3847
        %3849 = vrot.lane.b32.xlu0 %v3106, 112
        %v3850 = vpop.permute.xlu0 %3849
        %3851 = vrot.lane.b32.xlu0 %v3122, 112
        %v3852 = vpop.permute.xlu0 %3851
        %3853 = vrot.lane.b32.xlu0 %v3121, 112
        %v3854 = vpop.permute.xlu0 %3853
        %3855 = vrot.lane.b32.xlu0 %v3123, 112
        %v3856 = vpop.permute.xlu0 %3855
        %3857 = vrot.lane.b32.xlu0 %v3131, 112
        %v3858 = vpop.permute.xlu0 %3857
        %3859 = vrot.lane.b32.xlu0 %v3139, 112
        %v3860 = vpop.permute.xlu0 %3859
        %3861 = vrot.lane.b32.xlu0 %v3138, 112
        %v3862 = vpop.permute.xlu0 %3861
        %3863 = vrot.lane.b32.xlu0 %v3140, 112
        %v3864 = vpop.permute.xlu0 %3863
        %3865 = vrot.lane.b32.xlu0 %v3148, 112
        %v3866 = vpop.permute.xlu0 %3865
        %3867 = vrot.lane.b32.xlu0 %v3155, 112
        %v3868 = vpop.permute.xlu0 %3867
        %3869 = vrot.lane.b32.xlu0 %v3157, 112
        %v3870 = vpop.permute.xlu0 %3869
        %3871 = vrot.lane.b32.xlu0 %v3165, 112
        %v3872 = vpop.permute.xlu0 %3871
        %3873 = vrot.lane.b32.xlu0 %v3173, 112
        %v3874 = vpop.permute.xlu0 %3873
        %3875 = vrot.lane.b32.xlu0 %v3172, 112
        %v3876 = vpop.permute.xlu0 %3875
        %3877 = vrot.lane.b32.xlu0 %v3174, 112
        %v3878 = vpop.permute.xlu0 %3877
        %3879 = vrot.lane.b32.xlu0 %v3182, 112
        %v3880 = vpop.permute.xlu0 %3879
        %3881 = vrot.lane.b32.xlu0 %v3190, 112
        %v3882 = vpop.permute.xlu0 %3881
        %3883 = vrot.lane.b32.xlu0 %v3191, 112
        %v3884 = vpop.permute.xlu0 %3883
        %3885 = vrot.lane.b32.xlu0 %v3199, 112
        %v3886 = vpop.permute.xlu0 %3885
        %3887 = vrot.lane.b32.xlu0 %v3207, 112
        %v3888 = vpop.permute.xlu0 %3887
        %3889 = vrot.lane.b32.xlu0 %v3206, 112
        %v3890 = vpop.permute.xlu0 %3889
        %3891 = vrot.lane.b32.xlu0 %v3208, 112
        %v3892 = vpop.permute.xlu0 %3891
        %3893 = vrot.lane.b32.xlu0 %v3216, 112
        %v3894 = vpop.permute.xlu0 %3893
        %3895 = vrot.lane.b32.xlu0 %v3224, 112
        %v3896 = vpop.permute.xlu0 %3895
        %3897 = vrot.lane.b32.xlu0 %v3223, 112
        %v3898 = vpop.permute.xlu0 %3897
        %3899 = vrot.lane.b32.xlu0 %v3233, 112
        %v3900 = vpop.permute.xlu0 %3899
        %3901 = vrot.lane.b32.xlu0 %v3241, 112
        %v3902 = vpop.permute.xlu0 %3901
        %3903 = vrot.lane.b32.xlu0 %v3240, 112
        %v3904 = vpop.permute.xlu0 %3903
        %3905 = vrot.lane.b32.xlu0 %v3242, 112
        %v3906 = vpop.permute.xlu0 %3905
        %3907 = vrot.lane.b32.xlu0 %v3250, 112
        %v3908 = vpop.permute.xlu0 %3907
        %3909 = vrot.lane.b32.xlu0 %v3258, 112
        %v3910 = vpop.permute.xlu0 %3909
        %3911 = vrot.lane.b32.xlu0 %v3257, 112
        %v3912 = vpop.permute.xlu0 %3911
        %3913 = vrot.lane.b32.xlu0 %v3259, 112
        %v3914 = vpop.permute.xlu0 %3913
        %v3979 = vadd.f32 %v3723, %v3788
        %v3980 = vadd.f32 %v3724, %v3790
        %v3981 = vadd.f32 %v3725, %v3792
        %v3982 = vadd.f32 %v3726, %v3794
        %v3983 = vadd.f32 %v3727, %v3796
        %v3984 = vadd.f32 %v3728, %v3798
        %v3985 = vadd.f32 %v3729, %v3800
        %v3986 = vadd.f32 %v3730, %v3802
        %v3987 = vadd.f32 %v3731, %v3804
        %v3988 = vadd.f32 %v3732, %v3806
        %v3989 = vadd.f32 %v3733, %v3808
        %v3990 = vadd.f32 %v3734, %v3810
        %v3991 = vadd.f32 %v3735, %v3812
        %v3992 = vadd.f32 %v3736, %v3814
        %v3993 = vadd.f32 %v3737, %v3816
        %v3994 = vadd.f32 %v3738, %v3818
        %v3995 = vadd.f32 %v3739, %v3820
        %v3996 = vadd.f32 %v3740, %v3822
        %v3997 = vadd.f32 %v3741, %v3824
        %v3998 = vadd.f32 %v3742, %v3826
        %v3999 = vadd.f32 %v3743, %v3828
        %v4000 = vadd.f32 %v3744, %v3830
        %v4001 = vadd.f32 %v3745, %v3832
        %v4002 = vadd.f32 %v3746, %v3834
        %v4003 = vadd.f32 %v3747, %v3836
        %v4004 = vadd.f32 %v3748, %v3838
        %v4005 = vadd.f32 %v3749, %v3840
        %v4006 = vadd.f32 %v3750, %v3842
        %v4007 = vadd.f32 %v3751, %v3844
        %v4008 = vadd.f32 %v3752, %v3846
        %v4009 = vadd.f32 %v3753, %v3848
        %v4010 = vadd.f32 %v3754, %v3850
        %v4011 = vadd.f32 %v3755, %v3852
        %v4012 = vadd.f32 %v3756, %v3854
        %v4013 = vadd.f32 %v3757, %v3856
        %v4014 = vadd.f32 %v3758, %v3858
        %v4015 = vadd.f32 %v3759, %v3860
        %v4016 = vadd.f32 %v3760, %v3862
        %v4017 = vadd.f32 %v3761, %v3864
        %v4018 = vadd.f32 %v3762, %v3866
        %v4019 = vadd.f32 %v3763, %v3868
        %v4020 = vadd.f32 %v3764, %v3870
        %v4021 = vadd.f32 %v3765, %v3872
        %v4022 = vadd.f32 %v3766, %v3874
        %v4023 = vadd.f32 %v3767, %v3876
        %v4024 = vadd.f32 %v3768, %v3878
        %v4025 = vadd.f32 %v3769, %v3880
        %v4026 = vadd.f32 %v3770, %v3882
        %v4027 = vadd.f32 %v3771, %v3884
        %v4028 = vadd.f32 %v3772, %v3886
        %v4029 = vadd.f32 %v3773, %v3888
        %v4030 = vadd.f32 %v3774, %v3890
        %v4031 = vadd.f32 %v3775, %v3892
        %v4032 = vadd.f32 %v3776, %v3894
        %v4033 = vadd.f32 %v3777, %v3896
        %v4034 = vadd.f32 %v3778, %v3898
        %v4035 = vadd.f32 %v3779, %v3900
        %v4036 = vadd.f32 %v3780, %v3902
        %v4037 = vadd.f32 %v3781, %v3904
        %v4038 = vadd.f32 %v3782, %v3906
        %v4039 = vadd.f32 %v3783, %v3908
        %v4040 = vadd.f32 %v3784, %v3910
        %v4041 = vadd.f32 %v3785, %v3912
        %v4042 = vadd.f32 %v3786, %v3914
        %v4043 = vld [vmem:[%s7] sm:$0x1]
        %v4045 = vlaneseq
        %v4046 = vshrl.u32 %v4045, 7
        %v4047 = vsub.s32 0, %v4046
        %v4048 = vrot.slane %v4043, %v4047
        %v4049 = vcombine.high %v4048, %v4048
        %v4051 = vunpack.c.l.s4 1983009808
        %v4052 = vunpack.c.0.s8 %v4051
        %v4053 = vlaneseq
        %v4054 = vshrl.u32 %v4053, 7
        %v4055 = vsub.s32 %v4052, %v4054
        %v4056 = vrot.slane %v4048, %v4055
        %v4058 = vunpack.c.l.s4 1983009808
        %v4059 = vunpack.c.0.s8 %v4058
        %v4060 = vlaneseq
        %v4061 = vshrl.u32 %v4060, 7
        %v4062 = vsub.s32 %v4059, %v4061
        %v4063 = vrot.slane %v4049, %v4062
        %v4064 = vcombine.high %v4056, %v4056
        %v4065 = vcombine.high %v4063, %v4063
        %v4070 = vadd.f32 %v3979, %v4056
        %v4071 = vadd.f32 %v3980, %v4064
        %v4072 = vadd.f32 %v3981, %v4063
        %v4073 = vadd.f32 %v3982, %v4065
        %v4074 = vadd.f32 %v3983, %v4056
        %v4075 = vadd.f32 %v3984, %v4064
        %v4076 = vadd.f32 %v3985, %v4063
        %v4077 = vadd.f32 %v3986, %v4065
        %v4078 = vadd.f32 %v3987, %v4056
        %v4079 = vadd.f32 %v3988, %v4064
        %v4080 = vadd.f32 %v3989, %v4063
        %v4081 = vadd.f32 %v3990, %v4065
        %v4082 = vadd.f32 %v3991, %v4056
        %v4083 = vadd.f32 %v3992, %v4064
        %v4084 = vadd.f32 %v3993, %v4063
        %v4085 = vadd.f32 %v3994, %v4065
        %v4086 = vadd.f32 %v3995, %v4056
        %v4087 = vadd.f32 %v3996, %v4064
        %v4088 = vadd.f32 %v3997, %v4063
        %v4089 = vadd.f32 %v3998, %v4065
        %v4090 = vadd.f32 %v3999, %v4056
        %v4091 = vadd.f32 %v4000, %v4064
        %v4092 = vadd.f32 %v4001, %v4063
        %v4093 = vadd.f32 %v4002, %v4065
        %v4094 = vadd.f32 %v4003, %v4056
        %v4095 = vadd.f32 %v4004, %v4064
        %v4096 = vadd.f32 %v4005, %v4063
        %v4097 = vadd.f32 %v4006, %v4065
        %v4098 = vadd.f32 %v4007, %v4056
        %v4099 = vadd.f32 %v4008, %v4064
        %v4100 = vadd.f32 %v4009, %v4063
        %v4101 = vadd.f32 %v4010, %v4065
        %v4102 = vadd.f32 %v4011, %v4056
        %v4103 = vadd.f32 %v4012, %v4064
        %v4104 = vadd.f32 %v4013, %v4063
        %v4105 = vadd.f32 %v4014, %v4065
        %v4106 = vadd.f32 %v4015, %v4056
        %v4107 = vadd.f32 %v4016, %v4064
        %v4108 = vadd.f32 %v4017, %v4063
        %v4109 = vadd.f32 %v4018, %v4065
        %v4110 = vadd.f32 %v4019, %v4056
        %v4111 = vadd.f32 %v4020, %v4064
        %v4112 = vadd.f32 %v4021, %v4063
        %v4113 = vadd.f32 %v4022, %v4065
        %v4114 = vadd.f32 %v4023, %v4056
        %v4115 = vadd.f32 %v4024, %v4064
        %v4116 = vadd.f32 %v4025, %v4063
        %v4117 = vadd.f32 %v4026, %v4065
        %v4118 = vadd.f32 %v4027, %v4056
        %v4119 = vadd.f32 %v4028, %v4064
        %v4120 = vadd.f32 %v4029, %v4063
        %v4121 = vadd.f32 %v4030, %v4065
        %v4122 = vadd.f32 %v4031, %v4056
        %v4123 = vadd.f32 %v4032, %v4064
        %v4124 = vadd.f32 %v4033, %v4063
        %v4125 = vadd.f32 %v4034, %v4065
        %v4126 = vadd.f32 %v4035, %v4056
        %v4127 = vadd.f32 %v4036, %v4064
        %v4128 = vadd.f32 %v4037, %v4063
        %v4129 = vadd.f32 %v4038, %v4065
        %v4130 = vadd.f32 %v4039, %v4056
        %v4131 = vadd.f32 %v4040, %v4064
        %v4132 = vadd.f32 %v4041, %v4063
        %v4133 = vadd.f32 %v4042, %v4065
        %v4198 = vcombine.low %v4070, %v4071
        %v4199 = vcombine.low %v4072, %v4073
        %v4201 = vunpack.c.l.s4 1983009808
        %v4202 = vunpack.c.0.s8 %v4201
        %v4203 = vlaneseq
        %v4204 = vshrl.u32 %v4203, 7
        %v4205 = vsub.s32 %v4202, %v4204
        %v4206 = vrot.slane %v4198, %v4205
        %v4208 = vunpack.c.l.s4 1983009808
        %v4209 = vunpack.c.0.s8 %v4208
        %v4210 = vlaneseq
        %v4211 = vshrl.u32 %v4210, 7
        %v4212 = vsub.s32 %v4209, %v4211
        %v4213 = vrot.slane %v4199, %v4212
        %v4214 = vcombine.low %v4206, %v4213
        %v4215 = vcombine.low %v4074, %v4075
        %v4216 = vcombine.low %v4076, %v4077
        %v4218 = vunpack.c.l.s4 1983009808
        %v4219 = vunpack.c.0.s8 %v4218
        %v4220 = vlaneseq
        %v4221 = vshrl.u32 %v4220, 7
        %v4222 = vsub.s32 %v4219, %v4221
        %v4223 = vrot.slane %v4215, %v4222
        %v4225 = vunpack.c.l.s4 1983009808
        %v4226 = vunpack.c.0.s8 %v4225
        %v4227 = vlaneseq
        %v4228 = vshrl.u32 %v4227, 7
        %v4229 = vsub.s32 %v4226, %v4228
        %v4230 = vrot.slane %v4216, %v4229
        %v4231 = vcombine.low %v4223, %v4230
        %v4232 = vcombine.low %v4078, %v4079
        %v4233 = vcombine.low %v4080, %v4081
        %v4235 = vunpack.c.l.s4 1983009808
        %v4236 = vunpack.c.0.s8 %v4235
        %v4237 = vlaneseq
        %v4238 = vshrl.u32 %v4237, 7
        %v4239 = vsub.s32 %v4236, %v4238
        %v4240 = vrot.slane %v4232, %v4239
        %v4242 = vunpack.c.l.s4 1983009808
        %v4243 = vunpack.c.0.s8 %v4242
        %v4244 = vlaneseq
        %v4245 = vshrl.u32 %v4244, 7
        %v4246 = vsub.s32 %v4243, %v4245
        %v4247 = vrot.slane %v4233, %v4246
        %v4248 = vcombine.low %v4240, %v4247
        %v4249 = vcombine.low %v4082, %v4083
        %v4250 = vcombine.low %v4084, %v4085
        %v4252 = vunpack.c.l.s4 1983009808
        %v4253 = vunpack.c.0.s8 %v4252
        %v4254 = vlaneseq
        %v4255 = vshrl.u32 %v4254, 7
        %v4256 = vsub.s32 %v4253, %v4255
        %v4257 = vrot.slane %v4249, %v4256
        %v4259 = vunpack.c.l.s4 1983009808
        %v4260 = vunpack.c.0.s8 %v4259
        %v4261 = vlaneseq
        %v4262 = vshrl.u32 %v4261, 7
        %v4263 = vsub.s32 %v4260, %v4262
        %v4264 = vrot.slane %v4250, %v4263
        %v4265 = vcombine.low %v4257, %v4264
        %v4266 = vcombine.low %v4086, %v4087
        %v4267 = vcombine.low %v4088, %v4089
        %v4269 = vunpack.c.l.s4 1983009808
        %v4270 = vunpack.c.0.s8 %v4269
        %v4271 = vlaneseq
        %v4272 = vshrl.u32 %v4271, 7
        %v4273 = vsub.s32 %v4270, %v4272
        %v4274 = vrot.slane %v4266, %v4273
        %v4276 = vunpack.c.l.s4 1983009808
        %v4277 = vunpack.c.0.s8 %v4276
        %v4278 = vlaneseq
        %v4279 = vshrl.u32 %v4278, 7
        %v4280 = vsub.s32 %v4277, %v4279
        %v4281 = vrot.slane %v4267, %v4280
        %v4282 = vcombine.low %v4274, %v4281
        %v4283 = vcombine.low %v4090, %v4091
        %v4284 = vcombine.low %v4092, %v4093
        %v4286 = vunpack.c.l.s4 1983009808
        %v4287 = vunpack.c.0.s8 %v4286
        %v4288 = vlaneseq
        %v4289 = vshrl.u32 %v4288, 7
        %v4290 = vsub.s32 %v4287, %v4289
        %v4291 = vrot.slane %v4283, %v4290
        %v4293 = vunpack.c.l.s4 1983009808
        %v4294 = vunpack.c.0.s8 %v4293
        %v4295 = vlaneseq
        %v4296 = vshrl.u32 %v4295, 7
        %v4297 = vsub.s32 %v4294, %v4296
        %v4298 = vrot.slane %v4284, %v4297
        %v4299 = vcombine.low %v4291, %v4298
        %v4300 = vcombine.low %v4094, %v4095
        %v4301 = vcombine.low %v4096, %v4097
        %v4303 = vunpack.c.l.s4 1983009808
        %v4304 = vunpack.c.0.s8 %v4303
        %v4305 = vlaneseq
        %v4306 = vshrl.u32 %v4305, 7
        %v4307 = vsub.s32 %v4304, %v4306
        %v4308 = vrot.slane %v4300, %v4307
        %v4310 = vunpack.c.l.s4 1983009808
        %v4311 = vunpack.c.0.s8 %v4310
        %v4312 = vlaneseq
        %v4313 = vshrl.u32 %v4312, 7
        %v4314 = vsub.s32 %v4311, %v4313
        %v4315 = vrot.slane %v4301, %v4314
        %v4316 = vcombine.low %v4308, %v4315
        %v4317 = vcombine.low %v4098, %v4099
        %v4318 = vcombine.low %v4100, %v4101
        %v4320 = vunpack.c.l.s4 1983009808
        %v4321 = vunpack.c.0.s8 %v4320
        %v4322 = vlaneseq
        %v4323 = vshrl.u32 %v4322, 7
        %v4324 = vsub.s32 %v4321, %v4323
        %v4325 = vrot.slane %v4317, %v4324
        %v4327 = vunpack.c.l.s4 1983009808
        %v4328 = vunpack.c.0.s8 %v4327
        %v4329 = vlaneseq
        %v4330 = vshrl.u32 %v4329, 7
        %v4331 = vsub.s32 %v4328, %v4330
        %v4332 = vrot.slane %v4318, %v4331
        %v4333 = vcombine.low %v4325, %v4332
        %v4334 = vcombine.low %v4102, %v4103
        %v4335 = vcombine.low %v4104, %v4105
        %v4337 = vunpack.c.l.s4 1983009808
        %v4338 = vunpack.c.0.s8 %v4337
        %v4339 = vlaneseq
        %v4340 = vshrl.u32 %v4339, 7
        %v4341 = vsub.s32 %v4338, %v4340
        %v4342 = vrot.slane %v4334, %v4341
        %v4344 = vunpack.c.l.s4 1983009808
        %v4345 = vunpack.c.0.s8 %v4344
        %v4346 = vlaneseq
        %v4347 = vshrl.u32 %v4346, 7
        %v4348 = vsub.s32 %v4345, %v4347
        %v4349 = vrot.slane %v4335, %v4348
        %v4350 = vcombine.low %v4342, %v4349
        %v4351 = vcombine.low %v4106, %v4107
        %v4352 = vcombine.low %v4108, %v4109
        %v4354 = vunpack.c.l.s4 1983009808
        %v4355 = vunpack.c.0.s8 %v4354
        %v4356 = vlaneseq
        %v4357 = vshrl.u32 %v4356, 7
        %v4358 = vsub.s32 %v4355, %v4357
        %v4359 = vrot.slane %v4351, %v4358
        %v4361 = vunpack.c.l.s4 1983009808
        %v4362 = vunpack.c.0.s8 %v4361
        %v4363 = vlaneseq
        %v4364 = vshrl.u32 %v4363, 7
        %v4365 = vsub.s32 %v4362, %v4364
        %v4366 = vrot.slane %v4352, %v4365
        %v4367 = vcombine.low %v4359, %v4366
        %v4368 = vcombine.low %v4110, %v4111
        %v4369 = vcombine.low %v4112, %v4113
        %v4371 = vunpack.c.l.s4 1983009808
        %v4372 = vunpack.c.0.s8 %v4371
        %v4373 = vlaneseq
        %v4374 = vshrl.u32 %v4373, 7
        %v4375 = vsub.s32 %v4372, %v4374
        %v4376 = vrot.slane %v4368, %v4375
        %v4378 = vunpack.c.l.s4 1983009808
        %v4379 = vunpack.c.0.s8 %v4378
        %v4380 = vlaneseq
        %v4381 = vshrl.u32 %v4380, 7
        %v4382 = vsub.s32 %v4379, %v4381
        %v4383 = vrot.slane %v4369, %v4382
        %v4384 = vcombine.low %v4376, %v4383
        %v4385 = vcombine.low %v4114, %v4115
        %v4386 = vcombine.low %v4116, %v4117
        %v4388 = vunpack.c.l.s4 1983009808
        %v4389 = vunpack.c.0.s8 %v4388
        %v4390 = vlaneseq
        %v4391 = vshrl.u32 %v4390, 7
        %v4392 = vsub.s32 %v4389, %v4391
        %v4393 = vrot.slane %v4385, %v4392
        %v4395 = vunpack.c.l.s4 1983009808
        %v4396 = vunpack.c.0.s8 %v4395
        %v4397 = vlaneseq
        %v4398 = vshrl.u32 %v4397, 7
        %v4399 = vsub.s32 %v4396, %v4398
        %v4400 = vrot.slane %v4386, %v4399
        %v4401 = vcombine.low %v4393, %v4400
        %v4402 = vcombine.low %v4118, %v4119
        %v4403 = vcombine.low %v4120, %v4121
        %v4405 = vunpack.c.l.s4 1983009808
        %v4406 = vunpack.c.0.s8 %v4405
        %v4407 = vlaneseq
        %v4408 = vshrl.u32 %v4407, 7
        %v4409 = vsub.s32 %v4406, %v4408
        %v4410 = vrot.slane %v4402, %v4409
        %v4412 = vunpack.c.l.s4 1983009808
        %v4413 = vunpack.c.0.s8 %v4412
        %v4414 = vlaneseq
        %v4415 = vshrl.u32 %v4414, 7
        %v4416 = vsub.s32 %v4413, %v4415
        %v4417 = vrot.slane %v4403, %v4416
        %v4418 = vcombine.low %v4410, %v4417
        %v4419 = vcombine.low %v4122, %v4123
        %v4420 = vcombine.low %v4124, %v4125
        %v4422 = vunpack.c.l.s4 1983009808
        %v4423 = vunpack.c.0.s8 %v4422
        %v4424 = vlaneseq
        %v4425 = vshrl.u32 %v4424, 7
        %v4426 = vsub.s32 %v4423, %v4425
        %v4427 = vrot.slane %v4419, %v4426
        %v4429 = vunpack.c.l.s4 1983009808
        %v4430 = vunpack.c.0.s8 %v4429
        %v4431 = vlaneseq
        %v4432 = vshrl.u32 %v4431, 7
        %v4433 = vsub.s32 %v4430, %v4432
        %v4434 = vrot.slane %v4420, %v4433
        %v4435 = vcombine.low %v4427, %v4434
        %v4436 = vcombine.low %v4126, %v4127
        %v4437 = vcombine.low %v4128, %v4129
        %v4439 = vunpack.c.l.s4 1983009808
        %v4440 = vunpack.c.0.s8 %v4439
        %v4441 = vlaneseq
        %v4442 = vshrl.u32 %v4441, 7
        %v4443 = vsub.s32 %v4440, %v4442
        %v4444 = vrot.slane %v4436, %v4443
        %v4446 = vunpack.c.l.s4 1983009808
        %v4447 = vunpack.c.0.s8 %v4446
        %v4448 = vlaneseq
        %v4449 = vshrl.u32 %v4448, 7
        %v4450 = vsub.s32 %v4447, %v4449
        %v4451 = vrot.slane %v4437, %v4450
        %v4452 = vcombine.low %v4444, %v4451
        %v4453 = vcombine.low %v4130, %v4131
        %v4454 = vcombine.low %v4132, %v4133
        %v4456 = vunpack.c.l.s4 1983009808
        %v4457 = vunpack.c.0.s8 %v4456
        %v4458 = vlaneseq
        %v4459 = vshrl.u32 %v4458, 7
        %v4460 = vsub.s32 %v4457, %v4459
        %v4461 = vrot.slane %v4453, %v4460
        %v4463 = vunpack.c.l.s4 1983009808
        %v4464 = vunpack.c.0.s8 %v4463
        %v4465 = vlaneseq
        %v4466 = vshrl.u32 %v4465, 7
        %v4467 = vsub.s32 %v4464, %v4466
        %v4468 = vrot.slane %v4454, %v4467
        %v4469 = vcombine.low %v4461, %v4468
        %vm4486 = vcmask 64512
        %v4487 = vsel %vm4486, %v4214, -inf
        %v4488 = vsel %vm4486, %v4231, -inf
        %v4489 = vmax.f32 %v4487, %v4488
        %v4490 = vrot.slane %v4489, 4
        %v4491 = vmax.f32 %v4489, %v4490
        %v4492 = vrot.slane %v4491, 2
        %v4493 = vmax.f32 %v4491, %v4492
        %v4494 = vrot.slane %v4493, 1
        %v4495 = vmax.f32 %v4493, %v4494
        %v4496 = vsel %vm4486, %v4248, -inf
        %v4497 = vsel %vm4486, %v4265, -inf
        %v4498 = vmax.f32 %v4496, %v4497
        %v4499 = vrot.slane %v4498, 4
        %v4500 = vmax.f32 %v4498, %v4499
        %v4501 = vrot.slane %v4500, 2
        %v4502 = vmax.f32 %v4500, %v4501
        %v4503 = vrot.slane %v4502, 1
        %v4504 = vmax.f32 %v4502, %v4503
        %v4505 = vsel %vm4486, %v4282, -inf
        %v4506 = vsel %vm4486, %v4299, -inf
        %v4507 = vmax.f32 %v4505, %v4506
        %v4508 = vrot.slane %v4507, 4
        %v4509 = vmax.f32 %v4507, %v4508
        %v4510 = vrot.slane %v4509, 2
        %v4511 = vmax.f32 %v4509, %v4510
        %v4512 = vrot.slane %v4511, 1
        %v4513 = vmax.f32 %v4511, %v4512
        %v4514 = vsel %vm4486, %v4316, -inf
        %v4515 = vsel %vm4486, %v4333, -inf
        %v4516 = vmax.f32 %v4514, %v4515
        %v4517 = vrot.slane %v4516, 4
        %v4518 = vmax.f32 %v4516, %v4517
        %v4519 = vrot.slane %v4518, 2
        %v4520 = vmax.f32 %v4518, %v4519
        %v4521 = vrot.slane %v4520, 1
        %v4522 = vmax.f32 %v4520, %v4521
        %v4523 = vsel %vm4486, %v4350, -inf
        %v4524 = vsel %vm4486, %v4367, -inf
        %v4525 = vmax.f32 %v4523, %v4524
        %v4526 = vrot.slane %v4525, 4
        %v4527 = vmax.f32 %v4525, %v4526
        %v4528 = vrot.slane %v4527, 2
        %v4529 = vmax.f32 %v4527, %v4528
        %v4530 = vrot.slane %v4529, 1
        %v4531 = vmax.f32 %v4529, %v4530
        %v4532 = vsel %vm4486, %v4384, -inf
        %v4533 = vsel %vm4486, %v4401, -inf
        %v4534 = vmax.f32 %v4532, %v4533
        %v4535 = vrot.slane %v4534, 4
        %v4536 = vmax.f32 %v4534, %v4535
        %v4537 = vrot.slane %v4536, 2
        %v4538 = vmax.f32 %v4536, %v4537
        %v4539 = vrot.slane %v4538, 1
        %v4540 = vmax.f32 %v4538, %v4539
        %v4541 = vsel %vm4486, %v4418, -inf
        %v4542 = vsel %vm4486, %v4435, -inf
        %v4543 = vmax.f32 %v4541, %v4542
        %v4544 = vrot.slane %v4543, 4
        %v4545 = vmax.f32 %v4543, %v4544
        %v4546 = vrot.slane %v4545, 2
        %v4547 = vmax.f32 %v4545, %v4546
        %v4548 = vrot.slane %v4547, 1
        %v4549 = vmax.f32 %v4547, %v4548
        %v4550 = vsel %vm4486, %v4452, -inf
        %v4551 = vsel %vm4486, %v4469, -inf
        %v4552 = vmax.f32 %v4550, %v4551
        %v4553 = vrot.slane %v4552, 4
        %v4554 = vmax.f32 %v4552, %v4553
        %v4555 = vrot.slane %v4554, 2
        %v4556 = vmax.f32 %v4554, %v4555
        %v4557 = vrot.slane %v4556, 1
        %v4558 = vmax.f32 %v4556, %v4557
        %v4559 = vsel %vm4486, %v4214, 0.0
        %v4560 = vsel %vm4486, %v4231, 0.0
        %v4561 = vadd.f32 %v4559, %v4560
        %v4562 = vrot.slane %v4561, 4
        %v4563 = vadd.f32 %v4561, %v4562
        %v4564 = vrot.slane %v4563, 2
        %v4565 = vadd.f32 %v4563, %v4564
        %v4566 = vrot.slane %v4565, 1
        %v4567 = vadd.f32 %v4565, %v4566
        %v4568 = vsel %vm4486, %v4248, 0.0
        %v4569 = vsel %vm4486, %v4265, 0.0
        %v4570 = vadd.f32 %v4568, %v4569
        %v4571 = vrot.slane %v4570, 4
        %v4572 = vadd.f32 %v4570, %v4571
        %v4573 = vrot.slane %v4572, 2
        %v4574 = vadd.f32 %v4572, %v4573
        %v4575 = vrot.slane %v4574, 1
        %v4576 = vadd.f32 %v4574, %v4575
        %v4577 = vsel %vm4486, %v4282, 0.0
        %v4578 = vsel %vm4486, %v4299, 0.0
        %v4579 = vadd.f32 %v4577, %v4578
        %v4580 = vrot.slane %v4579, 4
        %v4581 = vadd.f32 %v4579, %v4580
        %v4582 = vrot.slane %v4581, 2
        %v4583 = vadd.f32 %v4581, %v4582
        %v4584 = vrot.slane %v4583, 1
        %v4585 = vadd.f32 %v4583, %v4584
        %v4586 = vsel %vm4486, %v4316, 0.0
        %v4587 = vsel %vm4486, %v4333, 0.0
        %v4588 = vadd.f32 %v4586, %v4587
        %v4589 = vrot.slane %v4588, 4
        %v4590 = vadd.f32 %v4588, %v4589
        %v4591 = vrot.slane %v4590, 2
        %v4592 = vadd.f32 %v4590, %v4591
        %v4593 = vrot.slane %v4592, 1
        %v4594 = vadd.f32 %v4592, %v4593
        %v4595 = vsel %vm4486, %v4350, 0.0
        %v4596 = vsel %vm4486, %v4367, 0.0
        %v4597 = vadd.f32 %v4595, %v4596
        %v4598 = vrot.slane %v4597, 4
        %v4599 = vadd.f32 %v4597, %v4598
        %v4600 = vrot.slane %v4599, 2
        %v4601 = vadd.f32 %v4599, %v4600
        %v4602 = vrot.slane %v4601, 1
        %v4603 = vadd.f32 %v4601, %v4602
        %v4604 = vsel %vm4486, %v4384, 0.0
        %v4605 = vsel %vm4486, %v4401, 0.0
        %v4606 = vadd.f32 %v4604, %v4605
        %v4607 = vrot.slane %v4606, 4
        %v4608 = vadd.f32 %v4606, %v4607
        %v4609 = vrot.slane %v4608, 2
        %v4610 = vadd.f32 %v4608, %v4609
        %v4611 = vrot.slane %v4610, 1
        %v4612 = vadd.f32 %v4610, %v4611
        %v4613 = vsel %vm4486, %v4418, 0.0
        %v4614 = vsel %vm4486, %v4435, 0.0
        %v4615 = vadd.f32 %v4613, %v4614
        %v4616 = vrot.slane %v4615, 4
        %v4617 = vadd.f32 %v4615, %v4616
        %v4618 = vrot.slane %v4617, 2
        %v4619 = vadd.f32 %v4617, %v4618
        %v4620 = vrot.slane %v4619, 1
        %v4621 = vadd.f32 %v4619, %v4620
        %v4622 = vsel %vm4486, %v4452, 0.0
        %v4623 = vsel %vm4486, %v4469, 0.0
        %v4624 = vadd.f32 %v4622, %v4623
        %v4625 = vrot.slane %v4624, 4
        %v4626 = vadd.f32 %v4624, %v4625
        %v4627 = vrot.slane %v4626, 2
        %v4628 = vadd.f32 %v4626, %v4627
        %v4629 = vrot.slane %v4628, 1
        %v4630 = vadd.f32 %v4628, %v4629
        %v4631 = vrcp.pop 16.0
        %v4632 = vmul.f32 %v4567, %v4631
        %v4633 = vmul.f32 %v4576, %v4631
        %v4634 = vmul.f32 %v4585, %v4631
        %v4635 = vmul.f32 %v4594, %v4631
        %v4636 = vmul.f32 %v4603, %v4631
        %v4637 = vmul.f32 %v4612, %v4631
        %v4638 = vmul.f32 %v4621, %v4631
        %v4639 = vmul.f32 %v4630, %v4631
        %v4640 = vld [vmem:[%s8] sm:$0xf]
        %v4641 = vld [vmem:[%s9] sm:$0x1]
        %v4642 = vld [vmem:[%s10] sm:$0xf]
        %v4643 = vld [vmem:[%s11] sm:$0x1]
        %v4644 = vpack.c.bf16 %v4495, %v4495
        %v4645 = vpack.c.bf16 %v4504, %v4504
        %v4646 = vpack.c.bf16 %v4513, %v4513
        %v4647 = vpack.c.bf16 %v4522, %v4522
        %v4648 = vpack.c.bf16 %v4531, %v4531
        %v4649 = vpack.c.bf16 %v4540, %v4540
        %v4650 = vpack.c.bf16 %v4549, %v4549
        %v4651 = vpack.c.bf16 %v4558, %v4558
        %v4653 = vlaneseq
        %v4654 = vshrl.u32 %v4653, 7
        %v4655 = vsub.s32 0, %v4654
        %v4656 = vrot.slane %v4641, %v4655
        %v4666 = vunpack.c.l.b16 %v4644
        %v4667 = vunpack.c.l.b16 %v4645
        %v4668 = vunpack.c.l.b16 %v4646
        %v4669 = vunpack.c.l.b16 %v4647
        %v4670 = vunpack.c.l.b16 %v4648
        %v4671 = vunpack.c.l.b16 %v4649
        %v4672 = vunpack.c.l.b16 %v4650
        %v4673 = vunpack.c.l.b16 %v4651
        %vm4674 = vcmask 1041409
        %v4675 = vsel %vm4674, %v4667, %v4666
        %v4676 = vsel %vm3325, %v4668, %v4675
        %vm4677 = vcmask 1043459
        %v4678 = vsel %vm4677, %v4669, %v4676
        %v4679 = vsel %vm3327, %v4670, %v4678
        %vm4680 = vcmask 1045509
        %v4681 = vsel %vm4680, %v4671, %v4679
        %v4682 = vsel %vm3329, %v4672, %v4681
        %vm4683 = vcmask 1047559
        %v4684 = vsel %vm4683, %v4673, %v4682
        %v4685 = vpack.c.b16 %v4684, %v4684
        %v4687 = vsel %vm4486, %v4685, 0
        %vm4689 = vcmask 1043456
        %v4691 = vsel %vm4689, %v4640, 0
        %4693 = vmatprep.subr.bf16.mxu0 0
        %4694 = vmatpush1.bf16.msra.mxu0 %v4691
        %4695 = vmatprep.subr.bf16.mxu0 0
        %4696 = vmatpush1.bf16.msra.mxu0 0
        %4697 = vmatprep.subr.bf16.mxu0 0
        %4698 = vmatpush1.bf16.msra.mxu0 0
        %4699 = vmatprep.subr.bf16.mxu0 0
        %4700 = vmatpush1.bf16.msra.mxu0 0
        %4701 = vmatprep.subr.bf16.mxu0 0
        %4702 = vmatpush1.bf16.msra.mxu0 0
        %4703 = vmatprep.subr.bf16.mxu0 0
        %4704 = vmatpush1.bf16.msra.mxu0 0
        %4705 = vmatprep.subr.bf16.mxu0 0
        %4706 = vmatpush1.bf16.msra.mxu0 0
        %4707 = vmatprep.subr.bf16.mxu0 0
        %4708 = vmatpush1.bf16.msra.mxu0 0
        %4709 = vmatprep.subr.bf16.mxu0 0
        %4710 = vmatpush1.bf16.msra.mxu0 0
        %4711 = vmatprep.subr.bf16.mxu0 0
        %4712 = vmatpush1.bf16.msra.mxu0 0
        %4713 = vmatprep.subr.bf16.mxu0 0
        %4714 = vmatpush1.bf16.msra.mxu0 0
        %4715 = vmatprep.subr.bf16.mxu0 0
        %4716 = vmatpush1.bf16.msra.mxu0 0
        %4717 = vmatprep.subr.bf16.mxu0 0
        %4718 = vmatpush1.bf16.msra.mxu0 0
        %4719 = vmatprep.subr.bf16.mxu0 0
        %4720 = vmatpush1.bf16.msra.mxu0 0
        %4721 = vmatprep.subr.bf16.mxu0 0
        %4722 = vmatpush1.bf16.msra.mxu0 0
        %4723 = vmatprep.subr.bf16.mxu0 0
        %4724 = vmatpush1.bf16.msra.mxu0 0
        %4725 = vmatprep.mubr.bf16.mxu0 0
        %4726 = vmatmul.mubr.bf16.gmra.mrb[0].mxu0 %v4687
        %v4727 = vpop.f32.mrb[0].mxu0
        %v4728 = vadd.f32 %v4656, %v4727
        %v4729 = vpop.f32.mrb[0].mxu0
        %v4730 = vpop.f32.mrb[0].mxu0
        %v4731 = vpop.f32.mrb[0].mxu0
        %4732 = vdwg.mxu0
        %v4733 = vxor.u32 %v4728, 2147483648
        %v4734 = vmul.f32 %v4733, 1.442695
        %v4735 = vpow.pop %v4734
        %v4736 = vadd.f32 %v4735, 1.0
        %v4737 = vrcp.pop %v4736
        %v4738 = vmul.f32 1.0, %v4737
        %v4739 = vpack.c.bf16 %v4738, %v4738
        %v4741 = vlaneseq
        %v4742 = vshrl.u32 %v4741, 7
        %v4743 = vsub.s32 0, %v4742
        %v4744 = vrot.slane %v4643, %v4743
        %v4747 = vsel %vm4486, %v4739, 0
        %v4750 = vsel %vm4689, %v4642, 0
        %4752 = vmatprep.subr.bf16.mxu0 0
        %4753 = vmatpush1.bf16.msra.mxu0 %v4750
        %4754 = vmatprep.subr.bf16.mxu0 0
        %4755 = vmatpush1.bf16.msra.mxu0 0
        %4756 = vmatprep.subr.bf16.mxu0 0
        %4757 = vmatpush1.bf16.msra.mxu0 0
        %4758 = vmatprep.subr.bf16.mxu0 0
        %4759 = vmatpush1.bf16.msra.mxu0 0
        %4760 = vmatprep.subr.bf16.mxu0 0
        %4761 = vmatpush1.bf16.msra.mxu0 0
        %4762 = vmatprep.subr.bf16.mxu0 0
        %4763 = vmatpush1.bf16.msra.mxu0 0
        %4764 = vmatprep.subr.bf16.mxu0 0
        %4765 = vmatpush1.bf16.msra.mxu0 0
        %4766 = vmatprep.subr.bf16.mxu0 0
        %4767 = vmatpush1.bf16.msra.mxu0 0
        %4768 = vmatprep.subr.bf16.mxu0 0
        %4769 = vmatpush1.bf16.msra.mxu0 0
        %4770 = vmatprep.subr.bf16.mxu0 0
        %4771 = vmatpush1.bf16.msra.mxu0 0
        %4772 = vmatprep.subr.bf16.mxu0 0
        %4773 = vmatpush1.bf16.msra.mxu0 0
        %4774 = vmatprep.subr.bf16.mxu0 0
        %4775 = vmatpush1.bf16.msra.mxu0 0
        %4776 = vmatprep.subr.bf16.mxu0 0
        %4777 = vmatpush1.bf16.msra.mxu0 0
        %4778 = vmatprep.subr.bf16.mxu0 0
        %4779 = vmatpush1.bf16.msra.mxu0 0
        %4780 = vmatprep.subr.bf16.mxu0 0
        %4781 = vmatpush1.bf16.msra.mxu0 0
        %4782 = vmatprep.subr.bf16.mxu0 0
        %4783 = vmatpush1.bf16.msra.mxu0 0
        %4784 = vmatprep.mubr.bf16.mxu0 0
        %4785 = vmatmul.mubr.bf16.gmra.mrb[0].mxu0 %v4747
        %v4786 = vpop.f32.mrb[0].mxu0
        %v4787 = vadd.f32 %v4744, %v4786
        %v4788 = vpop.f32.mrb[0].mxu0
        %v4789 = vpop.f32.mrb[0].mxu0
        %v4790 = vpop.f32.mrb[0].mxu0
        %4791 = vdwg.mxu0
        %v4792 = vxor.u32 %v4787, 2147483648
        %v4793 = vmul.f32 %v4792, 1.442695
        %v4794 = vpow.pop %v4793
        %v4795 = vadd.f32 %v4794, 1.0
        %v4796 = vrcp.pop %v4795
        %v4797 = vmul.f32 1.0, %v4796
        %v4798 = vld [vmem:[%s12] sm:$0xf]
        %v4799 = vld [vmem:[%s13] sm:$0x1]
        %v4800 = vld [vmem:[%s14] sm:$0xf]
        %v4801 = vld [vmem:[%s15] sm:$0x1]
        %v4802 = vpack.c.bf16 %v4632, %v4632
        %v4803 = vpack.c.bf16 %v4633, %v4633
        %v4804 = vpack.c.bf16 %v4634, %v4634
        %v4805 = vpack.c.bf16 %v4635, %v4635
        %v4806 = vpack.c.bf16 %v4636, %v4636
        %v4807 = vpack.c.bf16 %v4637, %v4637
        %v4808 = vpack.c.bf16 %v4638, %v4638
        %v4809 = vpack.c.bf16 %v4639, %v4639
        %v4811 = vlaneseq
        %v4812 = vshrl.u32 %v4811, 7
        %v4813 = vsub.s32 0, %v4812
        %v4814 = vrot.slane %v4799, %v4813
        %v4824 = vunpack.c.l.b16 %v4802
        %v4825 = vunpack.c.l.b16 %v4803
        %v4826 = vunpack.c.l.b16 %v4804
        %v4827 = vunpack.c.l.b16 %v4805
        %v4828 = vunpack.c.l.b16 %v4806
        %v4829 = vunpack.c.l.b16 %v4807
        %v4830 = vunpack.c.l.b16 %v4808
        %v4831 = vunpack.c.l.b16 %v4809
        %v4832 = vsel %vm4674, %v4825, %v4824
        %v4833 = vsel %vm3325, %v4826, %v4832
        %v4834 = vsel %vm4677, %v4827, %v4833
        %v4835 = vsel %vm3327, %v4828, %v4834
        %v4836 = vsel %vm4680, %v4829, %v4835
        %v4837 = vsel %vm3329, %v4830, %v4836
        %v4838 = vsel %vm4683, %v4831, %v4837
        %v4839 = vpack.c.b16 %v4838, %v4838
        %v4841 = vsel %vm4486, %v4839, 0
        %v4844 = vsel %vm4689, %v4798, 0
        %4846 = vmatprep.subr.bf16.mxu0 0
        %4847 = vmatpush1.bf16.msra.mxu0 %v4844
        %4848 = vmatprep.subr.bf16.mxu0 0
        %4849 = vmatpush1.bf16.msra.mxu0 0
        %4850 = vmatprep.subr.bf16.mxu0 0
        %4851 = vmatpush1.bf16.msra.mxu0 0
        %4852 = vmatprep.subr.bf16.mxu0 0
        %4853 = vmatpush1.bf16.msra.mxu0 0
        %4854 = vmatprep.subr.bf16.mxu0 0
        %4855 = vmatpush1.bf16.msra.mxu0 0
        %4856 = vmatprep.subr.bf16.mxu0 0
        %4857 = vmatpush1.bf16.msra.mxu0 0
        %4858 = vmatprep.subr.bf16.mxu0 0
        %4859 = vmatpush1.bf16.msra.mxu0 0
        %4860 = vmatprep.subr.bf16.mxu0 0
        %4861 = vmatpush1.bf16.msra.mxu0 0
        %4862 = vmatprep.subr.bf16.mxu0 0
        %4863 = vmatpush1.bf16.msra.mxu0 0
        %4864 = vmatprep.subr.bf16.mxu0 0
        %4865 = vmatpush1.bf16.msra.mxu0 0
        %4866 = vmatprep.subr.bf16.mxu0 0
        %4867 = vmatpush1.bf16.msra.mxu0 0
        %4868 = vmatprep.subr.bf16.mxu0 0
        %4869 = vmatpush1.bf16.msra.mxu0 0
        %4870 = vmatprep.subr.bf16.mxu0 0
        %4871 = vmatpush1.bf16.msra.mxu0 0
        %4872 = vmatprep.subr.bf16.mxu0 0
        %4873 = vmatpush1.bf16.msra.mxu0 0
        %4874 = vmatprep.subr.bf16.mxu0 0
        %4875 = vmatpush1.bf16.msra.mxu0 0
        %4876 = vmatprep.subr.bf16.mxu0 0
        %4877 = vmatpush1.bf16.msra.mxu0 0
        %4878 = vmatprep.mubr.bf16.mxu0 0
        %4879 = vmatmul.mubr.bf16.gmra.mrb[0].mxu0 %v4841
        %v4880 = vpop.f32.mrb[0].mxu0
        %v4881 = vadd.f32 %v4814, %v4880
        %v4882 = vpop.f32.mrb[0].mxu0
        %v4883 = vpop.f32.mrb[0].mxu0
        %v4884 = vpop.f32.mrb[0].mxu0
        %4885 = vdwg.mxu0
        %v4886 = vxor.u32 %v4881, 2147483648
        %v4887 = vmul.f32 %v4886, 1.442695
        %v4888 = vpow.pop %v4887
        %v4889 = vadd.f32 %v4888, 1.0
        %v4890 = vrcp.pop %v4889
        %v4891 = vmul.f32 1.0, %v4890
        %v4892 = vpack.c.bf16 %v4891, %v4891
        %v4894 = vlaneseq
        %v4895 = vshrl.u32 %v4894, 7
        %v4896 = vsub.s32 0, %v4895
        %v4897 = vrot.slane %v4801, %v4896
        %v4900 = vsel %vm4486, %v4892, 0
        %v4903 = vsel %vm4689, %v4800, 0
        %4905 = vmatprep.subr.bf16.mxu0 0
        %4906 = vmatpush1.bf16.msra.mxu0 %v4903
        %4907 = vmatprep.subr.bf16.mxu0 0
        %4908 = vmatpush1.bf16.msra.mxu0 0
        %4909 = vmatprep.subr.bf16.mxu0 0
        %4910 = vmatpush1.bf16.msra.mxu0 0
        %4911 = vmatprep.subr.bf16.mxu0 0
        %4912 = vmatpush1.bf16.msra.mxu0 0
        %4913 = vmatprep.subr.bf16.mxu0 0
        %4914 = vmatpush1.bf16.msra.mxu0 0
        %4915 = vmatprep.subr.bf16.mxu0 0
        %4916 = vmatpush1.bf16.msra.mxu0 0
        %4917 = vmatprep.subr.bf16.mxu0 0
        %4918 = vmatpush1.bf16.msra.mxu0 0
        %4919 = vmatprep.subr.bf16.mxu0 0
        %4920 = vmatpush1.bf16.msra.mxu0 0
        %4921 = vmatprep.subr.bf16.mxu0 0
        %4922 = vmatpush1.bf16.msra.mxu0 0
        %4923 = vmatprep.subr.bf16.mxu0 0
        %4924 = vmatpush1.bf16.msra.mxu0 0
        %4925 = vmatprep.subr.bf16.mxu0 0
        %4926 = vmatpush1.bf16.msra.mxu0 0
        %4927 = vmatprep.subr.bf16.mxu0 0
        %4928 = vmatpush1.bf16.msra.mxu0 0
        %4929 = vmatprep.subr.bf16.mxu0 0
        %4930 = vmatpush1.bf16.msra.mxu0 0
        %4931 = vmatprep.subr.bf16.mxu0 0
        %4932 = vmatpush1.bf16.msra.mxu0 0
        %4933 = vmatprep.subr.bf16.mxu0 0
        %4934 = vmatpush1.bf16.msra.mxu0 0
        %4935 = vmatprep.subr.bf16.mxu0 0
        %4936 = vmatpush1.bf16.msra.mxu0 0
        %4937 = vmatprep.mubr.bf16.mxu0 0
        %4938 = vmatmul.mubr.bf16.gmra.mrb[0].mxu0 %v4900
        %v4939 = vpop.f32.mrb[0].mxu0
        %v4940 = vadd.f32 %v4897, %v4939
        %v4941 = vpop.f32.mrb[0].mxu0
        %v4942 = vpop.f32.mrb[0].mxu0
        %v4943 = vpop.f32.mrb[0].mxu0
        %4944 = vdwg.mxu0
        %v4945 = vxor.u32 %v4940, 2147483648
        %v4946 = vmul.f32 %v4945, 1.442695
        %v4947 = vpow.pop %v4946
        %v4948 = vadd.f32 %v4947, 1.0
        %v4949 = vrcp.pop %v4948
        %v4950 = vmul.f32 1.0, %v4949
        %v4951 = vmul.f32 %v4797, %v4950
        %v4953 = vcombine.high %v4951, %v4951
        %v4955 = vunpack.c.l.s4 1966171168
        %v4956 = vunpack.c.0.s8 %v4955
        %v4957 = vlaneseq
        %v4958 = vshrl.u32 %v4957, 7
        %v4959 = vsub.s32 %v4956, %v4958
        %v4960 = vrot.slane %v4951, %v4959
        %v4962 = vunpack.c.l.s4 1966171168
        %v4963 = vunpack.c.0.s8 %v4962
        %v4964 = vlaneseq
        %v4965 = vshrl.u32 %v4964, 7
        %v4966 = vsub.s32 %v4963, %v4965
        %v4967 = vrot.slane %v4953, %v4966
        %v4968 = vcombine.high %v4960, %v4960
        %v4969 = vcombine.high %v4967, %v4967
        %v4971 = vunpack.c.l.s4 1966171168
        %v4972 = vunpack.c.0.s8 %v4971
        %v4973 = vlaneseq
        %v4974 = vshrl.u32 %v4973, 7
        %v4975 = vsub.s32 %v4972, %v4974
        %v4976 = vrot.slane %v4960, %v4975
        %v4978 = vunpack.c.l.s4 1966171168
        %v4979 = vunpack.c.0.s8 %v4978
        %v4980 = vlaneseq
        %v4981 = vshrl.u32 %v4980, 7
        %v4982 = vsub.s32 %v4979, %v4981
        %v4983 = vrot.slane %v4967, %v4982
        %v4985 = vunpack.c.l.s4 1966171168
        %v4986 = vunpack.c.0.s8 %v4985
        %v4987 = vlaneseq
        %v4988 = vshrl.u32 %v4987, 7
        %v4989 = vsub.s32 %v4986, %v4988
        %v4990 = vrot.slane %v4968, %v4989
        %v4992 = vunpack.c.l.s4 1966171168
        %v4993 = vunpack.c.0.s8 %v4992
        %v4994 = vlaneseq
        %v4995 = vshrl.u32 %v4994, 7
        %v4996 = vsub.s32 %v4993, %v4995
        %v4997 = vrot.slane %v4969, %v4996
        %v4998 = vcombine.high %v4976, %v4976
        %v4999 = vcombine.high %v4983, %v4983
        %v5000 = vcombine.high %v4990, %v4990
        %v5001 = vcombine.high %v4997, %v4997
        %v5002 = vlaneseq
        %v5003 = vshrl.u32 %v5002, 7
        %v5004 = vsub.s32 0, %v5003
        %v5005 = vrot.slane %v4976, %v5004
        %v5006 = vlaneseq
        %v5007 = vshrl.u32 %v5006, 7
        %v5008 = vsub.s32 0, %v5007
        %v5009 = vrot.slane %v4990, %v5008
        %v5010 = vlaneseq
        %v5011 = vshrl.u32 %v5010, 7
        %v5012 = vsub.s32 0, %v5011
        %v5013 = vrot.slane %v4998, %v5012
        %v5014 = vlaneseq
        %v5015 = vshrl.u32 %v5014, 7
        %v5016 = vsub.s32 0, %v5015
        %v5017 = vrot.slane %v5000, %v5016
        %v5018 = vlaneseq
        %v5019 = vshrl.u32 %v5018, 7
        %v5020 = vsub.s32 0, %v5019
        %v5021 = vrot.slane %v4983, %v5020
        %v5022 = vlaneseq
        %v5023 = vshrl.u32 %v5022, 7
        %v5024 = vsub.s32 0, %v5023
        %v5025 = vrot.slane %v4997, %v5024
        %v5026 = vlaneseq
        %v5027 = vshrl.u32 %v5026, 7
        %v5028 = vsub.s32 0, %v5027
        %v5029 = vrot.slane %v4999, %v5028
        %v5030 = vlaneseq
        %v5031 = vshrl.u32 %v5030, 7
        %v5032 = vsub.s32 0, %v5031
        %v5033 = vrot.slane %v5001, %v5032
        %v5042 = vmul.f32 %v5005, %v4214
        %v5043 = vmul.f32 %v5005, %v4231
        %v5044 = vmul.f32 %v5009, %v4248
        %v5045 = vmul.f32 %v5009, %v4265
        %v5046 = vmul.f32 %v5013, %v4282
        %v5047 = vmul.f32 %v5013, %v4299
        %v5048 = vmul.f32 %v5017, %v4316
        %v5049 = vmul.f32 %v5017, %v4333
        %v5050 = vmul.f32 %v5021, %v4350
        %v5051 = vmul.f32 %v5021, %v4367
        %v5052 = vmul.f32 %v5025, %v4384
        %v5053 = vmul.f32 %v5025, %v4401
        %v5054 = vmul.f32 %v5029, %v4418
        %v5055 = vmul.f32 %v5029, %v4435
        %v5056 = vmul.f32 %v5033, %v4452
        %v5057 = vmul.f32 %v5033, %v4469
        %v5058 = vsel %vm4486, %v5042, -inf
        %5059 = vmax.xlane.f32.xlu0 %v5058
        %v5060 = vpop.xlane.xlu0 %5059
        %v5061 = vsel %vm4486, %v5043, -inf
        %5062 = vmax.xlane.f32.xlu0 %v5061
        %v5063 = vpop.xlane.xlu0 %5062
        %v5064 = vsel %vm4486, %v5044, -inf
        %5065 = vmax.xlane.f32.xlu0 %v5064
        %v5066 = vpop.xlane.xlu0 %5065
        %v5067 = vsel %vm4486, %v5045, -inf
        %5068 = vmax.xlane.f32.xlu0 %v5067
        %v5069 = vpop.xlane.xlu0 %5068
        %v5070 = vsel %vm4486, %v5046, -inf
        %5071 = vmax.xlane.f32.xlu0 %v5070
        %v5072 = vpop.xlane.xlu0 %5071
        %v5073 = vsel %vm4486, %v5047, -inf
        %5074 = vmax.xlane.f32.xlu0 %v5073
        %v5075 = vpop.xlane.xlu0 %5074
        %v5076 = vsel %vm4486, %v5048, -inf
        %5077 = vmax.xlane.f32.xlu0 %v5076
        %v5078 = vpop.xlane.xlu0 %5077
        %v5079 = vsel %vm4486, %v5049, -inf
        %5080 = vmax.xlane.f32.xlu0 %v5079
        %v5081 = vpop.xlane.xlu0 %5080
        %v5082 = vsel %vm4486, %v5050, -inf
        %5083 = vmax.xlane.f32.xlu0 %v5082
        %v5084 = vpop.xlane.xlu0 %5083
        %v5085 = vsel %vm4486, %v5051, -inf
        %5086 = vmax.xlane.f32.xlu0 %v5085
        %v5087 = vpop.xlane.xlu0 %5086
        %v5088 = vsel %vm4486, %v5052, -inf
        %5089 = vmax.xlane.f32.xlu0 %v5088
        %v5090 = vpop.xlane.xlu0 %5089
        %v5091 = vsel %vm4486, %v5053, -inf
        %5092 = vmax.xlane.f32.xlu0 %v5091
        %v5093 = vpop.xlane.xlu0 %5092
        %v5094 = vsel %vm4486, %v5054, -inf
        %5095 = vmax.xlane.f32.xlu0 %v5094
        %v5096 = vpop.xlane.xlu0 %5095
        %v5097 = vsel %vm4486, %v5055, -inf
        %5098 = vmax.xlane.f32.xlu0 %v5097
        %v5099 = vpop.xlane.xlu0 %5098
        %v5100 = vsel %vm4486, %v5056, -inf
        %5101 = vmax.xlane.f32.xlu0 %v5100
        %v5102 = vpop.xlane.xlu0 %5101
        %v5103 = vsel %vm4486, %v5057, -inf
        %5104 = vmax.xlane.f32.xlu0 %v5103
        %v5105 = vpop.xlane.xlu0 %5104
        %v5106 = vsel %vm4486, %v5042, 0.0
        %5107 = vadd.xlane.f32.xlu0 %v5106
        %v5108 = vpop.xlane.xlu0 %5107
        %v5109 = vsel %vm4486, %v5043, 0.0
        %5110 = vadd.xlane.f32.xlu0 %v5109
        %v5111 = vpop.xlane.xlu0 %5110
        %v5112 = vsel %vm4486, %v5044, 0.0
        %5113 = vadd.xlane.f32.xlu0 %v5112
        %v5114 = vpop.xlane.xlu0 %5113
        %v5115 = vsel %vm4486, %v5045, 0.0
        %5116 = vadd.xlane.f32.xlu0 %v5115
        %v5117 = vpop.xlane.xlu0 %5116
        %v5118 = vsel %vm4486, %v5046, 0.0
        %5119 = vadd.xlane.f32.xlu0 %v5118
        %v5120 = vpop.xlane.xlu0 %5119
        %v5121 = vsel %vm4486, %v5047, 0.0
        %5122 = vadd.xlane.f32.xlu0 %v5121
        %v5123 = vpop.xlane.xlu0 %5122
        %v5124 = vsel %vm4486, %v5048, 0.0
        %5125 = vadd.xlane.f32.xlu0 %v5124
        %v5126 = vpop.xlane.xlu0 %5125
        %v5127 = vsel %vm4486, %v5049, 0.0
        %5128 = vadd.xlane.f32.xlu0 %v5127
        %v5129 = vpop.xlane.xlu0 %5128
        %v5130 = vsel %vm4486, %v5050, 0.0
        %5131 = vadd.xlane.f32.xlu0 %v5130
        %v5132 = vpop.xlane.xlu0 %5131
        %v5133 = vsel %vm4486, %v5051, 0.0
        %5134 = vadd.xlane.f32.xlu0 %v5133
        %v5135 = vpop.xlane.xlu0 %5134
        %v5136 = vsel %vm4486, %v5052, 0.0
        %5137 = vadd.xlane.f32.xlu0 %v5136
        %v5138 = vpop.xlane.xlu0 %5137
        %v5139 = vsel %vm4486, %v5053, 0.0
        %5140 = vadd.xlane.f32.xlu0 %v5139
        %v5141 = vpop.xlane.xlu0 %5140
        %v5142 = vsel %vm4486, %v5054, 0.0
        %5143 = vadd.xlane.f32.xlu0 %v5142
        %v5144 = vpop.xlane.xlu0 %5143
        %v5145 = vsel %vm4486, %v5055, 0.0
        %5146 = vadd.xlane.f32.xlu0 %v5145
        %v5147 = vpop.xlane.xlu0 %5146
        %v5148 = vsel %vm4486, %v5056, 0.0
        %5149 = vadd.xlane.f32.xlu0 %v5148
        %v5150 = vpop.xlane.xlu0 %5149
        %v5151 = vsel %vm4486, %v5057, 0.0
        %5152 = vadd.xlane.f32.xlu0 %v5151
        %v5153 = vpop.xlane.xlu0 %5152
        %v5154 = vmul.f32 %v5108, %v1809
        %v5155 = vmul.f32 %v5111, %v1809
        %v5156 = vmul.f32 %v5114, %v1809
        %v5157 = vmul.f32 %v5117, %v1809
        %v5158 = vmul.f32 %v5120, %v1809
        %v5159 = vmul.f32 %v5123, %v1809
        %v5160 = vmul.f32 %v5126, %v1809
        %v5161 = vmul.f32 %v5129, %v1809
        %v5162 = vmul.f32 %v5132, %v1809
        %v5163 = vmul.f32 %v5135, %v1809
        %v5164 = vmul.f32 %v5138, %v1809
        %v5165 = vmul.f32 %v5141, %v1809
        %v5166 = vmul.f32 %v5144, %v1809
        %v5167 = vmul.f32 %v5147, %v1809
        %v5168 = vmul.f32 %v5150, %v1809
        %v5169 = vmul.f32 %v5153, %v1809
        %v5186 = vlaneseq
        %v5187 = vand.u32 %v5186, 127
        %v5188 = vadd.s32 %v5187, 4294967295
        %v5189 = vlaneseq
        %v5190 = vshrl.u32 %v5189, 7
        %v5191 = vsub.s32 %v5188, %v5190
        %v5192 = vrot.slane %v5060, %v5191
        %v5193 = vadd.s32 %v5187, 4294967287
        %v5194 = vlaneseq
        %v5195 = vshrl.u32 %v5194, 7
        %v5196 = vsub.s32 %v5193, %v5195
        %v5197 = vrot.slane %v5063, %v5196
        %vm5198 = vcmask 138312
        %v5199 = vsel %vm5198, %v5197, %v5192
        %v5200 = vlaneseq
        %v5201 = vshrl.u32 %v5200, 7
        %v5202 = vsub.s32 %v5188, %v5201
        %v5203 = vrot.slane %v5066, %v5202
        %v5204 = vlaneseq
        %v5205 = vshrl.u32 %v5204, 7
        %v5206 = vsub.s32 %v5193, %v5205
        %v5207 = vrot.slane %v5069, %v5206
        %v5208 = vsel %vm5198, %v5207, %v5203
        %v5209 = vlaneseq
        %v5210 = vshrl.u32 %v5209, 7
        %v5211 = vsub.s32 %v5188, %v5210
        %v5212 = vrot.slane %v5072, %v5211
        %v5213 = vlaneseq
        %v5214 = vshrl.u32 %v5213, 7
        %v5215 = vsub.s32 %v5193, %v5214
        %v5216 = vrot.slane %v5075, %v5215
        %v5217 = vsel %vm5198, %v5216, %v5212
        %v5218 = vlaneseq
        %v5219 = vshrl.u32 %v5218, 7
        %v5220 = vsub.s32 %v5188, %v5219
        %v5221 = vrot.slane %v5078, %v5220
        %v5222 = vlaneseq
        %v5223 = vshrl.u32 %v5222, 7
        %v5224 = vsub.s32 %v5193, %v5223
        %v5225 = vrot.slane %v5081, %v5224
        %v5226 = vsel %vm5198, %v5225, %v5221
        %v5227 = vlaneseq
        %v5228 = vshrl.u32 %v5227, 7
        %v5229 = vsub.s32 %v5188, %v5228
        %v5230 = vrot.slane %v5084, %v5229
        %v5231 = vlaneseq
        %v5232 = vshrl.u32 %v5231, 7
        %v5233 = vsub.s32 %v5193, %v5232
        %v5234 = vrot.slane %v5087, %v5233
        %v5235 = vsel %vm5198, %v5234, %v5230
        %v5236 = vlaneseq
        %v5237 = vshrl.u32 %v5236, 7
        %v5238 = vsub.s32 %v5188, %v5237
        %v5239 = vrot.slane %v5090, %v5238
        %v5240 = vlaneseq
        %v5241 = vshrl.u32 %v5240, 7
        %v5242 = vsub.s32 %v5193, %v5241
        %v5243 = vrot.slane %v5093, %v5242
        %v5244 = vsel %vm5198, %v5243, %v5239
        %v5245 = vlaneseq
        %v5246 = vshrl.u32 %v5245, 7
        %v5247 = vsub.s32 %v5188, %v5246
        %v5248 = vrot.slane %v5096, %v5247
        %v5249 = vlaneseq
        %v5250 = vshrl.u32 %v5249, 7
        %v5251 = vsub.s32 %v5193, %v5250
        %v5252 = vrot.slane %v5099, %v5251
        %v5253 = vsel %vm5198, %v5252, %v5248
        %v5254 = vlaneseq
        %v5255 = vshrl.u32 %v5254, 7
        %v5256 = vsub.s32 %v5188, %v5255
        %v5257 = vrot.slane %v5102, %v5256
        %v5258 = vlaneseq
        %v5259 = vshrl.u32 %v5258, 7
        %v5260 = vsub.s32 %v5193, %v5259
        %v5261 = vrot.slane %v5105, %v5260
        %v5262 = vsel %vm5198, %v5261, %v5257
        %v5263 = vsel %vm4674, %v5208, %v5199
        %v5264 = vsel %vm3325, %v5217, %v5263
        %v5265 = vsel %vm4677, %v5226, %v5264
        %v5266 = vsel %vm3327, %v5235, %v5265
        %v5267 = vsel %vm4680, %v5244, %v5266
        %v5268 = vsel %vm3329, %v5253, %v5267
        %v5269 = vsel %vm4683, %v5262, %v5268
        %vm5271 = vcmask 7168
        %v5272 = vsel %vm5271, 0.0, %v5269
        %vm5273 = vcmask 138240
        %v5274 = vsel %vm5273, %v5272, 0.0
        %v5291 = vlaneseq
        %v5292 = vshrl.u32 %v5291, 7
        %v5293 = vsub.s32 %v5188, %v5292
        %v5294 = vrot.slane %v5154, %v5293
        %v5295 = vlaneseq
        %v5296 = vshrl.u32 %v5295, 7
        %v5297 = vsub.s32 %v5193, %v5296
        %v5298 = vrot.slane %v5155, %v5297
        %v5299 = vsel %vm5198, %v5298, %v5294
        %v5300 = vlaneseq
        %v5301 = vshrl.u32 %v5300, 7
        %v5302 = vsub.s32 %v5188, %v5301
        %v5303 = vrot.slane %v5156, %v5302
        %v5304 = vlaneseq
        %v5305 = vshrl.u32 %v5304, 7
        %v5306 = vsub.s32 %v5193, %v5305
        %v5307 = vrot.slane %v5157, %v5306
        %v5308 = vsel %vm5198, %v5307, %v5303
        %v5309 = vlaneseq
        %v5310 = vshrl.u32 %v5309, 7
        %v5311 = vsub.s32 %v5188, %v5310
        %v5312 = vrot.slane %v5158, %v5311
        %v5313 = vlaneseq
        %v5314 = vshrl.u32 %v5313, 7
        %v5315 = vsub.s32 %v5193, %v5314
        %v5316 = vrot.slane %v5159, %v5315
        %v5317 = vsel %vm5198, %v5316, %v5312
        %v5318 = vlaneseq
        %v5319 = vshrl.u32 %v5318, 7
        %v5320 = vsub.s32 %v5188, %v5319
        %v5321 = vrot.slane %v5160, %v5320
        %v5322 = vlaneseq
        %v5323 = vshrl.u32 %v5322, 7
        %v5324 = vsub.s32 %v5193, %v5323
        %v5325 = vrot.slane %v5161, %v5324
        %v5326 = vsel %vm5198, %v5325, %v5321
        %v5327 = vlaneseq
        %v5328 = vshrl.u32 %v5327, 7
        %v5329 = vsub.s32 %v5188, %v5328
        %v5330 = vrot.slane %v5162, %v5329
        %v5331 = vlaneseq
        %v5332 = vshrl.u32 %v5331, 7
        %v5333 = vsub.s32 %v5193, %v5332
        %v5334 = vrot.slane %v5163, %v5333
        %v5335 = vsel %vm5198, %v5334, %v5330
        %v5336 = vlaneseq
        %v5337 = vshrl.u32 %v5336, 7
        %v5338 = vsub.s32 %v5188, %v5337
        %v5339 = vrot.slane %v5164, %v5338
        %v5340 = vlaneseq
        %v5341 = vshrl.u32 %v5340, 7
        %v5342 = vsub.s32 %v5193, %v5341
        %v5343 = vrot.slane %v5165, %v5342
        %v5344 = vsel %vm5198, %v5343, %v5339
        %v5345 = vlaneseq
        %v5346 = vshrl.u32 %v5345, 7
        %v5347 = vsub.s32 %v5188, %v5346
        %v5348 = vrot.slane %v5166, %v5347
        %v5349 = vlaneseq
        %v5350 = vshrl.u32 %v5349, 7
        %v5351 = vsub.s32 %v5193, %v5350
        %v5352 = vrot.slane %v5167, %v5351
        %v5353 = vsel %vm5198, %v5352, %v5348
        %v5354 = vlaneseq
        %v5355 = vshrl.u32 %v5354, 7
        %v5356 = vsub.s32 %v5188, %v5355
        %v5357 = vrot.slane %v5168, %v5356
        %v5358 = vlaneseq
        %v5359 = vshrl.u32 %v5358, 7
        %v5360 = vsub.s32 %v5193, %v5359
        %v5361 = vrot.slane %v5169, %v5360
        %v5362 = vsel %vm5198, %v5361, %v5357
        %v5363 = vsel %vm4674, %v5308, %v5299
        %v5364 = vsel %vm3325, %v5317, %v5363
        %v5365 = vsel %vm4677, %v5326, %v5364
        %v5366 = vsel %vm3327, %v5335, %v5365
        %v5367 = vsel %vm4680, %v5344, %v5366
        %v5368 = vsel %vm3329, %v5353, %v5367
        %v5369 = vsel %vm4683, %v5362, %v5368
        %v5371 = vsel %vm5271, 0.0, %v5369
        %v5372 = vsel %vm5273, %v5371, 0.0
        %s5373 = sld [smem:[#allocation7]]
        %v5374 = vstv %s5373
        %v5375 = vmul.f32 %v5274, %v5374
        %v5376 = vadd.f32 %v5375, 0.0
        %s5377 = sld [smem:[#allocation7 + $0x1]]
        %v5378 = vstv %s5377
        %v5379 = vmul.f32 %v5372, %v5378
        %v5380 = vadd.f32 %v5376, %v5379
        %s5381 = sld [smem:[#allocation7 + $0x2]]
        %v5382 = vstv %s5381
        %v5383 = vmul.f32 %v5274, %v5382
        %5385 = vrot.lane.b32.xlu0 %v5383, 127
        %v5386 = vpop.permute.xlu0 %5385
        %v5388 = vadd.f32 %v5380, %v5386
        %s5389 = sld [smem:[#allocation7 + $0x3]]
        %v5390 = vstv %s5389
        %v5391 = vmul.f32 %v5372, %v5390
        %5393 = vrot.lane.b32.xlu0 %v5391, 127
        %v5394 = vpop.permute.xlu0 %5393
        %v5396 = vadd.f32 %v5388, %v5394
        %s5397 = sld [smem:[#allocation7 + $0x4]]
        %v5398 = vstv %s5397
        %v5399 = vmul.f32 %v5274, %v5398
        %5401 = vrot.lane.b32.xlu0 %v5399, 126
        %v5402 = vpop.permute.xlu0 %5401
        %v5404 = vadd.f32 %v5396, %v5402
        %s5405 = sld [smem:[#allocation7 + $0x5]]
        %v5406 = vstv %s5405
        %v5407 = vmul.f32 %v5372, %v5406
        %5409 = vrot.lane.b32.xlu0 %v5407, 126
        %v5410 = vpop.permute.xlu0 %5409
        %v5412 = vadd.f32 %v5404, %v5410
        %s5413 = sld [smem:[#allocation4]]
        %v5414 = vstv %s5413
        %v5415 = vadd.f32 %v5412, %v5414
        %v5416 = vxor.u32 %v5415, 2147483648
        %v5417 = vmul.f32 %v5416, 1.442695
        %v5418 = vpow.pop %v5417
        %v5419 = vadd.f32 %v5418, 1.0
        %v5420 = vrcp.pop %v5419
        %v5421 = vmul.f32 1.0, %v5420
        %v5422 = vlaneseq
        %v5423 = vshrl.u32 %v5422, 7
        %v5424 = vsub.s32 0, %v5423
        %v5425 = vrot.slane %v5421, %v5424
        %5427 = vbcast.lane.b32.xlu0 %v5425, 256
        %v5428 = vpop.permute.xlu0 %5427
        %s5430 = sor.u32 256, 8
        %5431 = vbcast.lane.b32.xlu0 %v5425, %s5430
        %v5432 = vpop.permute.xlu0 %5431
        %v5433 = vlaneseq
        %v5434 = vshrl.u32 %v5433, 7
        %v5435 = vsub.s32 1, %v5434
        %v5436 = vrot.slane %v5421, %v5435
        %5438 = vbcast.lane.b32.xlu0 %v5436, 256
        %v5439 = vpop.permute.xlu0 %5438
        %s5441 = sor.u32 256, 8
        %5442 = vbcast.lane.b32.xlu0 %v5436, %s5441
        %v5443 = vpop.permute.xlu0 %5442
        %v5444 = vlaneseq
        %v5445 = vshrl.u32 %v5444, 7
        %v5446 = vsub.s32 2, %v5445
        %v5447 = vrot.slane %v5421, %v5446
        %5449 = vbcast.lane.b32.xlu0 %v5447, 256
        %v5450 = vpop.permute.xlu0 %5449
        %s5452 = sor.u32 256, 8
        %5453 = vbcast.lane.b32.xlu0 %v5447, %s5452
        %v5454 = vpop.permute.xlu0 %5453
        %v5455 = vlaneseq
        %v5456 = vshrl.u32 %v5455, 7
        %v5457 = vsub.s32 3, %v5456
        %v5458 = vrot.slane %v5421, %v5457
        %5460 = vbcast.lane.b32.xlu0 %v5458, 256
        %v5461 = vpop.permute.xlu0 %5460
        %s5463 = sor.u32 256, 8
        %5464 = vbcast.lane.b32.xlu0 %v5458, %s5463
        %v5465 = vpop.permute.xlu0 %5464
        %v5466 = vlaneseq
        %v5467 = vshrl.u32 %v5466, 7
        %v5468 = vsub.s32 4, %v5467
        %v5469 = vrot.slane %v5421, %v5468
        %5471 = vbcast.lane.b32.xlu0 %v5469, 256
        %v5472 = vpop.permute.xlu0 %5471
        %s5474 = sor.u32 256, 8
        %5475 = vbcast.lane.b32.xlu0 %v5469, %s5474
        %v5476 = vpop.permute.xlu0 %5475
        %v5477 = vlaneseq
        %v5478 = vshrl.u32 %v5477, 7
        %v5479 = vsub.s32 5, %v5478
        %v5480 = vrot.slane %v5421, %v5479
        %5482 = vbcast.lane.b32.xlu0 %v5480, 256
        %v5483 = vpop.permute.xlu0 %5482
        %s5485 = sor.u32 256, 8
        %5486 = vbcast.lane.b32.xlu0 %v5480, %s5485
        %v5487 = vpop.permute.xlu0 %5486
        %v5488 = vlaneseq
        %v5489 = vshrl.u32 %v5488, 7
        %v5490 = vsub.s32 6, %v5489
        %v5491 = vrot.slane %v5421, %v5490
        %5493 = vbcast.lane.b32.xlu0 %v5491, 256
        %v5494 = vpop.permute.xlu0 %5493
        %s5496 = sor.u32 256, 8
        %5497 = vbcast.lane.b32.xlu0 %v5491, %s5496
        %v5498 = vpop.permute.xlu0 %5497
        %v5499 = vlaneseq
        %v5500 = vshrl.u32 %v5499, 7
        %v5501 = vsub.s32 7, %v5500
        %v5502 = vrot.slane %v5421, %v5501
        %5504 = vbcast.lane.b32.xlu0 %v5502, 256
        %v5505 = vpop.permute.xlu0 %5504
        %s5507 = sor.u32 256, 8
        %5508 = vbcast.lane.b32.xlu0 %v5502, %s5507
        %v5509 = vpop.permute.xlu0 %5508
        %v5510 = vmul.f32 %v5428, %v5042
        %v5511 = vmul.f32 %v5432, %v5043
        %v5512 = vmul.f32 %v5439, %v5044
        %v5513 = vmul.f32 %v5443, %v5045
        %v5514 = vmul.f32 %v5450, %v5046
        %v5515 = vmul.f32 %v5454, %v5047
        %v5516 = vmul.f32 %v5461, %v5048
        %v5517 = vmul.f32 %v5465, %v5049
        %v5518 = vmul.f32 %v5472, %v5050
        %v5519 = vmul.f32 %v5476, %v5051
        %v5520 = vmul.f32 %v5483, %v5052
        %v5521 = vmul.f32 %v5487, %v5053
        %v5522 = vmul.f32 %v5494, %v5054
        %v5523 = vmul.f32 %v5498, %v5055
        %v5524 = vmul.f32 %v5505, %v5056
        %v5525 = vmul.f32 %v5509, %v5057
        %v5526 = vcombine.low %v5510, %v5514
        %v5527 = vcombine.high %v5510, %v5514
        %v5529 = vunpack.c.l.s4 1983009808
        %v5530 = vunpack.c.0.s8 %v5529
        %v5531 = vlaneseq
        %v5532 = vshrl.u32 %v5531, 7
        %v5533 = vsub.s32 %v5530, %v5532
        %v5534 = vrot.slane %v5526, %v5533
        %v5536 = vunpack.c.l.s4 1983009808
        %v5537 = vunpack.c.0.s8 %v5536
        %v5538 = vlaneseq
        %v5539 = vshrl.u32 %v5538, 7
        %v5540 = vsub.s32 %v5537, %v5539
        %v5541 = vrot.slane %v5527, %v5540
        %v5542 = vcombine.low %v5512, %v5516
        %v5543 = vcombine.high %v5512, %v5516
        %v5545 = vunpack.c.l.s4 1983009808
        %v5546 = vunpack.c.0.s8 %v5545
        %v5547 = vlaneseq
        %v5548 = vshrl.u32 %v5547, 7
        %v5549 = vsub.s32 %v5546, %v5548
        %v5550 = vrot.slane %v5542, %v5549
        %v5552 = vunpack.c.l.s4 1983009808
        %v5553 = vunpack.c.0.s8 %v5552
        %v5554 = vlaneseq
        %v5555 = vshrl.u32 %v5554, 7
        %v5556 = vsub.s32 %v5553, %v5555
        %v5557 = vrot.slane %v5543, %v5556
        %v5558 = vcombine.low %v5518, %v5522
        %v5559 = vcombine.high %v5518, %v5522
        %v5561 = vunpack.c.l.s4 1983009808
        %v5562 = vunpack.c.0.s8 %v5561
        %v5563 = vlaneseq
        %v5564 = vshrl.u32 %v5563, 7
        %v5565 = vsub.s32 %v5562, %v5564
        %v5566 = vrot.slane %v5558, %v5565
        %v5568 = vunpack.c.l.s4 1983009808
        %v5569 = vunpack.c.0.s8 %v5568
        %v5570 = vlaneseq
        %v5571 = vshrl.u32 %v5570, 7
        %v5572 = vsub.s32 %v5569, %v5571
        %v5573 = vrot.slane %v5559, %v5572
        %v5574 = vcombine.low %v5520, %v5524
        %v5575 = vcombine.high %v5520, %v5524
        %v5577 = vunpack.c.l.s4 1983009808
        %v5578 = vunpack.c.0.s8 %v5577
        %v5579 = vlaneseq
        %v5580 = vshrl.u32 %v5579, 7
        %v5581 = vsub.s32 %v5578, %v5580
        %v5582 = vrot.slane %v5574, %v5581
        %v5584 = vunpack.c.l.s4 1983009808
        %v5585 = vunpack.c.0.s8 %v5584
        %v5586 = vlaneseq
        %v5587 = vshrl.u32 %v5586, 7
        %v5588 = vsub.s32 %v5585, %v5587
        %v5589 = vrot.slane %v5575, %v5588
        %v5590 = vcombine.low %v5534, %v5550
        %v5591 = vcombine.high %v5534, %v5550
        %v5593 = vunpack.c.l.s4 1934713408
        %v5594 = vunpack.c.0.s8 %v5593
        %v5595 = vlaneseq
        %v5596 = vshrl.u32 %v5595, 7
        %v5597 = vsub.s32 %v5594, %v5596
        %v5598 = vrot.slane %v5590, %v5597
        %v5600 = vunpack.c.l.s4 1934713408
        %v5601 = vunpack.c.0.s8 %v5600
        %v5602 = vlaneseq
        %v5603 = vshrl.u32 %v5602, 7
        %v5604 = vsub.s32 %v5601, %v5603
        %v5605 = vrot.slane %v5591, %v5604
        %v5606 = vcombine.low %v5541, %v5557
        %v5607 = vcombine.high %v5541, %v5557
        %v5609 = vunpack.c.l.s4 1934713408
        %v5610 = vunpack.c.0.s8 %v5609
        %v5611 = vlaneseq
        %v5612 = vshrl.u32 %v5611, 7
        %v5613 = vsub.s32 %v5610, %v5612
        %v5614 = vrot.slane %v5606, %v5613
        %v5616 = vunpack.c.l.s4 1934713408
        %v5617 = vunpack.c.0.s8 %v5616
        %v5618 = vlaneseq
        %v5619 = vshrl.u32 %v5618, 7
        %v5620 = vsub.s32 %v5617, %v5619
        %v5621 = vrot.slane %v5607, %v5620
        %v5622 = vcombine.low %v5566, %v5582
        %v5623 = vcombine.high %v5566, %v5582
        %v5625 = vunpack.c.l.s4 1934713408
        %v5626 = vunpack.c.0.s8 %v5625
        %v5627 = vlaneseq
        %v5628 = vshrl.u32 %v5627, 7
        %v5629 = vsub.s32 %v5626, %v5628
        %v5630 = vrot.slane %v5622, %v5629
        %v5632 = vunpack.c.l.s4 1934713408
        %v5633 = vunpack.c.0.s8 %v5632
        %v5634 = vlaneseq
        %v5635 = vshrl.u32 %v5634, 7
        %v5636 = vsub.s32 %v5633, %v5635
        %v5637 = vrot.slane %v5623, %v5636
        %v5638 = vcombine.low %v5573, %v5589
        %v5639 = vcombine.high %v5573, %v5589
        %v5641 = vunpack.c.l.s4 1934713408
        %v5642 = vunpack.c.0.s8 %v5641
        %v5643 = vlaneseq
        %v5644 = vshrl.u32 %v5643, 7
        %v5645 = vsub.s32 %v5642, %v5644
        %v5646 = vrot.slane %v5638, %v5645
        %v5648 = vunpack.c.l.s4 1934713408
        %v5649 = vunpack.c.0.s8 %v5648
        %v5650 = vlaneseq
        %v5651 = vshrl.u32 %v5650, 7
        %v5652 = vsub.s32 %v5649, %v5651
        %v5653 = vrot.slane %v5639, %v5652
        %v5654 = vcombine.low %v5598, %v5630
        %v5655 = vcombine.high %v5598, %v5630
        %v5656 = vcombine.low %v5605, %v5637
        %v5657 = vcombine.high %v5605, %v5637
        %v5658 = vcombine.low %v5614, %v5646
        %v5659 = vcombine.high %v5614, %v5646
        %v5660 = vcombine.low %v5621, %v5653
        %v5661 = vcombine.high %v5621, %v5653
        %v5662 = vcombine.low %v5511, %v5515
        %v5663 = vcombine.high %v5511, %v5515
        %v5665 = vunpack.c.l.s4 1983009808
        %v5666 = vunpack.c.0.s8 %v5665
        %v5667 = vlaneseq
        %v5668 = vshrl.u32 %v5667, 7
        %v5669 = vsub.s32 %v5666, %v5668
        %v5670 = vrot.slane %v5662, %v5669
        %v5672 = vunpack.c.l.s4 1983009808
        %v5673 = vunpack.c.0.s8 %v5672
        %v5674 = vlaneseq
        %v5675 = vshrl.u32 %v5674, 7
        %v5676 = vsub.s32 %v5673, %v5675
        %v5677 = vrot.slane %v5663, %v5676
        %v5678 = vcombine.low %v5513, %v5517
        %v5679 = vcombine.high %v5513, %v5517
        %v5681 = vunpack.c.l.s4 1983009808
        %v5682 = vunpack.c.0.s8 %v5681
        %v5683 = vlaneseq
        %v5684 = vshrl.u32 %v5683, 7
        %v5685 = vsub.s32 %v5682, %v5684
        %v5686 = vrot.slane %v5678, %v5685
        %v5688 = vunpack.c.l.s4 1983009808
        %v5689 = vunpack.c.0.s8 %v5688
        %v5690 = vlaneseq
        %v5691 = vshrl.u32 %v5690, 7
        %v5692 = vsub.s32 %v5689, %v5691
        %v5693 = vrot.slane %v5679, %v5692
        %v5694 = vcombine.low %v5519, %v5523
        %v5695 = vcombine.high %v5519, %v5523
        %v5697 = vunpack.c.l.s4 1983009808
        %v5698 = vunpack.c.0.s8 %v5697
        %v5699 = vlaneseq
        %v5700 = vshrl.u32 %v5699, 7
        %v5701 = vsub.s32 %v5698, %v5700
        %v5702 = vrot.slane %v5694, %v5701
        %v5704 = vunpack.c.l.s4 1983009808
        %v5705 = vunpack.c.0.s8 %v5704
        %v5706 = vlaneseq
        %v5707 = vshrl.u32 %v5706, 7
        %v5708 = vsub.s32 %v5705, %v5707
        %v5709 = vrot.slane %v5695, %v5708
        %v5710 = vcombine.low %v5521, %v5525
        %v5711 = vcombine.high %v5521, %v5525
        %v5713 = vunpack.c.l.s4 1983009808
        %v5714 = vunpack.c.0.s8 %v5713
        %v5715 = vlaneseq
        %v5716 = vshrl.u32 %v5715, 7
        %v5717 = vsub.s32 %v5714, %v5716
        %v5718 = vrot.slane %v5710, %v5717
        %v5720 = vunpack.c.l.s4 1983009808
        %v5721 = vunpack.c.0.s8 %v5720
        %v5722 = vlaneseq
        %v5723 = vshrl.u32 %v5722, 7
        %v5724 = vsub.s32 %v5721, %v5723
        %v5725 = vrot.slane %v5711, %v5724
        %v5726 = vcombine.low %v5670, %v5686
        %v5727 = vcombine.high %v5670, %v5686
        %v5729 = vunpack.c.l.s4 1934713408
        %v5730 = vunpack.c.0.s8 %v5729
        %v5731 = vlaneseq
        %v5732 = vshrl.u32 %v5731, 7
        %v5733 = vsub.s32 %v5730, %v5732
        %v5734 = vrot.slane %v5726, %v5733
        %v5736 = vunpack.c.l.s4 1934713408
        %v5737 = vunpack.c.0.s8 %v5736
        %v5738 = vlaneseq
        %v5739 = vshrl.u32 %v5738, 7
        %v5740 = vsub.s32 %v5737, %v5739
        %v5741 = vrot.slane %v5727, %v5740
        %v5742 = vcombine.low %v5677, %v5693
        %v5743 = vcombine.high %v5677, %v5693
        %v5745 = vunpack.c.l.s4 1934713408
        %v5746 = vunpack.c.0.s8 %v5745
        %v5747 = vlaneseq
        %v5748 = vshrl.u32 %v5747, 7
        %v5749 = vsub.s32 %v5746, %v5748
        %v5750 = vrot.slane %v5742, %v5749
        %v5752 = vunpack.c.l.s4 1934713408
        %v5753 = vunpack.c.0.s8 %v5752
        %v5754 = vlaneseq
        %v5755 = vshrl.u32 %v5754, 7
        %v5756 = vsub.s32 %v5753, %v5755
        %v5757 = vrot.slane %v5743, %v5756
        %v5758 = vcombine.low %v5702, %v5718
        %v5759 = vcombine.high %v5702, %v5718
        %v5761 = vunpack.c.l.s4 1934713408
        %v5762 = vunpack.c.0.s8 %v5761
        %v5763 = vlaneseq
        %v5764 = vshrl.u32 %v5763, 7
        %v5765 = vsub.s32 %v5762, %v5764
        %v5766 = vrot.slane %v5758, %v5765
        %v5768 = vunpack.c.l.s4 1934713408
        %v5769 = vunpack.c.0.s8 %v5768
        %v5770 = vlaneseq
        %v5771 = vshrl.u32 %v5770, 7
        %v5772 = vsub.s32 %v5769, %v5771
        %v5773 = vrot.slane %v5759, %v5772
        %v5774 = vcombine.low %v5709, %v5725
        %v5775 = vcombine.high %v5709, %v5725
        %v5777 = vunpack.c.l.s4 1934713408
        %v5778 = vunpack.c.0.s8 %v5777
        %v5779 = vlaneseq
        %v5780 = vshrl.u32 %v5779, 7
        %v5781 = vsub.s32 %v5778, %v5780
        %v5782 = vrot.slane %v5774, %v5781
        %v5784 = vunpack.c.l.s4 1934713408
        %v5785 = vunpack.c.0.s8 %v5784
        %v5786 = vlaneseq
        %v5787 = vshrl.u32 %v5786, 7
        %v5788 = vsub.s32 %v5785, %v5787
        %v5789 = vrot.slane %v5775, %v5788
        %v5790 = vcombine.low %v5734, %v5766
        %v5791 = vcombine.high %v5734, %v5766
        %v5792 = vcombine.low %v5741, %v5773
        %v5793 = vcombine.high %v5741, %v5773
        %v5794 = vcombine.low %v5750, %v5782
        %v5795 = vcombine.high %v5750, %v5782
        %v5796 = vcombine.low %v5757, %v5789
        %v5797 = vcombine.high %v5757, %v5789
        %5799 = vrot.lane.b32.xlu0 %v5655, 8
        %v5800 = vpop.permute.xlu0 %5799
        %5803 = vrot.lane.b32.xlu0 %v5656, 16
        %v5804 = vpop.permute.xlu0 %5803
        %5807 = vrot.lane.b32.xlu0 %v5657, 24
        %v5808 = vpop.permute.xlu0 %5807
        %5811 = vrot.lane.b32.xlu0 %v5658, 32
        %v5812 = vpop.permute.xlu0 %5811
        %5815 = vrot.lane.b32.xlu0 %v5659, 40
        %v5816 = vpop.permute.xlu0 %5815
        %5819 = vrot.lane.b32.xlu0 %v5660, 48
        %v5820 = vpop.permute.xlu0 %5819
        %5823 = vrot.lane.b32.xlu0 %v5661, 56
        %v5824 = vpop.permute.xlu0 %5823
        %5827 = vrot.lane.b32.xlu0 %v5790, 64
        %v5828 = vpop.permute.xlu0 %5827
        %5831 = vrot.lane.b32.xlu0 %v5791, 72
        %v5832 = vpop.permute.xlu0 %5831
        %5835 = vrot.lane.b32.xlu0 %v5792, 80
        %v5836 = vpop.permute.xlu0 %5835
        %5839 = vrot.lane.b32.xlu0 %v5793, 88
        %v5840 = vpop.permute.xlu0 %5839
        %5843 = vrot.lane.b32.xlu0 %v5794, 96
        %v5844 = vpop.permute.xlu0 %5843
        %5847 = vrot.lane.b32.xlu0 %v5795, 104
        %v5848 = vpop.permute.xlu0 %5847
        %5851 = vrot.lane.b32.xlu0 %v5796, 112
        %v5852 = vpop.permute.xlu0 %5851
        %5855 = vrot.lane.b32.xlu0 %v5797, 120
        %v5856 = vpop.permute.xlu0 %5855
        %v5858 = vsel %vm4486, %v5654, %v5800
        %v5859 = vsel %vm965, %v5858, %v5804
        %vm5860 = vcmask 195584
        %v5861 = vsel %vm5860, %v5859, %v5808
        %v5862 = vsel %vm1064, %v5861, %v5812
        %vm5863 = vcmask 326656
        %v5864 = vsel %vm5863, %v5862, %v5816
        %vm5865 = vcmask 392192
        %v5866 = vsel %vm5865, %v5864, %v5820
        %vm5867 = vcmask 457728
        %v5868 = vsel %vm5867, %v5866, %v5824
        %vm5869 = vcmask 523264
        %v5870 = vsel %vm5869, %v5868, %v5828
        %vm5871 = vcmask 588800
        %v5872 = vsel %vm5871, %v5870, %v5832
        %vm5873 = vcmask 654336
        %v5874 = vsel %vm5873, %v5872, %v5836
        %vm5875 = vcmask 719872
        %v5876 = vsel %vm5875, %v5874, %v5840
        %vm5877 = vcmask 785408
        %v5878 = vsel %vm5877, %v5876, %v5844
        %vm5879 = vcmask 850944
        %v5880 = vsel %vm5879, %v5878, %v5848
        %vm5881 = vcmask 916480
        %v5882 = vsel %vm5881, %v5880, %v5852
        %vm5883 = vcmask 982016
        %v5884 = vsel %vm5883, %v5882, %v5856
        %v5885 = vpack.c.bf16 %v1810, %v1810
        %v5886 = vld [vmem:[%s18] sm:$0xf]
        %v5887 = vld [vmem:[%s18 + $0x4] sm:$0xf]
        %v5888 = vld [vmem:[%s18 + $0x8] sm:$0xf]
        %v5889 = vld [vmem:[%s18 + $0xc] sm:$0xf]
        %v5890 = vpack.c.bf16 %v5884, %v5884
        %v5891 = vld [vmem:[%s19] sm:$0xf]
        %v5892 = vld [vmem:[%s19 + $0x4] sm:$0xf]
        %v5893 = vld [vmem:[%s19 + $0x8] sm:$0xf]
        %v5894 = vld [vmem:[%s19 + $0xc] sm:$0xf]
        %v5895 = vld [vmem:[%s19 + $0x10] sm:$0xf]
        %v5896 = vld [vmem:[%s19 + $0x14] sm:$0xf]
        %v5897 = vld [vmem:[%s19 + $0x18] sm:$0xf]
        %v5898 = vld [vmem:[%s19 + $0x1c] sm:$0xf]
        %v5899 = vld [vmem:[%s19 + $0x20] sm:$0xf]
        %v5900 = vld [vmem:[%s19 + $0x24] sm:$0xf]
        %v5901 = vld [vmem:[%s19 + $0x28] sm:$0xf]
        %v5902 = vld [vmem:[%s19 + $0x2c] sm:$0xf]
        %v5903 = vld [vmem:[%s19 + $0x30] sm:$0xf]
        %v5904 = vld [vmem:[%s19 + $0x34] sm:$0xf]
        %v5905 = vld [vmem:[%s19 + $0x38] sm:$0xf]
        %v5906 = vld [vmem:[%s19 + $0x3c] sm:$0xf]
        %v5923 = vunpack.c.l.b16 %v5891
        %v5924 = vunpack.c.l.b16 %v5892
        %v5925 = vunpack.c.l.b16 %v5893
        %v5926 = vunpack.c.l.b16 %v5894
        %v5927 = vunpack.c.l.b16 %v5895
        %v5928 = vunpack.c.l.b16 %v5896
        %v5929 = vunpack.c.l.b16 %v5897
        %v5930 = vunpack.c.l.b16 %v5898
        %v5931 = vunpack.c.l.b16 %v5899
        %v5932 = vunpack.c.l.b16 %v5900
        %v5933 = vunpack.c.l.b16 %v5901
        %v5934 = vunpack.c.l.b16 %v5902
        %v5935 = vunpack.c.l.b16 %v5903
        %v5936 = vunpack.c.l.b16 %v5904
        %v5937 = vunpack.c.l.b16 %v5905
        %v5938 = vunpack.c.l.b16 %v5906
        %v5939 = vpack.c.b16 %v5924, %v5923
        %v5940 = vpack.c.b16 %v5926, %v5925
        %v5941 = vpack.c.b16 %v5928, %v5927
        %v5942 = vpack.c.b16 %v5930, %v5929
        %v5943 = vpack.c.b16 %v5932, %v5931
        %v5944 = vpack.c.b16 %v5934, %v5933
        %v5945 = vpack.c.b16 %v5936, %v5935
        %v5946 = vpack.c.b16 %v5938, %v5937
        %5955 = vmatprep.subr.bf16.mxu0 0
        %5956 = vmatpush1.bf16.msra.mxu0 %v5939
        %5957 = vmatprep.subr.bf16.mxu0 0
        %5958 = vmatpush1.bf16.msra.mxu0 %v5940
        %5959 = vmatprep.subr.bf16.mxu0 0
        %5960 = vmatpush1.bf16.msra.mxu0 %v5941
        %5961 = vmatprep.subr.bf16.mxu0 0
        %5962 = vmatpush1.bf16.msra.mxu0 %v5942
        %5963 = vmatprep.subr.bf16.mxu0 0
        %5964 = vmatpush1.bf16.msra.mxu0 %v5943
        %5965 = vmatprep.subr.bf16.mxu0 0
        %5966 = vmatpush1.bf16.msra.mxu0 %v5944
        %5967 = vmatprep.subr.bf16.mxu0 0
        %5968 = vmatpush1.bf16.msra.mxu0 %v5945
        %5969 = vmatprep.subr.bf16.mxu0 0
        %5970 = vmatpush1.bf16.msra.mxu0 %v5946
        %5971 = vmatprep.subr.bf16.mxu0 0
        %5972 = vmatpush1.bf16.msra.mxu0 0
        %5973 = vmatprep.subr.bf16.mxu0 0
        %5974 = vmatpush1.bf16.msra.mxu0 0
        %5975 = vmatprep.subr.bf16.mxu0 0
        %5976 = vmatpush1.bf16.msra.mxu0 0
        %5977 = vmatprep.subr.bf16.mxu0 0
        %5978 = vmatpush1.bf16.msra.mxu0 0
        %5979 = vmatprep.subr.bf16.mxu0 0
        %5980 = vmatpush1.bf16.msra.mxu0 0
        %5981 = vmatprep.subr.bf16.mxu0 0
        %5982 = vmatpush1.bf16.msra.mxu0 0
        %5983 = vmatprep.subr.bf16.mxu0 0
        %5984 = vmatpush1.bf16.msra.mxu0 0
        %5985 = vmatprep.subr.bf16.mxu0 0
        %5986 = vmatpush1.bf16.msra.mxu0 0
        %5987 = vmatprep.mubr.bf16.mxu0 0
        %5988 = vmatmul.mubr.bf16.gmra.mrb[0].mxu0 %v5890
        %v5989 = vpop.f32.mrb[0].mxu0
        %v5990 = vadd.f32 0.0, %v5989
        %v5991 = vpop.f32.mrb[0].mxu0
        %v5992 = vpop.f32.mrb[0].mxu0
        %v5993 = vpop.f32.mrb[0].mxu0
        %5994 = vdwg.mxu0
        %v5999 = vunpack.c.l.b16 %v5886
        %v6000 = vunpack.c.l.b16 %v5887
        %v6001 = vunpack.c.l.b16 %v5888
        %v6002 = vunpack.c.l.b16 %v5889
        %v6003 = vpack.c.b16 %v6000, %v5999
        %v6004 = vpack.c.b16 %v6002, %v6001
        %v6008 = vsel %vm1064, %v5885, 0
        %6010 = vmatprep.subr.bf16.mxu0 0
        %6011 = vmatpush1.bf16.msra.mxu0 %v6003
        %6012 = vmatprep.subr.bf16.mxu0 0
        %6013 = vmatpush1.bf16.msra.mxu0 %v6004
        %6014 = vmatprep.subr.bf16.mxu0 0
        %6015 = vmatpush1.bf16.msra.mxu0 0
        %6016 = vmatprep.subr.bf16.mxu0 0
        %6017 = vmatpush1.bf16.msra.mxu0 0
        %6018 = vmatprep.subr.bf16.mxu0 0
        %6019 = vmatpush1.bf16.msra.mxu0 0
        %6020 = vmatprep.subr.bf16.mxu0 0
        %6021 = vmatpush1.bf16.msra.mxu0 0
        %6022 = vmatprep.subr.bf16.mxu0 0
        %6023 = vmatpush1.bf16.msra.mxu0 0
        %6024 = vmatprep.subr.bf16.mxu0 0
        %6025 = vmatpush1.bf16.msra.mxu0 0
        %6026 = vmatprep.subr.bf16.mxu0 0
        %6027 = vmatpush1.bf16.msra.mxu0 0
        %6028 = vmatprep.subr.bf16.mxu0 0
        %6029 = vmatpush1.bf16.msra.mxu0 0
        %6030 = vmatprep.subr.bf16.mxu0 0
        %6031 = vmatpush1.bf16.msra.mxu0 0
        %6032 = vmatprep.subr.bf16.mxu0 0
        %6033 = vmatpush1.bf16.msra.mxu0 0
        %6034 = vmatprep.subr.bf16.mxu0 0
        %6035 = vmatpush1.bf16.msra.mxu0 0
        %6036 = vmatprep.subr.bf16.mxu0 0
        %6037 = vmatpush1.bf16.msra.mxu0 0
        %6038 = vmatprep.subr.bf16.mxu0 0
        %6039 = vmatpush1.bf16.msra.mxu0 0
        %6040 = vmatprep.subr.bf16.mxu0 0
        %6041 = vmatpush1.bf16.msra.mxu0 0
        %6042 = vmatprep.mubr.bf16.mxu0 0
        %6043 = vmatmul.mubr.bf16.gmra.mrb[0].mxu0 %v6008
        %v6044 = vpop.f32.mrb[0].mxu0
        %v6045 = vadd.f32 %v5990, %v6044
        %v6046 = vpop.f32.mrb[0].mxu0
        %v6047 = vpop.f32.mrb[0].mxu0
        %v6048 = vpop.f32.mrb[0].mxu0
        %6049 = vdwg.mxu0
        %v6050 = vld [vmem:[%s912] sm:$0xf]
        %v6051 = vld [vmem:[%s20] sm:$0xf]
        %v6053 = vsel %vm4486, %v6050, 0
        %v6056 = vsel %vm4689, %v6051, 0
        %6058 = vmatprep.subr.bf16.mxu0 0
        %6059 = vmatpush1.bf16.msra.mxu0 %v6056
        %6060 = vmatprep.subr.bf16.mxu0 0
        %6061 = vmatpush1.bf16.msra.mxu0 0
        %6062 = vmatprep.subr.bf16.mxu0 0
        %6063 = vmatpush1.bf16.msra.mxu0 0
        %6064 = vmatprep.subr.bf16.mxu0 0
        %6065 = vmatpush1.bf16.msra.mxu0 0
        %6066 = vmatprep.subr.bf16.mxu0 0
        %6067 = vmatpush1.bf16.msra.mxu0 0
        %6068 = vmatprep.subr.bf16.mxu0 0
        %6069 = vmatpush1.bf16.msra.mxu0 0
        %6070 = vmatprep.subr.bf16.mxu0 0
        %6071 = vmatpush1.bf16.msra.mxu0 0
        %6072 = vmatprep.subr.bf16.mxu0 0
        %6073 = vmatpush1.bf16.msra.mxu0 0
        %6074 = vmatprep.subr.bf16.mxu0 0
        %6075 = vmatpush1.bf16.msra.mxu0 0
        %6076 = vmatprep.subr.bf16.mxu0 0
        %6077 = vmatpush1.bf16.msra.mxu0 0
        %6078 = vmatprep.subr.bf16.mxu0 0
        %6079 = vmatpush1.bf16.msra.mxu0 0
        %6080 = vmatprep.subr.bf16.mxu0 0
        %6081 = vmatpush1.bf16.msra.mxu0 0
        %6082 = vmatprep.subr.bf16.mxu0 0
        %6083 = vmatpush1.bf16.msra.mxu0 0
        %6084 = vmatprep.subr.bf16.mxu0 0
        %6085 = vmatpush1.bf16.msra.mxu0 0
        %6086 = vmatprep.subr.bf16.mxu0 0
        %6087 = vmatpush1.bf16.msra.mxu0 0
        %6088 = vmatprep.subr.bf16.mxu0 0
        %6089 = vmatpush1.bf16.msra.mxu0 0
        %6090 = vmatprep.mubr.bf16.mxu0 0
        %6091 = vmatmul.mubr.bf16.gmra.mrb[0].mxu0 %v6053
        %v6092 = vpop.f32.mrb[0].mxu0
        %v6093 = vadd.f32 0.0, %v6092
        %v6094 = vpop.f32.mrb[0].mxu0
        %v6095 = vpop.f32.mrb[0].mxu0
        %v6096 = vpop.f32.mrb[0].mxu0
        %6097 = vdwg.mxu0
        %v6098 = vadd.f32 %v6045, %v6093
        %v6099 = vld [vmem:[%s21] sm:$0x1]
        %v6101 = vlaneseq
        %v6102 = vshrl.u32 %v6101, 7
        %v6103 = vsub.s32 0, %v6102
        %v6104 = vrot.slane %v6099, %v6103
        %v6106 = vadd.f32 %v6098, %v6104
        %v6107 = vmax.f32 %v6106, 0.0
        %v6108 = vpack.c.bf16 %v6107, %v6107
        %v6109 = vld [vmem:[%s22] sm:$0xf]
        %v6110 = vld [vmem:[%s22 + $0x4] sm:$0xf]
        %v6111 = vld [vmem:[%s22 + $0x8] sm:$0xf]
        %v6112 = vld [vmem:[%s22 + $0xc] sm:$0xf]
        %v6113 = vld [vmem:[%s23] sm:$0x1]
        %v6115 = vlaneseq
        %v6116 = vshrl.u32 %v6115, 7
        %v6117 = vsub.s32 0, %v6116
        %v6118 = vrot.slane %v6113, %v6117
        %v6124 = vunpack.c.l.b16 %v6109
        %v6125 = vunpack.c.l.b16 %v6110
        %v6126 = vunpack.c.l.b16 %v6111
        %v6127 = vunpack.c.l.b16 %v6112
        %v6128 = vpack.c.b16 %v6125, %v6124
        %v6129 = vpack.c.b16 %v6127, %v6126
        %v6133 = vsel %vm1064, %v6108, 0
        %6135 = vmatprep.subr.bf16.mxu0 0
        %6136 = vmatpush1.bf16.msra.mxu0 %v6128
        %6137 = vmatprep.subr.bf16.mxu0 0
        %6138 = vmatpush1.bf16.msra.mxu0 %v6129
        %6139 = vmatprep.subr.bf16.mxu0 0
        %6140 = vmatpush1.bf16.msra.mxu0 0
        %6141 = vmatprep.subr.bf16.mxu0 0
        %6142 = vmatpush1.bf16.msra.mxu0 0
        %6143 = vmatprep.subr.bf16.mxu0 0
        %6144 = vmatpush1.bf16.msra.mxu0 0
        %6145 = vmatprep.subr.bf16.mxu0 0
        %6146 = vmatpush1.bf16.msra.mxu0 0
        %6147 = vmatprep.subr.bf16.mxu0 0
        %6148 = vmatpush1.bf16.msra.mxu0 0
        %6149 = vmatprep.subr.bf16.mxu0 0
        %6150 = vmatpush1.bf16.msra.mxu0 0
        %6151 = vmatprep.subr.bf16.mxu0 0
        %6152 = vmatpush1.bf16.msra.mxu0 0
        %6153 = vmatprep.subr.bf16.mxu0 0
        %6154 = vmatpush1.bf16.msra.mxu0 0
        %6155 = vmatprep.subr.bf16.mxu0 0
        %6156 = vmatpush1.bf16.msra.mxu0 0
        %6157 = vmatprep.subr.bf16.mxu0 0
        %6158 = vmatpush1.bf16.msra.mxu0 0
        %6159 = vmatprep.subr.bf16.mxu0 0
        %6160 = vmatpush1.bf16.msra.mxu0 0
        %6161 = vmatprep.subr.bf16.mxu0 0
        %6162 = vmatpush1.bf16.msra.mxu0 0
        %6163 = vmatprep.subr.bf16.mxu0 0
        %6164 = vmatpush1.bf16.msra.mxu0 0
        %6165 = vmatprep.subr.bf16.mxu0 0
        %6166 = vmatpush1.bf16.msra.mxu0 0
        %6167 = vmatprep.mubr.bf16.mxu0 0
        %6168 = vmatmul.mubr.bf16.gmra.mrb[0].mxu0 %v6133
        %v6169 = vpop.f32.mrb[0].mxu0
        %v6170 = vadd.f32 %v6118, %v6169
        %v6171 = vpop.f32.mrb[0].mxu0
        %v6172 = vpop.f32.mrb[0].mxu0
        %v6173 = vpop.f32.mrb[0].mxu0
        %6174 = vdwg.mxu0
        %v6175 = vmax.f32 %v6170, 0.0
        %v6176 = vld [vmem:[%s24] sm:$0x1]
        %v6178 = vlaneseq
        %v6179 = vshrl.u32 %v6178, 7
        %v6180 = vsub.s32 0, %v6179
        %v6181 = vrot.slane %v6176, %v6180
        %v6183 = vmul.f32 %v6175, %v6181
        %v6184 = vsel %vm965, %v6183, 0.0
        %6185 = vadd.xlane.f32.xlu0 %v6184
        %v6186 = vpop.xlane.xlu0 %6185
        %s6187 = sld [smem:[#allocation5]]
        %v6188 = vstv %s6187
        %v6189 = vadd.f32 %v6186, %v6188
        %v6190 = vxor.u32 %v6189, 2147483648
        %v6191 = vmul.f32 %v6190, 1.442695
        %v6192 = vpow.pop %v6191
        %v6193 = vadd.f32 %v6192, 1.0
        %v6194 = vrcp.pop %v6193
        %v6195 = vmul.f32 1.0, %v6194
        %6196 = vst.msk [vmem:[%s916] sm:$0xff] %vm5271, %v6195
        %p6197 = scmp.lt.s32.totalorder %s40, 1
        %s6198 = scalar_select %p6197, %s40, 1
        %s6199 = smul.addr %s6198, 8
        %s6200 = scalar_lea.vmem %s26, %s6199
        // Predicated region
        $region170: #{main_model_forward.1} parent=160 // pred_check
          %p6201 = pneg %p619
        $region171: #{main_model_forward.1} parent=160 // pred_check_branch
          %6203 = sbr.rel (%p6201) target = $region173
        $region172: #{main_model_forward.1} parent=160 // pred_region
          _
        $region173: #{main_model_forward.1} parent=160 // pred_fallthru
          _
      $region161: #{main_model_forward.1} parent=5 // pred_fallthru
        _
      %p6204 = scmp.le.s32.totalorder 2, %s35
      // Predicated region
      $region174: #{main_model_forward.1} parent=5 // pred_check
        %p6205 = pneg %p6204
      $region175: #{main_model_forward.1} parent=5 // pred_check_branch
        %6207 = sbr.rel (%p6205) target = $region177
      $region176: #{main_model_forward.1} parent=5 // pred_region
        %s6208 = ssub.s32 %s35, 2
        // Predicated region
        $region178: #{main_model_forward.1} parent=176 // pred_check
          %p6209 = pneg %p625
        $region179: #{main_model_forward.1} parent=176 // pred_check_branch
          %6211 = sbr.rel (%p6209) target = $region181
        $region180: #{main_model_forward.1} parent=176 // pred_region
          %p6212 = scmp.lt.s32.totalorder %s41, 1
          %s6213 = scalar_select %p6212, %s41, 1
          %s6214 = smul.addr %s6213, 8
          %s6215 = scalar_lea.vmem %s26, %s6214
        $region181: #{main_model_forward.1} parent=176 // pred_fallthru
          _
      $region177: #{main_model_forward.1} parent=5 // pred_fallthru
        _
    $region6: #{main_model_forward.1} parent=1 // loop_footer
      %s39 = sadd.s32 1, %s35
    $region7: #{main_model_forward.1} parent=1 // loop_footer_branch
      %34 = sbr.rel target = $region3
    $region8: #{main_model_forward.1} parent=1 // loop_exit
      _
    %6216 = vsyncpa [#allocation8], 1
    %s6217 = scalar_lea.sflag [#allocation8], 1
    %6218 = vsyncpa %s6217, 1

</llo_original>
